<compile_context>
chip_gen: v7x
topology: tpu7x:2x2x1
jax: 0.10.0
libtpu: 0.0.40
codegen_flags: <defaults>
</compile_context>

<pallas_src>
import functools

import jax
import jax.numpy as jnp
from jax import lax
from jax.experimental import pallas as pl
from jax.experimental.pallas import tpu as pltpu


# ----------------------------------------------------------------------------
# Fused Pallas kernel: wavefronted 3-layer LSTM + attention + fc(+BN folded)
# ----------------------------------------------------------------------------
def _make_fused_kernel(num_layers, T, B_pad, H):
    def kernel(*refs):
        # --- unpack refs: x, (wx, wh, b) * num_layers, wab, wfc, bfc, out, hbuf
        x_ref = refs[0]                                   # (T*Bp, Din) time-major
        idx = 1
        layer_refs = []
        for _ in range(num_layers):
            layer_refs.append((refs[idx], refs[idx + 1], refs[idx + 2]))
            idx += 3
        wab_ref, wfc_ref, bfc_ref = refs[idx], refs[idx + 1], refs[idx + 2]
        idx += 3
        out_ref = refs[idx]                               # (Bp, Op)
        hbuf_ref = refs[idx + 1]                          # (Bp, T*H) VMEM scratch

        zeros = jnp.zeros((B_pad, H), jnp.float32)
        h = [zeros] * num_layers
        c = [zeros] * num_layers
        feed = [None] * num_layers   # feed[l]: output of layer l-1 awaiting layer l

        # ---- wavefront over diagonals: layer l computes time t = d - l ----
        for d in range(T + num_layers - 1):
            # Top-down so layer l reads feed[l] (written by layer l-1 on the
            # previous diagonal) before layer l-1 overwrites it this diagonal.
            for l in range(num_layers - 1, -1, -1):
                t = d - l
                if t < 0 or t >= T:
                    continue
                wx_ref, wh_ref, b_ref = layer_refs[l]
                x_in = (x_ref[t * B_pad:(t + 1) * B_pad, :] if l == 0
                        else feed[l])
                # x-side matmul has no recurrent dependency -> scheduler hoists
                # it off the critical h -> matmul -> activation -> h chain.
                gates = (jnp.dot(x_in, wx_ref[...],
                                 preferred_element_type=jnp.float32)
                         + jnp.dot(h[l], wh_ref[...],
                                   preferred_element_type=jnp.float32)
                         + b_ref[...])                    # (Bp, 4H)
                # full 128-lane activations, then lane-slice (i, f, g, o)
                sg = jax.nn.sigmoid(gates)
                th = jnp.tanh(gates)
                i = sg[:, 0 * H:1 * H]
                f = sg[:, 1 * H:2 * H]
                g = th[:, 2 * H:3 * H]
                o = sg[:, 3 * H:4 * H]
                c[l] = f * c[l] + i * g
                h[l] = o * jnp.tanh(c[l])
                if l + 1 < num_layers:
                    feed[l + 1] = h[l]          # consumed next diagonal step
                else:
                    # stream last-layer h_t into lane range [t*H, (t+1)*H)
                    hbuf_ref[:, t * H:(t + 1) * H] = h[l]
                # inter-layer dropout: eval mode -> identity

        # ---- temporal attention: ONE matmul for all T scores + lane softmax ----
        hb = hbuf_ref[...]                                           # (Bp, T*H)
        s = jnp.dot(hb, wab_ref[...],
                    preferred_element_type=jnp.float32)              # (Bp, T)
        # (attention bias is a per-score constant -> cancels in softmax)
        m = jnp.max(s, axis=-1, keepdims=True)                       # (Bp, 1)
        e = jnp.exp(s - m)                                           # (Bp, T)
        denom = jnp.sum(e, axis=-1, keepdims=True)                   # (Bp, 1)
        r = pl.reciprocal(denom, approx=True)
        r = r * (2.0 - denom * r)        # one Newton step -> ~1e-7 rel. error
        p = e * r                                                    # (Bp, T)

        weighted = p[:, 0:1] * hb[:, 0:H]
        for t in range(1, T):
            weighted = weighted + p[:, t:t + 1] * hb[:, t * H:(t + 1) * H]
        # attention-output dropout: eval mode -> identity

        # ---- fc with eval-mode BatchNorm folded into weight/bias ----
        out_ref[...] = (jnp.dot(weighted, wfc_ref[...],
                                preferred_element_type=jnp.float32)
                        + bfc_ref[...])                              # (Bp, Op)

    return kernel


# ----------------------------------------------------------------------------
# Parameters (deterministic init, PyTorch-style shapes)
# ----------------------------------------------------------------------------
def init_params(key, input_dim, hidden_dim, output_dim, num_layers):
    params = {"lstm": []}
    k = 1.0 / jnp.sqrt(hidden_dim)
    for layer in range(num_layers):
        din = input_dim if layer == 0 else hidden_dim
        key, k1, k2, k3, k4 = jax.random.split(key, 5)
        params["lstm"].append({
            "w_ih": jax.random.uniform(k1, (4 * hidden_dim, din), jnp.float32, -k, k),
            "w_hh": jax.random.uniform(k2, (4 * hidden_dim, hidden_dim), jnp.float32, -k, k),
            "b_ih": jax.random.uniform(k3, (4 * hidden_dim,), jnp.float32, -k, k),
            "b_hh": jax.random.uniform(k4, (4 * hidden_dim,), jnp.float32, -k, k),
        })
    key, k1, k2, k3, k4 = jax.random.split(key, 5)
    ka = 1.0 / jnp.sqrt(hidden_dim)
    params["w_att"] = jax.random.uniform(k1, (1, hidden_dim), jnp.float32, -ka, ka)
    params["b_att"] = jax.random.uniform(k2, (1,), jnp.float32, -ka, ka)
    params["w_fc"] = jax.random.uniform(k3, (output_dim, hidden_dim), jnp.float32, -ka, ka)
    params["b_fc"] = jax.random.uniform(k4, (output_dim,), jnp.float32, -ka, ka)
    # BatchNorm1d init: gamma=1, beta=0, running_mean=0, running_var=1
    params["bn_gamma"] = jnp.ones((output_dim,), jnp.float32)
    params["bn_beta"] = jnp.zeros((output_dim,), jnp.float32)
    params["bn_mean"] = jnp.zeros((output_dim,), jnp.float32)
    params["bn_var"] = jnp.ones((output_dim,), jnp.float32)
    return params


def prepare_params(params, seq_len, eps=1e-5, lane=128):
    """One-time transpose / bias-fold / BN-fold / attention-block / lane-pad."""
    prep = {"wx": [], "wh": [], "b": []}
    for p in params["lstm"]:
        prep["wx"].append(jnp.transpose(p["w_ih"]).astype(jnp.float32))   # (Din_l, 4H)
        prep["wh"].append(jnp.transpose(p["w_hh"]).astype(jnp.float32))   # (H, 4H)
        prep["b"].append((p["b_ih"] + p["b_hh"])[None, :].astype(jnp.float32))

    wa = params["w_att"].reshape(-1).astype(jnp.float32)                  # (H,)
    # Block-diagonal score weight: one MXU matmul (Bp, T*H) @ (T*H, T) yields all
    # T attention scores at once.  b_att is omitted: softmax is shift-invariant.
    prep["w_att_blk"] = jnp.kron(jnp.eye(seq_len, dtype=jnp.float32), wa[:, None])

    O = params["w_fc"].shape[0]
    Op = ((O + lane - 1) // lane) * lane                                  # lane-dense out
    pad = Op - O
    bn_scale = params["bn_gamma"] / jnp.sqrt(params["bn_var"] + eps)
    bn_shift = params["bn_beta"] - params["bn_mean"] * bn_scale
    wfc_fold = jnp.transpose(params["w_fc"]) * bn_scale[None, :]          # (H, O)
    bfc_fold = params["b_fc"] * bn_scale + bn_shift                       # (O,)
    prep["wfc"] = jnp.pad(wfc_fold, ((0, 0), (0, pad))).astype(jnp.float32)
    prep["bfc"] = jnp.pad(bfc_fold, (0, pad))[None, :].astype(jnp.float32)
    return prep


# ----------------------------------------------------------------------------
# Forward: pad to native tiles, call the single fused kernel, slice back
# ----------------------------------------------------------------------------
@functools.partial(jax.jit, static_argnames=("output_dim",))
def weather_network_forward(x_btd, prep, output_dim):
    B, T, Din = x_btd.shape
    B_pad = ((B + 7) // 8) * 8                      # f32 sublane tile
    # TODO(synk): for larger batches pad B to 64-128 rows (free MXU rows) and,
    # on v7x, shard the batch over both TensorCores via a parallel grid axis.
    H = prep["wh"][0].shape[0]
    Op = prep["wfc"].shape[1]
    num_layers = len(prep["wx"])

    x_pad = jnp.pad(x_btd.astype(jnp.float32), ((0, B_pad - B), (0, 0), (0, 0)))
    x_flat = jnp.swapaxes(x_pad, 0, 1).reshape(T * B_pad, Din)   # time-major, flat

    kernel = _make_fused_kernel(num_layers, T, B_pad, H)
    args = [x_flat]
    for l in range(num_layers):
        args += [prep["wx"][l], prep["wh"][l], prep["b"][l]]
    args += [prep["w_att_blk"], prep["wfc"], prep["bfc"]]

    out_pad = pl.pallas_call(
        kernel,
        out_shape=jax.ShapeDtypeStruct((B_pad, Op), jnp.float32),
        scratch_shapes=[pltpu.VMEM((B_pad, T * H), jnp.float32)],
    )(*args)
    return out_pad[:B, :output_dim]


# ----------------------------------------------------------------------------
# Pure-JAX reference (mirrors the PyTorch forward, eval mode)
# ----------------------------------------------------------------------------
def reference_forward(x_btd, params, num_layers):
    eps = 1e-5
    h = x_btd
    for layer in range(num_layers):
        p = params["lstm"][layer]
        B = h.shape[0]
        H = p["w_hh"].shape[1]

        def step(carry, x_t, p=p, H=H):
            hh, cc = carry
            gates = x_t @ p["w_ih"].T + hh @ p["w_hh"].T + p["b_ih"] + p["b_hh"]
            i, f, g, o = jnp.split(gates, 4, axis=-1)
            i = jax.nn.sigmoid(i); f = jax.nn.sigmoid(f)
            g = jnp.tanh(g); o = jax.nn.sigmoid(o)
            cc = f * cc + i * g
            hh = o * jnp.tanh(cc)
            return (hh, cc), hh

        init = (jnp.zeros((B, H), jnp.float32), jnp.zeros((B, H), jnp.float32))
        _, ys = lax.scan(step, init, jnp.swapaxes(h, 0, 1))
        h = jnp.swapaxes(ys, 0, 1)                            # (B, T, H)

    s = h @ params["w_att"].T + params["b_att"]               # (B, T, 1)
    a = jax.nn.softmax(s, axis=1)
    weighted = jnp.squeeze(jnp.swapaxes(a, 1, 2) @ h, axis=1) # (B, H)
    out = weighted @ params["w_fc"].T + params["b_fc"]
    out = ((out - params["bn_mean"]) / jnp.sqrt(params["bn_var"] + eps)
           * params["bn_gamma"] + params["bn_beta"])
    return out


# ----------------------------------------------------------------------------
if __name__ == "__main__":
    B, T = 2, 8
    input_dim, hidden_dim, output_dim, num_layers = 8, 32, 4, 3

    key = jax.random.PRNGKey(0)
    key, kx = jax.random.split(key)
    x = jax.random.normal(kx, (B, T, input_dim), jnp.float32)

    params = init_params(key, input_dim, hidden_dim, output_dim, num_layers)
    prep = prepare_params(params, seq_len=T)   # one-time transpose / fold / pad

    out = weather_network_forward(x, prep, output_dim)
    out = jax.block_until_ready(out)

    ref = reference_forward(x, params, num_layers)
    assert out.shape == (B, output_dim)
    assert jnp.allclose(out, ref, atol=1e-4, rtol=1e-4), (
        f"mismatch: max err {jnp.max(jnp.abs(out - ref))}")

    print("KERNEL_OK")
</pallas_src>

<mosaic_0001>
module attributes {stable_mosaic.version = 11 : i64} {
  func.func @kernel(%arg0: memref<64x8xf32, #tpu.memory_space<vmem>>, %arg1: memref<8x128xf32, #tpu.memory_space<vmem>>, %arg2: memref<32x128xf32, #tpu.memory_space<vmem>>, %arg3: memref<1x128xf32, #tpu.memory_space<vmem>>, %arg4: memref<32x128xf32, #tpu.memory_space<vmem>>, %arg5: memref<32x128xf32, #tpu.memory_space<vmem>>, %arg6: memref<1x128xf32, #tpu.memory_space<vmem>>, %arg7: memref<32x128xf32, #tpu.memory_space<vmem>>, %arg8: memref<32x128xf32, #tpu.memory_space<vmem>>, %arg9: memref<1x128xf32, #tpu.memory_space<vmem>>, %arg10: memref<256x8xf32, #tpu.memory_space<vmem>>, %arg11: memref<32x128xf32, #tpu.memory_space<vmem>>, %arg12: memref<1x128xf32, #tpu.memory_space<vmem>>, %arg13: memref<8x128xf32, #tpu.memory_space<vmem>>, %arg14: memref<8x256xf32, #tpu.memory_space<vmem>>) attributes {dimension_semantics = [], scalar_prefetch = 0 : i64, scratch_operands = 1 : i64, tpu.core_type = #tpu.core_type<tc>} {
    %cst = arith.constant 0.000000e+00 : f32
    %0 = vector.broadcast %cst : f32 to vector<8x32xf32>
    %c0 = arith.constant 0 : index
    %c0_0 = arith.constant 0 : index
    %1 = vector.load %arg0[%c0, %c0_0] : memref<64x8xf32, #tpu.memory_space<vmem>>, vector<8x8xf32>
    %c0_1 = arith.constant 0 : index
    %c0_2 = arith.constant 0 : index
    %2 = vector.load %arg1[%c0_1, %c0_2] : memref<8x128xf32, #tpu.memory_space<vmem>>, vector<8x128xf32>
    %cst_3 = arith.constant dense<0.000000e+00> : vector<8x128xf32>
    %3 = tpu.matmul %1, %2, %cst_3 {dimension_numbers = #tpu.dot_dimension_numbers<[1], [0], [0], [1], [0, 0, 1, 1], [], []>} : vector<8x8xf32>, vector<8x128xf32>, vector<8x128xf32> -> vector<8x128xf32>
    %c0_4 = arith.constant 0 : index
    %c0_5 = arith.constant 0 : index
    %4 = vector.load %arg2[%c0_4, %c0_5] : memref<32x128xf32, #tpu.memory_space<vmem>>, vector<32x128xf32>
    %cst_6 = arith.constant dense<0.000000e+00> : vector<8x128xf32>
    %5 = tpu.matmul %0, %4, %cst_6 {dimension_numbers = #tpu.dot_dimension_numbers<[1], [0], [0], [1], [0, 0, 1, 1], [], []>} : vector<8x32xf32>, vector<32x128xf32>, vector<8x128xf32> -> vector<8x128xf32>
    %6 = arith.addf %3, %5 : vector<8x128xf32>
    %c0_7 = arith.constant 0 : index
    %c0_8 = arith.constant 0 : index
    %7 = vector.load %arg3[%c0_7, %c0_8] : memref<1x128xf32, #tpu.memory_space<vmem>>, vector<1x128xf32>
    %8 = vector.broadcast %7 : vector<1x128xf32> to vector<8x128xf32>
    %9 = arith.addf %6, %8 : vector<8x128xf32>
    %10 = arith.negf %9 : vector<8x128xf32>
    %11 = math.exp %10 : vector<8x128xf32>
    %cst_9 = arith.constant 1.000000e+00 : f32
    %12 = vector.broadcast %cst_9 : f32 to vector<8x128xf32>
    %13 = arith.addf %12, %11 : vector<8x128xf32>
    %14 = arith.divf %12, %13 : vector<8x128xf32>
    %15 = math.tanh %9 : vector<8x128xf32>
    %16 = vector.extract_strided_slice %14 {offsets = [0, 0], sizes = [8, 32], strides = [1, 1]} : vector<8x128xf32> to vector<8x32xf32>
    %17 = vector.extract_strided_slice %14 {offsets = [0, 32], sizes = [8, 32], strides = [1, 1]} : vector<8x128xf32> to vector<8x32xf32>
    %18 = vector.extract_strided_slice %15 {offsets = [0, 64], sizes = [8, 32], strides = [1, 1]} : vector<8x128xf32> to vector<8x32xf32>
    %19 = vector.extract_strided_slice %14 {offsets = [0, 96], sizes = [8, 32], strides = [1, 1]} : vector<8x128xf32> to vector<8x32xf32>
    %20 = arith.mulf %17, %0 : vector<8x32xf32>
    %21 = arith.mulf %16, %18 : vector<8x32xf32>
    %22 = arith.addf %20, %21 : vector<8x32xf32>
    %23 = math.tanh %22 : vector<8x32xf32>
    %24 = arith.mulf %19, %23 : vector<8x32xf32>
    %c0_10 = arith.constant 0 : index
    %c0_11 = arith.constant 0 : index
    %25 = vector.load %arg4[%c0_10, %c0_11] : memref<32x128xf32, #tpu.memory_space<vmem>>, vector<32x128xf32>
    %cst_12 = arith.constant dense<0.000000e+00> : vector<8x128xf32>
    %26 = tpu.matmul %24, %25, %cst_12 {dimension_numbers = #tpu.dot_dimension_numbers<[1], [0], [0], [1], [0, 0, 1, 1], [], []>} : vector<8x32xf32>, vector<32x128xf32>, vector<8x128xf32> -> vector<8x128xf32>
    %c0_13 = arith.constant 0 : index
    %c0_14 = arith.constant 0 : index
    %27 = vector.load %arg5[%c0_13, %c0_14] : memref<32x128xf32, #tpu.memory_space<vmem>>, vector<32x128xf32>
    %cst_15 = arith.constant dense<0.000000e+00> : vector<8x128xf32>
    %28 = tpu.matmul %0, %27, %cst_15 {dimension_numbers = #tpu.dot_dimension_numbers<[1], [0], [0], [1], [0, 0, 1, 1], [], []>} : vector<8x32xf32>, vector<32x128xf32>, vector<8x128xf32> -> vector<8x128xf32>
    %29 = arith.addf %26, %28 : vector<8x128xf32>
    %c0_16 = arith.constant 0 : index
    %c0_17 = arith.constant 0 : index
    %30 = vector.load %arg6[%c0_16, %c0_17] : memref<1x128xf32, #tpu.memory_space<vmem>>, vector<1x128xf32>
    %31 = vector.broadcast %30 : vector<1x128xf32> to vector<8x128xf32>
    %32 = arith.addf %29, %31 : vector<8x128xf32>
    %33 = arith.negf %32 : vector<8x128xf32>
    %34 = math.exp %33 : vector<8x128xf32>
    %cst_18 = arith.constant 1.000000e+00 : f32
    %35 = vector.broadcast %cst_18 : f32 to vector<8x128xf32>
    %36 = arith.addf %35, %34 : vector<8x128xf32>
    %37 = arith.divf %35, %36 : vector<8x128xf32>
    %38 = math.tanh %32 : vector<8x128xf32>
    %39 = vector.extract_strided_slice %37 {offsets = [0, 0], sizes = [8, 32], strides = [1, 1]} : vector<8x128xf32> to vector<8x32xf32>
    %40 = vector.extract_strided_slice %37 {offsets = [0, 32], sizes = [8, 32], strides = [1, 1]} : vector<8x128xf32> to vector<8x32xf32>
    %41 = vector.extract_strided_slice %38 {offsets = [0, 64], sizes = [8, 32], strides = [1, 1]} : vector<8x128xf32> to vector<8x32xf32>
    %42 = vector.extract_strided_slice %37 {offsets = [0, 96], sizes = [8, 32], strides = [1, 1]} : vector<8x128xf32> to vector<8x32xf32>
    %43 = arith.mulf %40, %0 : vector<8x32xf32>
    %44 = arith.mulf %39, %41 : vector<8x32xf32>
    %45 = arith.addf %43, %44 : vector<8x32xf32>
    %46 = math.tanh %45 : vector<8x32xf32>
    %47 = arith.mulf %42, %46 : vector<8x32xf32>
    %c8 = arith.constant 8 : index
    %c0_19 = arith.constant 0 : index
    %48 = vector.load %arg0[%c8, %c0_19] : memref<64x8xf32, #tpu.memory_space<vmem>>, vector<8x8xf32>
    %c0_20 = arith.constant 0 : index
    %c0_21 = arith.constant 0 : index
    %49 = vector.load %arg1[%c0_20, %c0_21] : memref<8x128xf32, #tpu.memory_space<vmem>>, vector<8x128xf32>
    %cst_22 = arith.constant dense<0.000000e+00> : vector<8x128xf32>
    %50 = tpu.matmul %48, %49, %cst_22 {dimension_numbers = #tpu.dot_dimension_numbers<[1], [0], [0], [1], [0, 0, 1, 1], [], []>} : vector<8x8xf32>, vector<8x128xf32>, vector<8x128xf32> -> vector<8x128xf32>
    %c0_23 = arith.constant 0 : index
    %c0_24 = arith.constant 0 : index
    %51 = vector.load %arg2[%c0_23, %c0_24] : memref<32x128xf32, #tpu.memory_space<vmem>>, vector<32x128xf32>
    %cst_25 = arith.constant dense<0.000000e+00> : vector<8x128xf32>
    %52 = tpu.matmul %24, %51, %cst_25 {dimension_numbers = #tpu.dot_dimension_numbers<[1], [0], [0], [1], [0, 0, 1, 1], [], []>} : vector<8x32xf32>, vector<32x128xf32>, vector<8x128xf32> -> vector<8x128xf32>
    %53 = arith.addf %50, %52 : vector<8x128xf32>
    %c0_26 = arith.constant 0 : index
    %c0_27 = arith.constant 0 : index
    %54 = vector.load %arg3[%c0_26, %c0_27] : memref<1x128xf32, #tpu.memory_space<vmem>>, vector<1x128xf32>
    %55 = vector.broadcast %54 : vector<1x128xf32> to vector<8x128xf32>
    %56 = arith.addf %53, %55 : vector<8x128xf32>
    %57 = arith.negf %56 : vector<8x128xf32>
    %58 = math.exp %57 : vector<8x128xf32>
    %cst_28 = arith.constant 1.000000e+00 : f32
    %59 = vector.broadcast %cst_28 : f32 to vector<8x128xf32>
    %60 = arith.addf %59, %58 : vector<8x128xf32>
    %61 = arith.divf %59, %60 : vector<8x128xf32>
    %62 = math.tanh %56 : vector<8x128xf32>
    %63 = vector.extract_strided_slice %61 {offsets = [0, 0], sizes = [8, 32], strides = [1, 1]} : vector<8x128xf32> to vector<8x32xf32>
    %64 = vector.extract_strided_slice %61 {offsets = [0, 32], sizes = [8, 32], strides = [1, 1]} : vector<8x128xf32> to vector<8x32xf32>
    %65 = vector.extract_strided_slice %62 {offsets = [0, 64], sizes = [8, 32], strides = [1, 1]} : vector<8x128xf32> to vector<8x32xf32>
    %66 = vector.extract_strided_slice %61 {offsets = [0, 96], sizes = [8, 32], strides = [1, 1]} : vector<8x128xf32> to vector<8x32xf32>
    %67 = arith.mulf %64, %22 : vector<8x32xf32>
    %68 = arith.mulf %63, %65 : vector<8x32xf32>
    %69 = arith.addf %67, %68 : vector<8x32xf32>
    %70 = math.tanh %69 : vector<8x32xf32>
    %71 = arith.mulf %66, %70 : vector<8x32xf32>
    %c0_29 = arith.constant 0 : index
    %c0_30 = arith.constant 0 : index
    %72 = vector.load %arg7[%c0_29, %c0_30] : memref<32x128xf32, #tpu.memory_space<vmem>>, vector<32x128xf32>
    %cst_31 = arith.constant dense<0.000000e+00> : vector<8x128xf32>
    %73 = tpu.matmul %47, %72, %cst_31 {dimension_numbers = #tpu.dot_dimension_numbers<[1], [0], [0], [1], [0, 0, 1, 1], [], []>} : vector<8x32xf32>, vector<32x128xf32>, vector<8x128xf32> -> vector<8x128xf32>
    %c0_32 = arith.constant 0 : index
    %c0_33 = arith.constant 0 : index
    %74 = vector.load %arg8[%c0_32, %c0_33] : memref<32x128xf32, #tpu.memory_space<vmem>>, vector<32x128xf32>
    %cst_34 = arith.constant dense<0.000000e+00> : vector<8x128xf32>
    %75 = tpu.matmul %0, %74, %cst_34 {dimension_numbers = #tpu.dot_dimension_numbers<[1], [0], [0], [1], [0, 0, 1, 1], [], []>} : vector<8x32xf32>, vector<32x128xf32>, vector<8x128xf32> -> vector<8x128xf32>
    %76 = arith.addf %73, %75 : vector<8x128xf32>
    %c0_35 = arith.constant 0 : index
    %c0_36 = arith.constant 0 : index
    %77 = vector.load %arg9[%c0_35, %c0_36] : memref<1x128xf32, #tpu.memory_space<vmem>>, vector<1x128xf32>
    %78 = vector.broadcast %77 : vector<1x128xf32> to vector<8x128xf32>
    %79 = arith.addf %76, %78 : vector<8x128xf32>
    %80 = arith.negf %79 : vector<8x128xf32>
    %81 = math.exp %80 : vector<8x128xf32>
    %cst_37 = arith.constant 1.000000e+00 : f32
    %82 = vector.broadcast %cst_37 : f32 to vector<8x128xf32>
    %83 = arith.addf %82, %81 : vector<8x128xf32>
    %84 = arith.divf %82, %83 : vector<8x128xf32>
    %85 = math.tanh %79 : vector<8x128xf32>
    %86 = vector.extract_strided_slice %84 {offsets = [0, 0], sizes = [8, 32], strides = [1, 1]} : vector<8x128xf32> to vector<8x32xf32>
    %87 = vector.extract_strided_slice %84 {offsets = [0, 32], sizes = [8, 32], strides = [1, 1]} : vector<8x128xf32> to vector<8x32xf32>
    %88 = vector.extract_strided_slice %85 {offsets = [0, 64], sizes = [8, 32], strides = [1, 1]} : vector<8x128xf32> to vector<8x32xf32>
    %89 = vector.extract_strided_slice %84 {offsets = [0, 96], sizes = [8, 32], strides = [1, 1]} : vector<8x128xf32> to vector<8x32xf32>
    %90 = arith.mulf %87, %0 : vector<8x32xf32>
    %91 = arith.mulf %86, %88 : vector<8x32xf32>
    %92 = arith.addf %90, %91 : vector<8x32xf32>
    %93 = math.tanh %92 : vector<8x32xf32>
    %94 = arith.mulf %89, %93 : vector<8x32xf32>
    %c0_38 = arith.constant 0 : index
    %c0_39 = arith.constant 0 : index
    %95 = vector.load %arg14[%c0_38, %c0_39] : memref<8x256xf32, #tpu.memory_space<vmem>>, vector<8x32xf32>
    tpu.vector_store %arg14[%c0_38, %c0_39], %94 {strides = array<i32>} : memref<8x256xf32, #tpu.memory_space<vmem>>, vector<8x32xf32>,
    %c0_40 = arith.constant 0 : index
    %c0_41 = arith.constant 0 : index
    %96 = vector.load %arg4[%c0_40, %c0_41] : memref<32x128xf32, #tpu.memory_space<vmem>>, vector<32x128xf32>
    %cst_42 = arith.constant dense<0.000000e+00> : vector<8x128xf32>
    %97 = tpu.matmul %71, %96, %cst_42 {dimension_numbers = #tpu.dot_dimension_numbers<[1], [0], [0], [1], [0, 0, 1, 1], [], []>} : vector<8x32xf32>, vector<32x128xf32>, vector<8x128xf32> -> vector<8x128xf32>
    %c0_43 = arith.constant 0 : index
    %c0_44 = arith.constant 0 : index
    %98 = vector.load %arg5[%c0_43, %c0_44] : memref<32x128xf32, #tpu.memory_space<vmem>>, vector<32x128xf32>
    %cst_45 = arith.constant dense<0.000000e+00> : vector<8x128xf32>
    %99 = tpu.matmul %47, %98, %cst_45 {dimension_numbers = #tpu.dot_dimension_numbers<[1], [0], [0], [1], [0, 0, 1, 1], [], []>} : vector<8x32xf32>, vector<32x128xf32>, vector<8x128xf32> -> vector<8x128xf32>
    %100 = arith.addf %97, %99 : vector<8x128xf32>
    %c0_46 = arith.constant 0 : index
    %c0_47 = arith.constant 0 : index
    %101 = vector.load %arg6[%c0_46, %c0_47] : memref<1x128xf32, #tpu.memory_space<vmem>>, vector<1x128xf32>
    %102 = vector.broadcast %101 : vector<1x128xf32> to vector<8x128xf32>
    %103 = arith.addf %100, %102 : vector<8x128xf32>
    %104 = arith.negf %103 : vector<8x128xf32>
    %105 = math.exp %104 : vector<8x128xf32>
    %cst_48 = arith.constant 1.000000e+00 : f32
    %106 = vector.broadcast %cst_48 : f32 to vector<8x128xf32>
    %107 = arith.addf %106, %105 : vector<8x128xf32>
    %108 = arith.divf %106, %107 : vector<8x128xf32>
    %109 = math.tanh %103 : vector<8x128xf32>
    %110 = vector.extract_strided_slice %108 {offsets = [0, 0], sizes = [8, 32], strides = [1, 1]} : vector<8x128xf32> to vector<8x32xf32>
    %111 = vector.extract_strided_slice %108 {offsets = [0, 32], sizes = [8, 32], strides = [1, 1]} : vector<8x128xf32> to vector<8x32xf32>
    %112 = vector.extract_strided_slice %109 {offsets = [0, 64], sizes = [8, 32], strides = [1, 1]} : vector<8x128xf32> to vector<8x32xf32>
    %113 = vector.extract_strided_slice %108 {offsets = [0, 96], sizes = [8, 32], strides = [1, 1]} : vector<8x128xf32> to vector<8x32xf32>
    %114 = arith.mulf %111, %45 : vector<8x32xf32>
    %115 = arith.mulf %110, %112 : vector<8x32xf32>
    %116 = arith.addf %114, %115 : vector<8x32xf32>
    %117 = math.tanh %116 : vector<8x32xf32>
    %118 = arith.mulf %113, %117 : vector<8x32xf32>
    %c16 = arith.constant 16 : index
    %c0_49 = arith.constant 0 : index
    %119 = vector.load %arg0[%c16, %c0_49] : memref<64x8xf32, #tpu.memory_space<vmem>>, vector<8x8xf32>
    %c0_50 = arith.constant 0 : index
    %c0_51 = arith.constant 0 : index
    %120 = vector.load %arg1[%c0_50, %c0_51] : memref<8x128xf32, #tpu.memory_space<vmem>>, vector<8x128xf32>
    %cst_52 = arith.constant dense<0.000000e+00> : vector<8x128xf32>
    %121 = tpu.matmul %119, %120, %cst_52 {dimension_numbers = #tpu.dot_dimension_numbers<[1], [0], [0], [1], [0, 0, 1, 1], [], []>} : vector<8x8xf32>, vector<8x128xf32>, vector<8x128xf32> -> vector<8x128xf32>
    %c0_53 = arith.constant 0 : index
    %c0_54 = arith.constant 0 : index
    %122 = vector.load %arg2[%c0_53, %c0_54] : memref<32x128xf32, #tpu.memory_space<vmem>>, vector<32x128xf32>
    %cst_55 = arith.constant dense<0.000000e+00> : vector<8x128xf32>
    %123 = tpu.matmul %71, %122, %cst_55 {dimension_numbers = #tpu.dot_dimension_numbers<[1], [0], [0], [1], [0, 0, 1, 1], [], []>} : vector<8x32xf32>, vector<32x128xf32>, vector<8x128xf32> -> vector<8x128xf32>
    %124 = arith.addf %121, %123 : vector<8x128xf32>
    %c0_56 = arith.constant 0 : index
    %c0_57 = arith.constant 0 : index
    %125 = vector.load %arg3[%c0_56, %c0_57] : memref<1x128xf32, #tpu.memory_space<vmem>>, vector<1x128xf32>
    %126 = vector.broadcast %125 : vector<1x128xf32> to vector<8x128xf32>
    %127 = arith.addf %124, %126 : vector<8x128xf32>
    %128 = arith.negf %127 : vector<8x128xf32>
    %129 = math.exp %128 : vector<8x128xf32>
    %cst_58 = arith.constant 1.000000e+00 : f32
    %130 = vector.broadcast %cst_58 : f32 to vector<8x128xf32>
    %131 = arith.addf %130, %129 : vector<8x128xf32>
    %132 = arith.divf %130, %131 : vector<8x128xf32>
    %133 = math.tanh %127 : vector<8x128xf32>
    %134 = vector.extract_strided_slice %132 {offsets = [0, 0], sizes = [8, 32], strides = [1, 1]} : vector<8x128xf32> to vector<8x32xf32>
    %135 = vector.extract_strided_slice %132 {offsets = [0, 32], sizes = [8, 32], strides = [1, 1]} : vector<8x128xf32> to vector<8x32xf32>
    %136 = vector.extract_strided_slice %133 {offsets = [0, 64], sizes = [8, 32], strides = [1, 1]} : vector<8x128xf32> to vector<8x32xf32>
    %137 = vector.extract_strided_slice %132 {offsets = [0, 96], sizes = [8, 32], strides = [1, 1]} : vector<8x128xf32> to vector<8x32xf32>
    %138 = arith.mulf %135, %69 : vector<8x32xf32>
    %139 = arith.mulf %134, %136 : vector<8x32xf32>
    %140 = arith.addf %138, %139 : vector<8x32xf32>
    %141 = math.tanh %140 : vector<8x32xf32>
    %142 = arith.mulf %137, %141 : vector<8x32xf32>
    %c0_59 = arith.constant 0 : index
    %c0_60 = arith.constant 0 : index
    %143 = vector.load %arg7[%c0_59, %c0_60] : memref<32x128xf32, #tpu.memory_space<vmem>>, vector<32x128xf32>
    %cst_61 = arith.constant dense<0.000000e+00> : vector<8x128xf32>
    %144 = tpu.matmul %118, %143, %cst_61 {dimension_numbers = #tpu.dot_dimension_numbers<[1], [0], [0], [1], [0, 0, 1, 1], [], []>} : vector<8x32xf32>, vector<32x128xf32>, vector<8x128xf32> -> vector<8x128xf32>
    %c0_62 = arith.constant 0 : index
    %c0_63 = arith.constant 0 : index
    %145 = vector.load %arg8[%c0_62, %c0_63] : memref<32x128xf32, #tpu.memory_space<vmem>>, vector<32x128xf32>
    %cst_64 = arith.constant dense<0.000000e+00> : vector<8x128xf32>
    %146 = tpu.matmul %94, %145, %cst_64 {dimension_numbers = #tpu.dot_dimension_numbers<[1], [0], [0], [1], [0, 0, 1, 1], [], []>} : vector<8x32xf32>, vector<32x128xf32>, vector<8x128xf32> -> vector<8x128xf32>
    %147 = arith.addf %144, %146 : vector<8x128xf32>
    %c0_65 = arith.constant 0 : index
    %c0_66 = arith.constant 0 : index
    %148 = vector.load %arg9[%c0_65, %c0_66] : memref<1x128xf32, #tpu.memory_space<vmem>>, vector<1x128xf32>
    %149 = vector.broadcast %148 : vector<1x128xf32> to vector<8x128xf32>
    %150 = arith.addf %147, %149 : vector<8x128xf32>
    %151 = arith.negf %150 : vector<8x128xf32>
    %152 = math.exp %151 : vector<8x128xf32>
    %cst_67 = arith.constant 1.000000e+00 : f32
    %153 = vector.broadcast %cst_67 : f32 to vector<8x128xf32>
    %154 = arith.addf %153, %152 : vector<8x128xf32>
    %155 = arith.divf %153, %154 : vector<8x128xf32>
    %156 = math.tanh %150 : vector<8x128xf32>
    %157 = vector.extract_strided_slice %155 {offsets = [0, 0], sizes = [8, 32], strides = [1, 1]} : vector<8x128xf32> to vector<8x32xf32>
    %158 = vector.extract_strided_slice %155 {offsets = [0, 32], sizes = [8, 32], strides = [1, 1]} : vector<8x128xf32> to vector<8x32xf32>
    %159 = vector.extract_strided_slice %156 {offsets = [0, 64], sizes = [8, 32], strides = [1, 1]} : vector<8x128xf32> to vector<8x32xf32>
    %160 = vector.extract_strided_slice %155 {offsets = [0, 96], sizes = [8, 32], strides = [1, 1]} : vector<8x128xf32> to vector<8x32xf32>
    %161 = arith.mulf %158, %92 : vector<8x32xf32>
    %162 = arith.mulf %157, %159 : vector<8x32xf32>
    %163 = arith.addf %161, %162 : vector<8x32xf32>
    %164 = math.tanh %163 : vector<8x32xf32>
    %165 = arith.mulf %160, %164 : vector<8x32xf32>
    %c0_68 = arith.constant 0 : index
    %c32 = arith.constant 32 : index
    %166 = vector.load %arg14[%c0_68, %c32] : memref<8x256xf32, #tpu.memory_space<vmem>>, vector<8x32xf32>
    tpu.vector_store %arg14[%c0_68, %c32], %165 {strides = array<i32>} : memref<8x256xf32, #tpu.memory_space<vmem>>, vector<8x32xf32>,
    %c0_69 = arith.constant 0 : index
    %c0_70 = arith.constant 0 : index
    %167 = vector.load %arg4[%c0_69, %c0_70] : memref<32x128xf32, #tpu.memory_space<vmem>>, vector<32x128xf32>
    %cst_71 = arith.constant dense<0.000000e+00> : vector<8x128xf32>
    %168 = tpu.matmul %142, %167, %cst_71 {dimension_numbers = #tpu.dot_dimension_numbers<[1], [0], [0], [1], [0, 0, 1, 1], [], []>} : vector<8x32xf32>, vector<32x128xf32>, vector<8x128xf32> -> vector<8x128xf32>
    %c0_72 = arith.constant 0 : index
    %c0_73 = arith.constant 0 : index
    %169 = vector.load %arg5[%c0_72, %c0_73] : memref<32x128xf32, #tpu.memory_space<vmem>>, vector<32x128xf32>
    %cst_74 = arith.constant dense<0.000000e+00> : vector<8x128xf32>
    %170 = tpu.matmul %118, %169, %cst_74 {dimension_numbers = #tpu.dot_dimension_numbers<[1], [0], [0], [1], [0, 0, 1, 1], [], []>} : vector<8x32xf32>, vector<32x128xf32>, vector<8x128xf32> -> vector<8x128xf32>
    %171 = arith.addf %168, %170 : vector<8x128xf32>
    %c0_75 = arith.constant 0 : index
    %c0_76 = arith.constant 0 : index
    %172 = vector.load %arg6[%c0_75, %c0_76] : memref<1x128xf32, #tpu.memory_space<vmem>>, vector<1x128xf32>
    %173 = vector.broadcast %172 : vector<1x128xf32> to vector<8x128xf32>
    %174 = arith.addf %171, %173 : vector<8x128xf32>
    %175 = arith.negf %174 : vector<8x128xf32>
    %176 = math.exp %175 : vector<8x128xf32>
    %cst_77 = arith.constant 1.000000e+00 : f32
    %177 = vector.broadcast %cst_77 : f32 to vector<8x128xf32>
    %178 = arith.addf %177, %176 : vector<8x128xf32>
    %179 = arith.divf %177, %178 : vector<8x128xf32>
    %180 = math.tanh %174 : vector<8x128xf32>
    %181 = vector.extract_strided_slice %179 {offsets = [0, 0], sizes = [8, 32], strides = [1, 1]} : vector<8x128xf32> to vector<8x32xf32>
    %182 = vector.extract_strided_slice %179 {offsets = [0, 32], sizes = [8, 32], strides = [1, 1]} : vector<8x128xf32> to vector<8x32xf32>
    %183 = vector.extract_strided_slice %180 {offsets = [0, 64], sizes = [8, 32], strides = [1, 1]} : vector<8x128xf32> to vector<8x32xf32>
    %184 = vector.extract_strided_slice %179 {offsets = [0, 96], sizes = [8, 32], strides = [1, 1]} : vector<8x128xf32> to vector<8x32xf32>
    %185 = arith.mulf %182, %116 : vector<8x32xf32>
    %186 = arith.mulf %181, %183 : vector<8x32xf32>
    %187 = arith.addf %185, %186 : vector<8x32xf32>
    %188 = math.tanh %187 : vector<8x32xf32>
    %189 = arith.mulf %184, %188 : vector<8x32xf32>
    %c24 = arith.constant 24 : index
    %c0_78 = arith.constant 0 : index
    %190 = vector.load %arg0[%c24, %c0_78] : memref<64x8xf32, #tpu.memory_space<vmem>>, vector<8x8xf32>
    %c0_79 = arith.constant 0 : index
    %c0_80 = arith.constant 0 : index
    %191 = vector.load %arg1[%c0_79, %c0_80] : memref<8x128xf32, #tpu.memory_space<vmem>>, vector<8x128xf32>
    %cst_81 = arith.constant dense<0.000000e+00> : vector<8x128xf32>
    %192 = tpu.matmul %190, %191, %cst_81 {dimension_numbers = #tpu.dot_dimension_numbers<[1], [0], [0], [1], [0, 0, 1, 1], [], []>} : vector<8x8xf32>, vector<8x128xf32>, vector<8x128xf32> -> vector<8x128xf32>
    %c0_82 = arith.constant 0 : index
    %c0_83 = arith.constant 0 : index
    %193 = vector.load %arg2[%c0_82, %c0_83] : memref<32x128xf32, #tpu.memory_space<vmem>>, vector<32x128xf32>
    %cst_84 = arith.constant dense<0.000000e+00> : vector<8x128xf32>
    %194 = tpu.matmul %142, %193, %cst_84 {dimension_numbers = #tpu.dot_dimension_numbers<[1], [0], [0], [1], [0, 0, 1, 1], [], []>} : vector<8x32xf32>, vector<32x128xf32>, vector<8x128xf32> -> vector<8x128xf32>
    %195 = arith.addf %192, %194 : vector<8x128xf32>
    %c0_85 = arith.constant 0 : index
    %c0_86 = arith.constant 0 : index
    %196 = vector.load %arg3[%c0_85, %c0_86] : memref<1x128xf32, #tpu.memory_space<vmem>>, vector<1x128xf32>
    %197 = vector.broadcast %196 : vector<1x128xf32> to vector<8x128xf32>
    %198 = arith.addf %195, %197 : vector<8x128xf32>
    %199 = arith.negf %198 : vector<8x128xf32>
    %200 = math.exp %199 : vector<8x128xf32>
    %cst_87 = arith.constant 1.000000e+00 : f32
    %201 = vector.broadcast %cst_87 : f32 to vector<8x128xf32>
    %202 = arith.addf %201, %200 : vector<8x128xf32>
    %203 = arith.divf %201, %202 : vector<8x128xf32>
    %204 = math.tanh %198 : vector<8x128xf32>
    %205 = vector.extract_strided_slice %203 {offsets = [0, 0], sizes = [8, 32], strides = [1, 1]} : vector<8x128xf32> to vector<8x32xf32>
    %206 = vector.extract_strided_slice %203 {offsets = [0, 32], sizes = [8, 32], strides = [1, 1]} : vector<8x128xf32> to vector<8x32xf32>
    %207 = vector.extract_strided_slice %204 {offsets = [0, 64], sizes = [8, 32], strides = [1, 1]} : vector<8x128xf32> to vector<8x32xf32>
    %208 = vector.extract_strided_slice %203 {offsets = [0, 96], sizes = [8, 32], strides = [1, 1]} : vector<8x128xf32> to vector<8x32xf32>
    %209 = arith.mulf %206, %140 : vector<8x32xf32>
    %210 = arith.mulf %205, %207 : vector<8x32xf32>
    %211 = arith.addf %209, %210 : vector<8x32xf32>
    %212 = math.tanh %211 : vector<8x32xf32>
    %213 = arith.mulf %208, %212 : vector<8x32xf32>
    %c0_88 = arith.constant 0 : index
    %c0_89 = arith.constant 0 : index
    %214 = vector.load %arg7[%c0_88, %c0_89] : memref<32x128xf32, #tpu.memory_space<vmem>>, vector<32x128xf32>
    %cst_90 = arith.constant dense<0.000000e+00> : vector<8x128xf32>
    %215 = tpu.matmul %189, %214, %cst_90 {dimension_numbers = #tpu.dot_dimension_numbers<[1], [0], [0], [1], [0, 0, 1, 1], [], []>} : vector<8x32xf32>, vector<32x128xf32>, vector<8x128xf32> -> vector<8x128xf32>
    %c0_91 = arith.constant 0 : index
    %c0_92 = arith.constant 0 : index
    %216 = vector.load %arg8[%c0_91, %c0_92] : memref<32x128xf32, #tpu.memory_space<vmem>>, vector<32x128xf32>
    %cst_93 = arith.constant dense<0.000000e+00> : vector<8x128xf32>
    %217 = tpu.matmul %165, %216, %cst_93 {dimension_numbers = #tpu.dot_dimension_numbers<[1], [0], [0], [1], [0, 0, 1, 1], [], []>} : vector<8x32xf32>, vector<32x128xf32>, vector<8x128xf32> -> vector<8x128xf32>
    %218 = arith.addf %215, %217 : vector<8x128xf32>
    %c0_94 = arith.constant 0 : index
    %c0_95 = arith.constant 0 : index
    %219 = vector.load %arg9[%c0_94, %c0_95] : memref<1x128xf32, #tpu.memory_space<vmem>>, vector<1x128xf32>
    %220 = vector.broadcast %219 : vector<1x128xf32> to vector<8x128xf32>
    %221 = arith.addf %218, %220 : vector<8x128xf32>
    %222 = arith.negf %221 : vector<8x128xf32>
    %223 = math.exp %222 : vector<8x128xf32>
    %cst_96 = arith.constant 1.000000e+00 : f32
    %224 = vector.broadcast %cst_96 : f32 to vector<8x128xf32>
    %225 = arith.addf %224, %223 : vector<8x128xf32>
    %226 = arith.divf %224, %225 : vector<8x128xf32>
    %227 = math.tanh %221 : vector<8x128xf32>
    %228 = vector.extract_strided_slice %226 {offsets = [0, 0], sizes = [8, 32], strides = [1, 1]} : vector<8x128xf32> to vector<8x32xf32>
    %229 = vector.extract_strided_slice %226 {offsets = [0, 32], sizes = [8, 32], strides = [1, 1]} : vector<8x128xf32> to vector<8x32xf32>
    %230 = vector.extract_strided_slice %227 {offsets = [0, 64], sizes = [8, 32], strides = [1, 1]} : vector<8x128xf32> to vector<8x32xf32>
    %231 = vector.extract_strided_slice %226 {offsets = [0, 96], sizes = [8, 32], strides = [1, 1]} : vector<8x128xf32> to vector<8x32xf32>
    %232 = arith.mulf %229, %163 : vector<8x32xf32>
    %233 = arith.mulf %228, %230 : vector<8x32xf32>
    %234 = arith.addf %232, %233 : vector<8x32xf32>
    %235 = math.tanh %234 : vector<8x32xf32>
    %236 = arith.mulf %231, %235 : vector<8x32xf32>
    %c0_97 = arith.constant 0 : index
    %c64 = arith.constant 64 : index
    %237 = vector.load %arg14[%c0_97, %c64] : memref<8x256xf32, #tpu.memory_space<vmem>>, vector<8x32xf32>
    tpu.vector_store %arg14[%c0_97, %c64], %236 {strides = array<i32>} : memref<8x256xf32, #tpu.memory_space<vmem>>, vector<8x32xf32>,
    %c0_98 = arith.constant 0 : index
    %c0_99 = arith.constant 0 : index
    %238 = vector.load %arg4[%c0_98, %c0_99] : memref<32x128xf32, #tpu.memory_space<vmem>>, vector<32x128xf32>
    %cst_100 = arith.constant dense<0.000000e+00> : vector<8x128xf32>
    %239 = tpu.matmul %213, %238, %cst_100 {dimension_numbers = #tpu.dot_dimension_numbers<[1], [0], [0], [1], [0, 0, 1, 1], [], []>} : vector<8x32xf32>, vector<32x128xf32>, vector<8x128xf32> -> vector<8x128xf32>
    %c0_101 = arith.constant 0 : index
    %c0_102 = arith.constant 0 : index
    %240 = vector.load %arg5[%c0_101, %c0_102] : memref<32x128xf32, #tpu.memory_space<vmem>>, vector<32x128xf32>
    %cst_103 = arith.constant dense<0.000000e+00> : vector<8x128xf32>
    %241 = tpu.matmul %189, %240, %cst_103 {dimension_numbers = #tpu.dot_dimension_numbers<[1], [0], [0], [1], [0, 0, 1, 1], [], []>} : vector<8x32xf32>, vector<32x128xf32>, vector<8x128xf32> -> vector<8x128xf32>
    %242 = arith.addf %239, %241 : vector<8x128xf32>
    %c0_104 = arith.constant 0 : index
    %c0_105 = arith.constant 0 : index
    %243 = vector.load %arg6[%c0_104, %c0_105] : memref<1x128xf32, #tpu.memory_space<vmem>>, vector<1x128xf32>
    %244 = vector.broadcast %243 : vector<1x128xf32> to vector<8x128xf32>
    %245 = arith.addf %242, %244 : vector<8x128xf32>
    %246 = arith.negf %245 : vector<8x128xf32>
    %247 = math.exp %246 : vector<8x128xf32>
    %cst_106 = arith.constant 1.000000e+00 : f32
    %248 = vector.broadcast %cst_106 : f32 to vector<8x128xf32>
    %249 = arith.addf %248, %247 : vector<8x128xf32>
    %250 = arith.divf %248, %249 : vector<8x128xf32>
    %251 = math.tanh %245 : vector<8x128xf32>
    %252 = vector.extract_strided_slice %250 {offsets = [0, 0], sizes = [8, 32], strides = [1, 1]} : vector<8x128xf32> to vector<8x32xf32>
    %253 = vector.extract_strided_slice %250 {offsets = [0, 32], sizes = [8, 32], strides = [1, 1]} : vector<8x128xf32> to vector<8x32xf32>
    %254 = vector.extract_strided_slice %251 {offsets = [0, 64], sizes = [8, 32], strides = [1, 1]} : vector<8x128xf32> to vector<8x32xf32>
    %255 = vector.extract_strided_slice %250 {offsets = [0, 96], sizes = [8, 32], strides = [1, 1]} : vector<8x128xf32> to vector<8x32xf32>
    %256 = arith.mulf %253, %187 : vector<8x32xf32>
    %257 = arith.mulf %252, %254 : vector<8x32xf32>
    %258 = arith.addf %256, %257 : vector<8x32xf32>
    %259 = math.tanh %258 : vector<8x32xf32>
    %260 = arith.mulf %255, %259 : vector<8x32xf32>
    %c32_107 = arith.constant 32 : index
    %c0_108 = arith.constant 0 : index
    %261 = vector.load %arg0[%c32_107, %c0_108] : memref<64x8xf32, #tpu.memory_space<vmem>>, vector<8x8xf32>
    %c0_109 = arith.constant 0 : index
    %c0_110 = arith.constant 0 : index
    %262 = vector.load %arg1[%c0_109, %c0_110] : memref<8x128xf32, #tpu.memory_space<vmem>>, vector<8x128xf32>
    %cst_111 = arith.constant dense<0.000000e+00> : vector<8x128xf32>
    %263 = tpu.matmul %261, %262, %cst_111 {dimension_numbers = #tpu.dot_dimension_numbers<[1], [0], [0], [1], [0, 0, 1, 1], [], []>} : vector<8x8xf32>, vector<8x128xf32>, vector<8x128xf32> -> vector<8x128xf32>
    %c0_112 = arith.constant 0 : index
    %c0_113 = arith.constant 0 : index
    %264 = vector.load %arg2[%c0_112, %c0_113] : memref<32x128xf32, #tpu.memory_space<vmem>>, vector<32x128xf32>
    %cst_114 = arith.constant dense<0.000000e+00> : vector<8x128xf32>
    %265 = tpu.matmul %213, %264, %cst_114 {dimension_numbers = #tpu.dot_dimension_numbers<[1], [0], [0], [1], [0, 0, 1, 1], [], []>} : vector<8x32xf32>, vector<32x128xf32>, vector<8x128xf32> -> vector<8x128xf32>
    %266 = arith.addf %263, %265 : vector<8x128xf32>
    %c0_115 = arith.constant 0 : index
    %c0_116 = arith.constant 0 : index
    %267 = vector.load %arg3[%c0_115, %c0_116] : memref<1x128xf32, #tpu.memory_space<vmem>>, vector<1x128xf32>
    %268 = vector.broadcast %267 : vector<1x128xf32> to vector<8x128xf32>
    %269 = arith.addf %266, %268 : vector<8x128xf32>
    %270 = arith.negf %269 : vector<8x128xf32>
    %271 = math.exp %270 : vector<8x128xf32>
    %cst_117 = arith.constant 1.000000e+00 : f32
    %272 = vector.broadcast %cst_117 : f32 to vector<8x128xf32>
    %273 = arith.addf %272, %271 : vector<8x128xf32>
    %274 = arith.divf %272, %273 : vector<8x128xf32>
    %275 = math.tanh %269 : vector<8x128xf32>
    %276 = vector.extract_strided_slice %274 {offsets = [0, 0], sizes = [8, 32], strides = [1, 1]} : vector<8x128xf32> to vector<8x32xf32>
    %277 = vector.extract_strided_slice %274 {offsets = [0, 32], sizes = [8, 32], strides = [1, 1]} : vector<8x128xf32> to vector<8x32xf32>
    %278 = vector.extract_strided_slice %275 {offsets = [0, 64], sizes = [8, 32], strides = [1, 1]} : vector<8x128xf32> to vector<8x32xf32>
    %279 = vector.extract_strided_slice %274 {offsets = [0, 96], sizes = [8, 32], strides = [1, 1]} : vector<8x128xf32> to vector<8x32xf32>
    %280 = arith.mulf %277, %211 : vector<8x32xf32>
    %281 = arith.mulf %276, %278 : vector<8x32xf32>
    %282 = arith.addf %280, %281 : vector<8x32xf32>
    %283 = math.tanh %282 : vector<8x32xf32>
    %284 = arith.mulf %279, %283 : vector<8x32xf32>
    %c0_118 = arith.constant 0 : index
    %c0_119 = arith.constant 0 : index
    %285 = vector.load %arg7[%c0_118, %c0_119] : memref<32x128xf32, #tpu.memory_space<vmem>>, vector<32x128xf32>
    %cst_120 = arith.constant dense<0.000000e+00> : vector<8x128xf32>
    %286 = tpu.matmul %260, %285, %cst_120 {dimension_numbers = #tpu.dot_dimension_numbers<[1], [0], [0], [1], [0, 0, 1, 1], [], []>} : vector<8x32xf32>, vector<32x128xf32>, vector<8x128xf32> -> vector<8x128xf32>
    %c0_121 = arith.constant 0 : index
    %c0_122 = arith.constant 0 : index
    %287 = vector.load %arg8[%c0_121, %c0_122] : memref<32x128xf32, #tpu.memory_space<vmem>>, vector<32x128xf32>
    %cst_123 = arith.constant dense<0.000000e+00> : vector<8x128xf32>
    %288 = tpu.matmul %236, %287, %cst_123 {dimension_numbers = #tpu.dot_dimension_numbers<[1], [0], [0], [1], [0, 0, 1, 1], [], []>} : vector<8x32xf32>, vector<32x128xf32>, vector<8x128xf32> -> vector<8x128xf32>
    %289 = arith.addf %286, %288 : vector<8x128xf32>
    %c0_124 = arith.constant 0 : index
    %c0_125 = arith.constant 0 : index
    %290 = vector.load %arg9[%c0_124, %c0_125] : memref<1x128xf32, #tpu.memory_space<vmem>>, vector<1x128xf32>
    %291 = vector.broadcast %290 : vector<1x128xf32> to vector<8x128xf32>
    %292 = arith.addf %289, %291 : vector<8x128xf32>
    %293 = arith.negf %292 : vector<8x128xf32>
    %294 = math.exp %293 : vector<8x128xf32>
    %cst_126 = arith.constant 1.000000e+00 : f32
    %295 = vector.broadcast %cst_126 : f32 to vector<8x128xf32>
    %296 = arith.addf %295, %294 : vector<8x128xf32>
    %297 = arith.divf %295, %296 : vector<8x128xf32>
    %298 = math.tanh %292 : vector<8x128xf32>
    %299 = vector.extract_strided_slice %297 {offsets = [0, 0], sizes = [8, 32], strides = [1, 1]} : vector<8x128xf32> to vector<8x32xf32>
    %300 = vector.extract_strided_slice %297 {offsets = [0, 32], sizes = [8, 32], strides = [1, 1]} : vector<8x128xf32> to vector<8x32xf32>
    %301 = vector.extract_strided_slice %298 {offsets = [0, 64], sizes = [8, 32], strides = [1, 1]} : vector<8x128xf32> to vector<8x32xf32>
    %302 = vector.extract_strided_slice %297 {offsets = [0, 96], sizes = [8, 32], strides = [1, 1]} : vector<8x128xf32> to vector<8x32xf32>
    %303 = arith.mulf %300, %234 : vector<8x32xf32>
    %304 = arith.mulf %299, %301 : vector<8x32xf32>
    %305 = arith.addf %303, %304 : vector<8x32xf32>
    %306 = math.tanh %305 : vector<8x32xf32>
    %307 = arith.mulf %302, %306 : vector<8x32xf32>
    %c0_127 = arith.constant 0 : index
    %c96 = arith.constant 96 : index
    %308 = vector.load %arg14[%c0_127, %c96] : memref<8x256xf32, #tpu.memory_space<vmem>>, vector<8x32xf32>
    tpu.vector_store %arg14[%c0_127, %c96], %307 {strides = array<i32>} : memref<8x256xf32, #tpu.memory_space<vmem>>, vector<8x32xf32>,
    %c0_128 = arith.constant 0 : index
    %c0_129 = arith.constant 0 : index
    %309 = vector.load %arg4[%c0_128, %c0_129] : memref<32x128xf32, #tpu.memory_space<vmem>>, vector<32x128xf32>
    %cst_130 = arith.constant dense<0.000000e+00> : vector<8x128xf32>
    %310 = tpu.matmul %284, %309, %cst_130 {dimension_numbers = #tpu.dot_dimension_numbers<[1], [0], [0], [1], [0, 0, 1, 1], [], []>} : vector<8x32xf32>, vector<32x128xf32>, vector<8x128xf32> -> vector<8x128xf32>
    %c0_131 = arith.constant 0 : index
    %c0_132 = arith.constant 0 : index
    %311 = vector.load %arg5[%c0_131, %c0_132] : memref<32x128xf32, #tpu.memory_space<vmem>>, vector<32x128xf32>
    %cst_133 = arith.constant dense<0.000000e+00> : vector<8x128xf32>
    %312 = tpu.matmul %260, %311, %cst_133 {dimension_numbers = #tpu.dot_dimension_numbers<[1], [0], [0], [1], [0, 0, 1, 1], [], []>} : vector<8x32xf32>, vector<32x128xf32>, vector<8x128xf32> -> vector<8x128xf32>
    %313 = arith.addf %310, %312 : vector<8x128xf32>
    %c0_134 = arith.constant 0 : index
    %c0_135 = arith.constant 0 : index
    %314 = vector.load %arg6[%c0_134, %c0_135] : memref<1x128xf32, #tpu.memory_space<vmem>>, vector<1x128xf32>
    %315 = vector.broadcast %314 : vector<1x128xf32> to vector<8x128xf32>
    %316 = arith.addf %313, %315 : vector<8x128xf32>
    %317 = arith.negf %316 : vector<8x128xf32>
    %318 = math.exp %317 : vector<8x128xf32>
    %cst_136 = arith.constant 1.000000e+00 : f32
    %319 = vector.broadcast %cst_136 : f32 to vector<8x128xf32>
    %320 = arith.addf %319, %318 : vector<8x128xf32>
    %321 = arith.divf %319, %320 : vector<8x128xf32>
    %322 = math.tanh %316 : vector<8x128xf32>
    %323 = vector.extract_strided_slice %321 {offsets = [0, 0], sizes = [8, 32], strides = [1, 1]} : vector<8x128xf32> to vector<8x32xf32>
    %324 = vector.extract_strided_slice %321 {offsets = [0, 32], sizes = [8, 32], strides = [1, 1]} : vector<8x128xf32> to vector<8x32xf32>
    %325 = vector.extract_strided_slice %322 {offsets = [0, 64], sizes = [8, 32], strides = [1, 1]} : vector<8x128xf32> to vector<8x32xf32>
    %326 = vector.extract_strided_slice %321 {offsets = [0, 96], sizes = [8, 32], strides = [1, 1]} : vector<8x128xf32> to vector<8x32xf32>
    %327 = arith.mulf %324, %258 : vector<8x32xf32>
    %328 = arith.mulf %323, %325 : vector<8x32xf32>
    %329 = arith.addf %327, %328 : vector<8x32xf32>
    %330 = math.tanh %329 : vector<8x32xf32>
    %331 = arith.mulf %326, %330 : vector<8x32xf32>
    %c40 = arith.constant 40 : index
    %c0_137 = arith.constant 0 : index
    %332 = vector.load %arg0[%c40, %c0_137] : memref<64x8xf32, #tpu.memory_space<vmem>>, vector<8x8xf32>
    %c0_138 = arith.constant 0 : index
    %c0_139 = arith.constant 0 : index
    %333 = vector.load %arg1[%c0_138, %c0_139] : memref<8x128xf32, #tpu.memory_space<vmem>>, vector<8x128xf32>
    %cst_140 = arith.constant dense<0.000000e+00> : vector<8x128xf32>
    %334 = tpu.matmul %332, %333, %cst_140 {dimension_numbers = #tpu.dot_dimension_numbers<[1], [0], [0], [1], [0, 0, 1, 1], [], []>} : vector<8x8xf32>, vector<8x128xf32>, vector<8x128xf32> -> vector<8x128xf32>
    %c0_141 = arith.constant 0 : index
    %c0_142 = arith.constant 0 : index
    %335 = vector.load %arg2[%c0_141, %c0_142] : memref<32x128xf32, #tpu.memory_space<vmem>>, vector<32x128xf32>
    %cst_143 = arith.constant dense<0.000000e+00> : vector<8x128xf32>
    %336 = tpu.matmul %284, %335, %cst_143 {dimension_numbers = #tpu.dot_dimension_numbers<[1], [0], [0], [1], [0, 0, 1, 1], [], []>} : vector<8x32xf32>, vector<32x128xf32>, vector<8x128xf32> -> vector<8x128xf32>
    %337 = arith.addf %334, %336 : vector<8x128xf32>
    %c0_144 = arith.constant 0 : index
    %c0_145 = arith.constant 0 : index
    %338 = vector.load %arg3[%c0_144, %c0_145] : memref<1x128xf32, #tpu.memory_space<vmem>>, vector<1x128xf32>
    %339 = vector.broadcast %338 : vector<1x128xf32> to vector<8x128xf32>
    %340 = arith.addf %337, %339 : vector<8x128xf32>
    %341 = arith.negf %340 : vector<8x128xf32>
    %342 = math.exp %341 : vector<8x128xf32>
    %cst_146 = arith.constant 1.000000e+00 : f32
    %343 = vector.broadcast %cst_146 : f32 to vector<8x128xf32>
    %344 = arith.addf %343, %342 : vector<8x128xf32>
    %345 = arith.divf %343, %344 : vector<8x128xf32>
    %346 = math.tanh %340 : vector<8x128xf32>
    %347 = vector.extract_strided_slice %345 {offsets = [0, 0], sizes = [8, 32], strides = [1, 1]} : vector<8x128xf32> to vector<8x32xf32>
    %348 = vector.extract_strided_slice %345 {offsets = [0, 32], sizes = [8, 32], strides = [1, 1]} : vector<8x128xf32> to vector<8x32xf32>
    %349 = vector.extract_strided_slice %346 {offsets = [0, 64], sizes = [8, 32], strides = [1, 1]} : vector<8x128xf32> to vector<8x32xf32>
    %350 = vector.extract_strided_slice %345 {offsets = [0, 96], sizes = [8, 32], strides = [1, 1]} : vector<8x128xf32> to vector<8x32xf32>
    %351 = arith.mulf %348, %282 : vector<8x32xf32>
    %352 = arith.mulf %347, %349 : vector<8x32xf32>
    %353 = arith.addf %351, %352 : vector<8x32xf32>
    %354 = math.tanh %353 : vector<8x32xf32>
    %355 = arith.mulf %350, %354 : vector<8x32xf32>
    %c0_147 = arith.constant 0 : index
    %c0_148 = arith.constant 0 : index
    %356 = vector.load %arg7[%c0_147, %c0_148] : memref<32x128xf32, #tpu.memory_space<vmem>>, vector<32x128xf32>
    %cst_149 = arith.constant dense<0.000000e+00> : vector<8x128xf32>
    %357 = tpu.matmul %331, %356, %cst_149 {dimension_numbers = #tpu.dot_dimension_numbers<[1], [0], [0], [1], [0, 0, 1, 1], [], []>} : vector<8x32xf32>, vector<32x128xf32>, vector<8x128xf32> -> vector<8x128xf32>
    %c0_150 = arith.constant 0 : index
    %c0_151 = arith.constant 0 : index
    %358 = vector.load %arg8[%c0_150, %c0_151] : memref<32x128xf32, #tpu.memory_space<vmem>>, vector<32x128xf32>
    %cst_152 = arith.constant dense<0.000000e+00> : vector<8x128xf32>
    %359 = tpu.matmul %307, %358, %cst_152 {dimension_numbers = #tpu.dot_dimension_numbers<[1], [0], [0], [1], [0, 0, 1, 1], [], []>} : vector<8x32xf32>, vector<32x128xf32>, vector<8x128xf32> -> vector<8x128xf32>
    %360 = arith.addf %357, %359 : vector<8x128xf32>
    %c0_153 = arith.constant 0 : index
    %c0_154 = arith.constant 0 : index
    %361 = vector.load %arg9[%c0_153, %c0_154] : memref<1x128xf32, #tpu.memory_space<vmem>>, vector<1x128xf32>
    %362 = vector.broadcast %361 : vector<1x128xf32> to vector<8x128xf32>
    %363 = arith.addf %360, %362 : vector<8x128xf32>
    %364 = arith.negf %363 : vector<8x128xf32>
    %365 = math.exp %364 : vector<8x128xf32>
    %cst_155 = arith.constant 1.000000e+00 : f32
    %366 = vector.broadcast %cst_155 : f32 to vector<8x128xf32>
    %367 = arith.addf %366, %365 : vector<8x128xf32>
    %368 = arith.divf %366, %367 : vector<8x128xf32>
    %369 = math.tanh %363 : vector<8x128xf32>
    %370 = vector.extract_strided_slice %368 {offsets = [0, 0], sizes = [8, 32], strides = [1, 1]} : vector<8x128xf32> to vector<8x32xf32>
    %371 = vector.extract_strided_slice %368 {offsets = [0, 32], sizes = [8, 32], strides = [1, 1]} : vector<8x128xf32> to vector<8x32xf32>
    %372 = vector.extract_strided_slice %369 {offsets = [0, 64], sizes = [8, 32], strides = [1, 1]} : vector<8x128xf32> to vector<8x32xf32>
    %373 = vector.extract_strided_slice %368 {offsets = [0, 96], sizes = [8, 32], strides = [1, 1]} : vector<8x128xf32> to vector<8x32xf32>
    %374 = arith.mulf %371, %305 : vector<8x32xf32>
    %375 = arith.mulf %370, %372 : vector<8x32xf32>
    %376 = arith.addf %374, %375 : vector<8x32xf32>
    %377 = math.tanh %376 : vector<8x32xf32>
    %378 = arith.mulf %373, %377 : vector<8x32xf32>
    %c0_156 = arith.constant 0 : index
    %c128 = arith.constant 128 : index
    %379 = vector.load %arg14[%c0_156, %c128] : memref<8x256xf32, #tpu.memory_space<vmem>>, vector<8x32xf32>
    tpu.vector_store %arg14[%c0_156, %c128], %378 {strides = array<i32>} : memref<8x256xf32, #tpu.memory_space<vmem>>, vector<8x32xf32>,
    %c0_157 = arith.constant 0 : index
    %c0_158 = arith.constant 0 : index
    %380 = vector.load %arg4[%c0_157, %c0_158] : memref<32x128xf32, #tpu.memory_space<vmem>>, vector<32x128xf32>
    %cst_159 = arith.constant dense<0.000000e+00> : vector<8x128xf32>
    %381 = tpu.matmul %355, %380, %cst_159 {dimension_numbers = #tpu.dot_dimension_numbers<[1], [0], [0], [1], [0, 0, 1, 1], [], []>} : vector<8x32xf32>, vector<32x128xf32>, vector<8x128xf32> -> vector<8x128xf32>
    %c0_160 = arith.constant 0 : index
    %c0_161 = arith.constant 0 : index
    %382 = vector.load %arg5[%c0_160, %c0_161] : memref<32x128xf32, #tpu.memory_space<vmem>>, vector<32x128xf32>
    %cst_162 = arith.constant dense<0.000000e+00> : vector<8x128xf32>
    %383 = tpu.matmul %331, %382, %cst_162 {dimension_numbers = #tpu.dot_dimension_numbers<[1], [0], [0], [1], [0, 0, 1, 1], [], []>} : vector<8x32xf32>, vector<32x128xf32>, vector<8x128xf32> -> vector<8x128xf32>
    %384 = arith.addf %381, %383 : vector<8x128xf32>
    %c0_163 = arith.constant 0 : index
    %c0_164 = arith.constant 0 : index
    %385 = vector.load %arg6[%c0_163, %c0_164] : memref<1x128xf32, #tpu.memory_space<vmem>>, vector<1x128xf32>
    %386 = vector.broadcast %385 : vector<1x128xf32> to vector<8x128xf32>
    %387 = arith.addf %384, %386 : vector<8x128xf32>
    %388 = arith.negf %387 : vector<8x128xf32>
    %389 = math.exp %388 : vector<8x128xf32>
    %cst_165 = arith.constant 1.000000e+00 : f32
    %390 = vector.broadcast %cst_165 : f32 to vector<8x128xf32>
    %391 = arith.addf %390, %389 : vector<8x128xf32>
    %392 = arith.divf %390, %391 : vector<8x128xf32>
    %393 = math.tanh %387 : vector<8x128xf32>
    %394 = vector.extract_strided_slice %392 {offsets = [0, 0], sizes = [8, 32], strides = [1, 1]} : vector<8x128xf32> to vector<8x32xf32>
    %395 = vector.extract_strided_slice %392 {offsets = [0, 32], sizes = [8, 32], strides = [1, 1]} : vector<8x128xf32> to vector<8x32xf32>
    %396 = vector.extract_strided_slice %393 {offsets = [0, 64], sizes = [8, 32], strides = [1, 1]} : vector<8x128xf32> to vector<8x32xf32>
    %397 = vector.extract_strided_slice %392 {offsets = [0, 96], sizes = [8, 32], strides = [1, 1]} : vector<8x128xf32> to vector<8x32xf32>
    %398 = arith.mulf %395, %329 : vector<8x32xf32>
    %399 = arith.mulf %394, %396 : vector<8x32xf32>
    %400 = arith.addf %398, %399 : vector<8x32xf32>
    %401 = math.tanh %400 : vector<8x32xf32>
    %402 = arith.mulf %397, %401 : vector<8x32xf32>
    %c48 = arith.constant 48 : index
    %c0_166 = arith.constant 0 : index
    %403 = vector.load %arg0[%c48, %c0_166] : memref<64x8xf32, #tpu.memory_space<vmem>>, vector<8x8xf32>
    %c0_167 = arith.constant 0 : index
    %c0_168 = arith.constant 0 : index
    %404 = vector.load %arg1[%c0_167, %c0_168] : memref<8x128xf32, #tpu.memory_space<vmem>>, vector<8x128xf32>
    %cst_169 = arith.constant dense<0.000000e+00> : vector<8x128xf32>
    %405 = tpu.matmul %403, %404, %cst_169 {dimension_numbers = #tpu.dot_dimension_numbers<[1], [0], [0], [1], [0, 0, 1, 1], [], []>} : vector<8x8xf32>, vector<8x128xf32>, vector<8x128xf32> -> vector<8x128xf32>
    %c0_170 = arith.constant 0 : index
    %c0_171 = arith.constant 0 : index
    %406 = vector.load %arg2[%c0_170, %c0_171] : memref<32x128xf32, #tpu.memory_space<vmem>>, vector<32x128xf32>
    %cst_172 = arith.constant dense<0.000000e+00> : vector<8x128xf32>
    %407 = tpu.matmul %355, %406, %cst_172 {dimension_numbers = #tpu.dot_dimension_numbers<[1], [0], [0], [1], [0, 0, 1, 1], [], []>} : vector<8x32xf32>, vector<32x128xf32>, vector<8x128xf32> -> vector<8x128xf32>
    %408 = arith.addf %405, %407 : vector<8x128xf32>
    %c0_173 = arith.constant 0 : index
    %c0_174 = arith.constant 0 : index
    %409 = vector.load %arg3[%c0_173, %c0_174] : memref<1x128xf32, #tpu.memory_space<vmem>>, vector<1x128xf32>
    %410 = vector.broadcast %409 : vector<1x128xf32> to vector<8x128xf32>
    %411 = arith.addf %408, %410 : vector<8x128xf32>
    %412 = arith.negf %411 : vector<8x128xf32>
    %413 = math.exp %412 : vector<8x128xf32>
    %cst_175 = arith.constant 1.000000e+00 : f32
    %414 = vector.broadcast %cst_175 : f32 to vector<8x128xf32>
    %415 = arith.addf %414, %413 : vector<8x128xf32>
    %416 = arith.divf %414, %415 : vector<8x128xf32>
    %417 = math.tanh %411 : vector<8x128xf32>
    %418 = vector.extract_strided_slice %416 {offsets = [0, 0], sizes = [8, 32], strides = [1, 1]} : vector<8x128xf32> to vector<8x32xf32>
    %419 = vector.extract_strided_slice %416 {offsets = [0, 32], sizes = [8, 32], strides = [1, 1]} : vector<8x128xf32> to vector<8x32xf32>
    %420 = vector.extract_strided_slice %417 {offsets = [0, 64], sizes = [8, 32], strides = [1, 1]} : vector<8x128xf32> to vector<8x32xf32>
    %421 = vector.extract_strided_slice %416 {offsets = [0, 96], sizes = [8, 32], strides = [1, 1]} : vector<8x128xf32> to vector<8x32xf32>
    %422 = arith.mulf %419, %353 : vector<8x32xf32>
    %423 = arith.mulf %418, %420 : vector<8x32xf32>
    %424 = arith.addf %422, %423 : vector<8x32xf32>
    %425 = math.tanh %424 : vector<8x32xf32>
    %426 = arith.mulf %421, %425 : vector<8x32xf32>
    %c0_176 = arith.constant 0 : index
    %c0_177 = arith.constant 0 : index
    %427 = vector.load %arg7[%c0_176, %c0_177] : memref<32x128xf32, #tpu.memory_space<vmem>>, vector<32x128xf32>
    %cst_178 = arith.constant dense<0.000000e+00> : vector<8x128xf32>
    %428 = tpu.matmul %402, %427, %cst_178 {dimension_numbers = #tpu.dot_dimension_numbers<[1], [0], [0], [1], [0, 0, 1, 1], [], []>} : vector<8x32xf32>, vector<32x128xf32>, vector<8x128xf32> -> vector<8x128xf32>
    %c0_179 = arith.constant 0 : index
    %c0_180 = arith.constant 0 : index
    %429 = vector.load %arg8[%c0_179, %c0_180] : memref<32x128xf32, #tpu.memory_space<vmem>>, vector<32x128xf32>
    %cst_181 = arith.constant dense<0.000000e+00> : vector<8x128xf32>
    %430 = tpu.matmul %378, %429, %cst_181 {dimension_numbers = #tpu.dot_dimension_numbers<[1], [0], [0], [1], [0, 0, 1, 1], [], []>} : vector<8x32xf32>, vector<32x128xf32>, vector<8x128xf32> -> vector<8x128xf32>
    %431 = arith.addf %428, %430 : vector<8x128xf32>
    %c0_182 = arith.constant 0 : index
    %c0_183 = arith.constant 0 : index
    %432 = vector.load %arg9[%c0_182, %c0_183] : memref<1x128xf32, #tpu.memory_space<vmem>>, vector<1x128xf32>
    %433 = vector.broadcast %432 : vector<1x128xf32> to vector<8x128xf32>
    %434 = arith.addf %431, %433 : vector<8x128xf32>
    %435 = arith.negf %434 : vector<8x128xf32>
    %436 = math.exp %435 : vector<8x128xf32>
    %cst_184 = arith.constant 1.000000e+00 : f32
    %437 = vector.broadcast %cst_184 : f32 to vector<8x128xf32>
    %438 = arith.addf %437, %436 : vector<8x128xf32>
    %439 = arith.divf %437, %438 : vector<8x128xf32>
    %440 = math.tanh %434 : vector<8x128xf32>
    %441 = vector.extract_strided_slice %439 {offsets = [0, 0], sizes = [8, 32], strides = [1, 1]} : vector<8x128xf32> to vector<8x32xf32>
    %442 = vector.extract_strided_slice %439 {offsets = [0, 32], sizes = [8, 32], strides = [1, 1]} : vector<8x128xf32> to vector<8x32xf32>
    %443 = vector.extract_strided_slice %440 {offsets = [0, 64], sizes = [8, 32], strides = [1, 1]} : vector<8x128xf32> to vector<8x32xf32>
    %444 = vector.extract_strided_slice %439 {offsets = [0, 96], sizes = [8, 32], strides = [1, 1]} : vector<8x128xf32> to vector<8x32xf32>
    %445 = arith.mulf %442, %376 : vector<8x32xf32>
    %446 = arith.mulf %441, %443 : vector<8x32xf32>
    %447 = arith.addf %445, %446 : vector<8x32xf32>
    %448 = math.tanh %447 : vector<8x32xf32>
    %449 = arith.mulf %444, %448 : vector<8x32xf32>
    %c0_185 = arith.constant 0 : index
    %c160 = arith.constant 160 : index
    %450 = vector.load %arg14[%c0_185, %c160] : memref<8x256xf32, #tpu.memory_space<vmem>>, vector<8x32xf32>
    tpu.vector_store %arg14[%c0_185, %c160], %449 {strides = array<i32>} : memref<8x256xf32, #tpu.memory_space<vmem>>, vector<8x32xf32>,
    %c0_186 = arith.constant 0 : index
    %c0_187 = arith.constant 0 : index
    %451 = vector.load %arg4[%c0_186, %c0_187] : memref<32x128xf32, #tpu.memory_space<vmem>>, vector<32x128xf32>
    %cst_188 = arith.constant dense<0.000000e+00> : vector<8x128xf32>
    %452 = tpu.matmul %426, %451, %cst_188 {dimension_numbers = #tpu.dot_dimension_numbers<[1], [0], [0], [1], [0, 0, 1, 1], [], []>} : vector<8x32xf32>, vector<32x128xf32>, vector<8x128xf32> -> vector<8x128xf32>
    %c0_189 = arith.constant 0 : index
    %c0_190 = arith.constant 0 : index
    %453 = vector.load %arg5[%c0_189, %c0_190] : memref<32x128xf32, #tpu.memory_space<vmem>>, vector<32x128xf32>
    %cst_191 = arith.constant dense<0.000000e+00> : vector<8x128xf32>
    %454 = tpu.matmul %402, %453, %cst_191 {dimension_numbers = #tpu.dot_dimension_numbers<[1], [0], [0], [1], [0, 0, 1, 1], [], []>} : vector<8x32xf32>, vector<32x128xf32>, vector<8x128xf32> -> vector<8x128xf32>
    %455 = arith.addf %452, %454 : vector<8x128xf32>
    %c0_192 = arith.constant 0 : index
    %c0_193 = arith.constant 0 : index
    %456 = vector.load %arg6[%c0_192, %c0_193] : memref<1x128xf32, #tpu.memory_space<vmem>>, vector<1x128xf32>
    %457 = vector.broadcast %456 : vector<1x128xf32> to vector<8x128xf32>
    %458 = arith.addf %455, %457 : vector<8x128xf32>
    %459 = arith.negf %458 : vector<8x128xf32>
    %460 = math.exp %459 : vector<8x128xf32>
    %cst_194 = arith.constant 1.000000e+00 : f32
    %461 = vector.broadcast %cst_194 : f32 to vector<8x128xf32>
    %462 = arith.addf %461, %460 : vector<8x128xf32>
    %463 = arith.divf %461, %462 : vector<8x128xf32>
    %464 = math.tanh %458 : vector<8x128xf32>
    %465 = vector.extract_strided_slice %463 {offsets = [0, 0], sizes = [8, 32], strides = [1, 1]} : vector<8x128xf32> to vector<8x32xf32>
    %466 = vector.extract_strided_slice %463 {offsets = [0, 32], sizes = [8, 32], strides = [1, 1]} : vector<8x128xf32> to vector<8x32xf32>
    %467 = vector.extract_strided_slice %464 {offsets = [0, 64], sizes = [8, 32], strides = [1, 1]} : vector<8x128xf32> to vector<8x32xf32>
    %468 = vector.extract_strided_slice %463 {offsets = [0, 96], sizes = [8, 32], strides = [1, 1]} : vector<8x128xf32> to vector<8x32xf32>
    %469 = arith.mulf %466, %400 : vector<8x32xf32>
    %470 = arith.mulf %465, %467 : vector<8x32xf32>
    %471 = arith.addf %469, %470 : vector<8x32xf32>
    %472 = math.tanh %471 : vector<8x32xf32>
    %473 = arith.mulf %468, %472 : vector<8x32xf32>
    %c56 = arith.constant 56 : index
    %c0_195 = arith.constant 0 : index
    %474 = vector.load %arg0[%c56, %c0_195] : memref<64x8xf32, #tpu.memory_space<vmem>>, vector<8x8xf32>
    %c0_196 = arith.constant 0 : index
    %c0_197 = arith.constant 0 : index
    %475 = vector.load %arg1[%c0_196, %c0_197] : memref<8x128xf32, #tpu.memory_space<vmem>>, vector<8x128xf32>
    %cst_198 = arith.constant dense<0.000000e+00> : vector<8x128xf32>
    %476 = tpu.matmul %474, %475, %cst_198 {dimension_numbers = #tpu.dot_dimension_numbers<[1], [0], [0], [1], [0, 0, 1, 1], [], []>} : vector<8x8xf32>, vector<8x128xf32>, vector<8x128xf32> -> vector<8x128xf32>
    %c0_199 = arith.constant 0 : index
    %c0_200 = arith.constant 0 : index
    %477 = vector.load %arg2[%c0_199, %c0_200] : memref<32x128xf32, #tpu.memory_space<vmem>>, vector<32x128xf32>
    %cst_201 = arith.constant dense<0.000000e+00> : vector<8x128xf32>
    %478 = tpu.matmul %426, %477, %cst_201 {dimension_numbers = #tpu.dot_dimension_numbers<[1], [0], [0], [1], [0, 0, 1, 1], [], []>} : vector<8x32xf32>, vector<32x128xf32>, vector<8x128xf32> -> vector<8x128xf32>
    %479 = arith.addf %476, %478 : vector<8x128xf32>
    %c0_202 = arith.constant 0 : index
    %c0_203 = arith.constant 0 : index
    %480 = vector.load %arg3[%c0_202, %c0_203] : memref<1x128xf32, #tpu.memory_space<vmem>>, vector<1x128xf32>
    %481 = vector.broadcast %480 : vector<1x128xf32> to vector<8x128xf32>
    %482 = arith.addf %479, %481 : vector<8x128xf32>
    %483 = arith.negf %482 : vector<8x128xf32>
    %484 = math.exp %483 : vector<8x128xf32>
    %cst_204 = arith.constant 1.000000e+00 : f32
    %485 = vector.broadcast %cst_204 : f32 to vector<8x128xf32>
    %486 = arith.addf %485, %484 : vector<8x128xf32>
    %487 = arith.divf %485, %486 : vector<8x128xf32>
    %488 = math.tanh %482 : vector<8x128xf32>
    %489 = vector.extract_strided_slice %487 {offsets = [0, 0], sizes = [8, 32], strides = [1, 1]} : vector<8x128xf32> to vector<8x32xf32>
    %490 = vector.extract_strided_slice %487 {offsets = [0, 32], sizes = [8, 32], strides = [1, 1]} : vector<8x128xf32> to vector<8x32xf32>
    %491 = vector.extract_strided_slice %488 {offsets = [0, 64], sizes = [8, 32], strides = [1, 1]} : vector<8x128xf32> to vector<8x32xf32>
    %492 = vector.extract_strided_slice %487 {offsets = [0, 96], sizes = [8, 32], strides = [1, 1]} : vector<8x128xf32> to vector<8x32xf32>
    %493 = arith.mulf %490, %424 : vector<8x32xf32>
    %494 = arith.mulf %489, %491 : vector<8x32xf32>
    %495 = arith.addf %493, %494 : vector<8x32xf32>
    %496 = math.tanh %495 : vector<8x32xf32>
    %497 = arith.mulf %492, %496 : vector<8x32xf32>
    %c0_205 = arith.constant 0 : index
    %c0_206 = arith.constant 0 : index
    %498 = vector.load %arg7[%c0_205, %c0_206] : memref<32x128xf32, #tpu.memory_space<vmem>>, vector<32x128xf32>
    %cst_207 = arith.constant dense<0.000000e+00> : vector<8x128xf32>
    %499 = tpu.matmul %473, %498, %cst_207 {dimension_numbers = #tpu.dot_dimension_numbers<[1], [0], [0], [1], [0, 0, 1, 1], [], []>} : vector<8x32xf32>, vector<32x128xf32>, vector<8x128xf32> -> vector<8x128xf32>
    %c0_208 = arith.constant 0 : index
    %c0_209 = arith.constant 0 : index
    %500 = vector.load %arg8[%c0_208, %c0_209] : memref<32x128xf32, #tpu.memory_space<vmem>>, vector<32x128xf32>
    %cst_210 = arith.constant dense<0.000000e+00> : vector<8x128xf32>
    %501 = tpu.matmul %449, %500, %cst_210 {dimension_numbers = #tpu.dot_dimension_numbers<[1], [0], [0], [1], [0, 0, 1, 1], [], []>} : vector<8x32xf32>, vector<32x128xf32>, vector<8x128xf32> -> vector<8x128xf32>
    %502 = arith.addf %499, %501 : vector<8x128xf32>
    %c0_211 = arith.constant 0 : index
    %c0_212 = arith.constant 0 : index
    %503 = vector.load %arg9[%c0_211, %c0_212] : memref<1x128xf32, #tpu.memory_space<vmem>>, vector<1x128xf32>
    %504 = vector.broadcast %503 : vector<1x128xf32> to vector<8x128xf32>
    %505 = arith.addf %502, %504 : vector<8x128xf32>
    %506 = arith.negf %505 : vector<8x128xf32>
    %507 = math.exp %506 : vector<8x128xf32>
    %cst_213 = arith.constant 1.000000e+00 : f32
    %508 = vector.broadcast %cst_213 : f32 to vector<8x128xf32>
    %509 = arith.addf %508, %507 : vector<8x128xf32>
    %510 = arith.divf %508, %509 : vector<8x128xf32>
    %511 = math.tanh %505 : vector<8x128xf32>
    %512 = vector.extract_strided_slice %510 {offsets = [0, 0], sizes = [8, 32], strides = [1, 1]} : vector<8x128xf32> to vector<8x32xf32>
    %513 = vector.extract_strided_slice %510 {offsets = [0, 32], sizes = [8, 32], strides = [1, 1]} : vector<8x128xf32> to vector<8x32xf32>
    %514 = vector.extract_strided_slice %511 {offsets = [0, 64], sizes = [8, 32], strides = [1, 1]} : vector<8x128xf32> to vector<8x32xf32>
    %515 = vector.extract_strided_slice %510 {offsets = [0, 96], sizes = [8, 32], strides = [1, 1]} : vector<8x128xf32> to vector<8x32xf32>
    %516 = arith.mulf %513, %447 : vector<8x32xf32>
    %517 = arith.mulf %512, %514 : vector<8x32xf32>
    %518 = arith.addf %516, %517 : vector<8x32xf32>
    %519 = math.tanh %518 : vector<8x32xf32>
    %520 = arith.mulf %515, %519 : vector<8x32xf32>
    %c0_214 = arith.constant 0 : index
    %c192 = arith.constant 192 : index
    %521 = vector.load %arg14[%c0_214, %c192] : memref<8x256xf32, #tpu.memory_space<vmem>>, vector<8x32xf32>
    tpu.vector_store %arg14[%c0_214, %c192], %520 {strides = array<i32>} : memref<8x256xf32, #tpu.memory_space<vmem>>, vector<8x32xf32>,
    %c0_215 = arith.constant 0 : index
    %c0_216 = arith.constant 0 : index
    %522 = vector.load %arg4[%c0_215, %c0_216] : memref<32x128xf32, #tpu.memory_space<vmem>>, vector<32x128xf32>
    %cst_217 = arith.constant dense<0.000000e+00> : vector<8x128xf32>
    %523 = tpu.matmul %497, %522, %cst_217 {dimension_numbers = #tpu.dot_dimension_numbers<[1], [0], [0], [1], [0, 0, 1, 1], [], []>} : vector<8x32xf32>, vector<32x128xf32>, vector<8x128xf32> -> vector<8x128xf32>
    %c0_218 = arith.constant 0 : index
    %c0_219 = arith.constant 0 : index
    %524 = vector.load %arg5[%c0_218, %c0_219] : memref<32x128xf32, #tpu.memory_space<vmem>>, vector<32x128xf32>
    %cst_220 = arith.constant dense<0.000000e+00> : vector<8x128xf32>
    %525 = tpu.matmul %473, %524, %cst_220 {dimension_numbers = #tpu.dot_dimension_numbers<[1], [0], [0], [1], [0, 0, 1, 1], [], []>} : vector<8x32xf32>, vector<32x128xf32>, vector<8x128xf32> -> vector<8x128xf32>
    %526 = arith.addf %523, %525 : vector<8x128xf32>
    %c0_221 = arith.constant 0 : index
    %c0_222 = arith.constant 0 : index
    %527 = vector.load %arg6[%c0_221, %c0_222] : memref<1x128xf32, #tpu.memory_space<vmem>>, vector<1x128xf32>
    %528 = vector.broadcast %527 : vector<1x128xf32> to vector<8x128xf32>
    %529 = arith.addf %526, %528 : vector<8x128xf32>
    %530 = arith.negf %529 : vector<8x128xf32>
    %531 = math.exp %530 : vector<8x128xf32>
    %cst_223 = arith.constant 1.000000e+00 : f32
    %532 = vector.broadcast %cst_223 : f32 to vector<8x128xf32>
    %533 = arith.addf %532, %531 : vector<8x128xf32>
    %534 = arith.divf %532, %533 : vector<8x128xf32>
    %535 = math.tanh %529 : vector<8x128xf32>
    %536 = vector.extract_strided_slice %534 {offsets = [0, 0], sizes = [8, 32], strides = [1, 1]} : vector<8x128xf32> to vector<8x32xf32>
    %537 = vector.extract_strided_slice %534 {offsets = [0, 32], sizes = [8, 32], strides = [1, 1]} : vector<8x128xf32> to vector<8x32xf32>
    %538 = vector.extract_strided_slice %535 {offsets = [0, 64], sizes = [8, 32], strides = [1, 1]} : vector<8x128xf32> to vector<8x32xf32>
    %539 = vector.extract_strided_slice %534 {offsets = [0, 96], sizes = [8, 32], strides = [1, 1]} : vector<8x128xf32> to vector<8x32xf32>
    %540 = arith.mulf %537, %471 : vector<8x32xf32>
    %541 = arith.mulf %536, %538 : vector<8x32xf32>
    %542 = arith.addf %540, %541 : vector<8x32xf32>
    %543 = math.tanh %542 : vector<8x32xf32>
    %544 = arith.mulf %539, %543 : vector<8x32xf32>
    %c0_224 = arith.constant 0 : index
    %c0_225 = arith.constant 0 : index
    %545 = vector.load %arg7[%c0_224, %c0_225] : memref<32x128xf32, #tpu.memory_space<vmem>>, vector<32x128xf32>
    %cst_226 = arith.constant dense<0.000000e+00> : vector<8x128xf32>
    %546 = tpu.matmul %544, %545, %cst_226 {dimension_numbers = #tpu.dot_dimension_numbers<[1], [0], [0], [1], [0, 0, 1, 1], [], []>} : vector<8x32xf32>, vector<32x128xf32>, vector<8x128xf32> -> vector<8x128xf32>
    %c0_227 = arith.constant 0 : index
    %c0_228 = arith.constant 0 : index
    %547 = vector.load %arg8[%c0_227, %c0_228] : memref<32x128xf32, #tpu.memory_space<vmem>>, vector<32x128xf32>
    %cst_229 = arith.constant dense<0.000000e+00> : vector<8x128xf32>
    %548 = tpu.matmul %520, %547, %cst_229 {dimension_numbers = #tpu.dot_dimension_numbers<[1], [0], [0], [1], [0, 0, 1, 1], [], []>} : vector<8x32xf32>, vector<32x128xf32>, vector<8x128xf32> -> vector<8x128xf32>
    %549 = arith.addf %546, %548 : vector<8x128xf32>
    %c0_230 = arith.constant 0 : index
    %c0_231 = arith.constant 0 : index
    %550 = vector.load %arg9[%c0_230, %c0_231] : memref<1x128xf32, #tpu.memory_space<vmem>>, vector<1x128xf32>
    %551 = vector.broadcast %550 : vector<1x128xf32> to vector<8x128xf32>
    %552 = arith.addf %549, %551 : vector<8x128xf32>
    %553 = arith.negf %552 : vector<8x128xf32>
    %554 = math.exp %553 : vector<8x128xf32>
    %cst_232 = arith.constant 1.000000e+00 : f32
    %555 = vector.broadcast %cst_232 : f32 to vector<8x128xf32>
    %556 = arith.addf %555, %554 : vector<8x128xf32>
    %557 = arith.divf %555, %556 : vector<8x128xf32>
    %558 = math.tanh %552 : vector<8x128xf32>
    %559 = vector.extract_strided_slice %557 {offsets = [0, 0], sizes = [8, 32], strides = [1, 1]} : vector<8x128xf32> to vector<8x32xf32>
    %560 = vector.extract_strided_slice %557 {offsets = [0, 32], sizes = [8, 32], strides = [1, 1]} : vector<8x128xf32> to vector<8x32xf32>
    %561 = vector.extract_strided_slice %558 {offsets = [0, 64], sizes = [8, 32], strides = [1, 1]} : vector<8x128xf32> to vector<8x32xf32>
    %562 = vector.extract_strided_slice %557 {offsets = [0, 96], sizes = [8, 32], strides = [1, 1]} : vector<8x128xf32> to vector<8x32xf32>
    %563 = arith.mulf %560, %518 : vector<8x32xf32>
    %564 = arith.mulf %559, %561 : vector<8x32xf32>
    %565 = arith.addf %563, %564 : vector<8x32xf32>
    %566 = math.tanh %565 : vector<8x32xf32>
    %567 = arith.mulf %562, %566 : vector<8x32xf32>
    %c0_233 = arith.constant 0 : index
    %c224 = arith.constant 224 : index
    %568 = vector.load %arg14[%c0_233, %c224] : memref<8x256xf32, #tpu.memory_space<vmem>>, vector<8x32xf32>
    tpu.vector_store %arg14[%c0_233, %c224], %567 {strides = array<i32>} : memref<8x256xf32, #tpu.memory_space<vmem>>, vector<8x32xf32>,
    %c0_234 = arith.constant 0 : index
    %c0_235 = arith.constant 0 : index
    %569 = vector.load %arg14[%c0_234, %c0_235] : memref<8x256xf32, #tpu.memory_space<vmem>>, vector<8x256xf32>
    %c0_236 = arith.constant 0 : index
    %c0_237 = arith.constant 0 : index
    %570 = vector.load %arg10[%c0_236, %c0_237] : memref<256x8xf32, #tpu.memory_space<vmem>>, vector<256x8xf32>
    %cst_238 = arith.constant dense<0.000000e+00> : vector<8x8xf32>
    %571 = tpu.matmul %569, %570, %cst_238 {dimension_numbers = #tpu.dot_dimension_numbers<[1], [0], [0], [1], [0, 0, 1, 1], [], []>} : vector<8x256xf32>, vector<256x8xf32>, vector<8x8xf32> -> vector<8x8xf32>
    %cst_239 = arith.constant dense<0xFF800000> : vector<8xf32>
    %572 = vector.multi_reduction <maximumf>, %571, %cst_239 [1] : vector<8x8xf32> to vector<8xf32>
    %573 = vector.shape_cast %572 : vector<8xf32> to vector<8x1xf32>
    %574 = vector.broadcast %573 : vector<8x1xf32> to vector<8x8xf32>
    %575 = arith.subf %571, %574 : vector<8x8xf32>
    %576 = math.exp %575 : vector<8x8xf32>
    %cst_240 = arith.constant dense<0.000000e+00> : vector<8xf32>
    %577 = vector.multi_reduction <add>, %576, %cst_240 [1] : vector<8x8xf32> to vector<8xf32>
    %578 = vector.shape_cast %577 : vector<8xf32> to vector<8x1xf32>
    %579 = tpu.reciprocal %578 {approx = true} : vector<8x1xf32> -> vector<8x1xf32>
    %580 = arith.mulf %578, %579 : vector<8x1xf32>
    %cst_241 = arith.constant 2.000000e+00 : f32
    %581 = vector.broadcast %cst_241 : f32 to vector<8x1xf32>
    %582 = arith.subf %581, %580 : vector<8x1xf32>
    %583 = arith.mulf %579, %582 : vector<8x1xf32>
    %584 = vector.broadcast %583 : vector<8x1xf32> to vector<8x8xf32>
    %585 = arith.mulf %576, %584 : vector<8x8xf32>
    %586 = vector.extract_strided_slice %585 {offsets = [0, 0], sizes = [8, 1], strides = [1, 1]} : vector<8x8xf32> to vector<8x1xf32>
    %587 = vector.extract_strided_slice %569 {offsets = [0, 0], sizes = [8, 32], strides = [1, 1]} : vector<8x256xf32> to vector<8x32xf32>
    %588 = vector.broadcast %586 : vector<8x1xf32> to vector<8x32xf32>
    %589 = arith.mulf %588, %587 : vector<8x32xf32>
    %590 = vector.extract_strided_slice %585 {offsets = [0, 1], sizes = [8, 1], strides = [1, 1]} : vector<8x8xf32> to vector<8x1xf32>
    %591 = vector.extract_strided_slice %569 {offsets = [0, 32], sizes = [8, 32], strides = [1, 1]} : vector<8x256xf32> to vector<8x32xf32>
    %592 = vector.broadcast %590 : vector<8x1xf32> to vector<8x32xf32>
    %593 = arith.mulf %592, %591 : vector<8x32xf32>
    %594 = arith.addf %589, %593 : vector<8x32xf32>
    %595 = vector.extract_strided_slice %585 {offsets = [0, 2], sizes = [8, 1], strides = [1, 1]} : vector<8x8xf32> to vector<8x1xf32>
    %596 = vector.extract_strided_slice %569 {offsets = [0, 64], sizes = [8, 32], strides = [1, 1]} : vector<8x256xf32> to vector<8x32xf32>
    %597 = vector.broadcast %595 : vector<8x1xf32> to vector<8x32xf32>
    %598 = arith.mulf %597, %596 : vector<8x32xf32>
    %599 = arith.addf %594, %598 : vector<8x32xf32>
    %600 = vector.extract_strided_slice %585 {offsets = [0, 3], sizes = [8, 1], strides = [1, 1]} : vector<8x8xf32> to vector<8x1xf32>
    %601 = vector.extract_strided_slice %569 {offsets = [0, 96], sizes = [8, 32], strides = [1, 1]} : vector<8x256xf32> to vector<8x32xf32>
    %602 = vector.broadcast %600 : vector<8x1xf32> to vector<8x32xf32>
    %603 = arith.mulf %602, %601 : vector<8x32xf32>
    %604 = arith.addf %599, %603 : vector<8x32xf32>
    %605 = vector.extract_strided_slice %585 {offsets = [0, 4], sizes = [8, 1], strides = [1, 1]} : vector<8x8xf32> to vector<8x1xf32>
    %606 = vector.extract_strided_slice %569 {offsets = [0, 128], sizes = [8, 32], strides = [1, 1]} : vector<8x256xf32> to vector<8x32xf32>
    %607 = vector.broadcast %605 : vector<8x1xf32> to vector<8x32xf32>
    %608 = arith.mulf %607, %606 : vector<8x32xf32>
    %609 = arith.addf %604, %608 : vector<8x32xf32>
    %610 = vector.extract_strided_slice %585 {offsets = [0, 5], sizes = [8, 1], strides = [1, 1]} : vector<8x8xf32> to vector<8x1xf32>
    %611 = vector.extract_strided_slice %569 {offsets = [0, 160], sizes = [8, 32], strides = [1, 1]} : vector<8x256xf32> to vector<8x32xf32>
    %612 = vector.broadcast %610 : vector<8x1xf32> to vector<8x32xf32>
    %613 = arith.mulf %612, %611 : vector<8x32xf32>
    %614 = arith.addf %609, %613 : vector<8x32xf32>
    %615 = vector.extract_strided_slice %585 {offsets = [0, 6], sizes = [8, 1], strides = [1, 1]} : vector<8x8xf32> to vector<8x1xf32>
    %616 = vector.extract_strided_slice %569 {offsets = [0, 192], sizes = [8, 32], strides = [1, 1]} : vector<8x256xf32> to vector<8x32xf32>
    %617 = vector.broadcast %615 : vector<8x1xf32> to vector<8x32xf32>
    %618 = arith.mulf %617, %616 : vector<8x32xf32>
    %619 = arith.addf %614, %618 : vector<8x32xf32>
    %620 = vector.extract_strided_slice %585 {offsets = [0, 7], sizes = [8, 1], strides = [1, 1]} : vector<8x8xf32> to vector<8x1xf32>
    %621 = vector.extract_strided_slice %569 {offsets = [0, 224], sizes = [8, 32], strides = [1, 1]} : vector<8x256xf32> to vector<8x32xf32>
    %622 = vector.broadcast %620 : vector<8x1xf32> to vector<8x32xf32>
    %623 = arith.mulf %622, %621 : vector<8x32xf32>
    %624 = arith.addf %619, %623 : vector<8x32xf32>
    %c0_242 = arith.constant 0 : index
    %c0_243 = arith.constant 0 : index
    %625 = vector.load %arg11[%c0_242, %c0_243] : memref<32x128xf32, #tpu.memory_space<vmem>>, vector<32x128xf32>
    %cst_244 = arith.constant dense<0.000000e+00> : vector<8x128xf32>
    %626 = tpu.matmul %624, %625, %cst_244 {dimension_numbers = #tpu.dot_dimension_numbers<[1], [0], [0], [1], [0, 0, 1, 1], [], []>} : vector<8x32xf32>, vector<32x128xf32>, vector<8x128xf32> -> vector<8x128xf32>
    %c0_245 = arith.constant 0 : index
    %c0_246 = arith.constant 0 : index
    %627 = vector.load %arg12[%c0_245, %c0_246] : memref<1x128xf32, #tpu.memory_space<vmem>>, vector<1x128xf32>
    %628 = vector.broadcast %627 : vector<1x128xf32> to vector<8x128xf32>
    %629 = arith.addf %626, %628 : vector<8x128xf32>
    %c0_247 = arith.constant 0 : index
    %c0_248 = arith.constant 0 : index
    %630 = vector.load %arg13[%c0_247, %c0_248] : memref<8x128xf32, #tpu.memory_space<vmem>>, vector<8x128xf32>
    tpu.vector_store %arg13[%c0_247, %c0_248], %629 {strides = array<i32>} : memref<8x128xf32, #tpu.memory_space<vmem>>, vector<8x128xf32>,
    return
  }
}

</mosaic_0001>

<llo_original>
// kernel: weather_network_forward.1
$region0: #{weather_network_forward.1}
  #allocation0 [shape = 'u32[]', space=smem, size = 0x4, offset = 0x4, fixed_abs, tag = 'smem constant byte address 0x4 - core index']
  #allocation1 [shape = 'u32[144,128]{1,0:T(1,128)}', space=vmem, size = 0x12000, scoped, tag = 'internal scratch']
  #allocation2 [shape = 'f32[8,256]{1,0:T(8,128)}', space=vmem, size = 0x2000, scoped, tag = 'scratch operand']
  %s0 = inlined_call_operand.vmem [shape: f32[64,8], index: 0, kind: input, shape index: {}]
  %s1 = inlined_call_operand.vmem [shape: f32[8,128], index: 1, kind: input, shape index: {}]
  %s2 = inlined_call_operand.vmem [shape: f32[32,128], index: 2, kind: input, shape index: {}]
  %s3 = inlined_call_operand.vmem [shape: f32[1,128], index: 3, kind: input, shape index: {}]
  %s4 = inlined_call_operand.vmem [shape: f32[32,128], index: 4, kind: input, shape index: {}]
  %s5 = inlined_call_operand.vmem [shape: f32[32,128], index: 5, kind: input, shape index: {}]
  %s6 = inlined_call_operand.vmem [shape: f32[1,128], index: 6, kind: input, shape index: {}]
  %s7 = inlined_call_operand.vmem [shape: f32[32,128], index: 7, kind: input, shape index: {}]
  %s8 = inlined_call_operand.vmem [shape: f32[32,128], index: 8, kind: input, shape index: {}]
  %s9 = inlined_call_operand.vmem [shape: f32[1,128], index: 9, kind: input, shape index: {}]
  %s10 = inlined_call_operand.vmem [shape: f32[256,8], index: 10, kind: input, shape index: {}]
  %s11 = inlined_call_operand.vmem [shape: f32[32,128], index: 11, kind: input, shape index: {}]
  %s12 = inlined_call_operand.vmem [shape: f32[1,128], index: 12, kind: input, shape index: {}]
  %s13 = inlined_call_operand.vmem [shape: f32[8,128], index: 13, kind: output, shape index: {}]
  %s14 = sld [smem:[#allocation0]]
  $region62: #{weather_network_forward.1} parent=0
    _
  %s16 = ssub.s32 1, %s14
  %s17 = scalar_select 0, %s16, %s14
  // Predicated region
  $region2: #{weather_network_forward.1} parent=0 // pred_check
    _
  $region3: #{weather_network_forward.1} parent=0 // pred_check_branch
    %19 = sbr.rel (0) target = $region5
  $region4: #{weather_network_forward.1} parent=0 // pred_region
    _
  $region5: #{weather_network_forward.1} parent=0 // pred_fallthru
    _
  // Predicated region
  $region6: #{weather_network_forward.1} parent=0 // pred_check
    _
  $region7: #{weather_network_forward.1} parent=0 // pred_check_branch
    %21 = sbr.rel (0) target = $region9
  $region8: #{weather_network_forward.1} parent=0 // pred_region
    _
  $region9: #{weather_network_forward.1} parent=0 // pred_fallthru
    _
  // Predicated region
  $region10: #{weather_network_forward.1} parent=0 // pred_check
    _
  $region11: #{weather_network_forward.1} parent=0 // pred_check_branch
    %23 = sbr.rel (0) target = $region13
  $region12: #{weather_network_forward.1} parent=0 // pred_region
    _
  $region13: #{weather_network_forward.1} parent=0 // pred_fallthru
    _
  // Predicated region
  $region14: #{weather_network_forward.1} parent=0 // pred_check
    _
  $region15: #{weather_network_forward.1} parent=0 // pred_check_branch
    %25 = sbr.rel (0) target = $region17
  $region16: #{weather_network_forward.1} parent=0 // pred_region
    _
  $region17: #{weather_network_forward.1} parent=0 // pred_fallthru
    _
  // Predicated region
  $region18: #{weather_network_forward.1} parent=0 // pred_check
    _
  $region19: #{weather_network_forward.1} parent=0 // pred_check_branch
    %27 = sbr.rel (0) target = $region21
  $region20: #{weather_network_forward.1} parent=0 // pred_region
    _
  $region21: #{weather_network_forward.1} parent=0 // pred_fallthru
    _
  // Predicated region
  $region22: #{weather_network_forward.1} parent=0 // pred_check
    _
  $region23: #{weather_network_forward.1} parent=0 // pred_check_branch
    %29 = sbr.rel (0) target = $region25
  $region24: #{weather_network_forward.1} parent=0 // pred_region
    _
  $region25: #{weather_network_forward.1} parent=0 // pred_fallthru
    _
  // Predicated region
  $region26: #{weather_network_forward.1} parent=0 // pred_check
    _
  $region27: #{weather_network_forward.1} parent=0 // pred_check_branch
    %31 = sbr.rel (0) target = $region29
  $region28: #{weather_network_forward.1} parent=0 // pred_region
    _
  $region29: #{weather_network_forward.1} parent=0 // pred_fallthru
    _
  // Predicated region
  $region30: #{weather_network_forward.1} parent=0 // pred_check
    _
  $region31: #{weather_network_forward.1} parent=0 // pred_check_branch
    %33 = sbr.rel (0) target = $region33
  $region32: #{weather_network_forward.1} parent=0 // pred_region
    _
  $region33: #{weather_network_forward.1} parent=0 // pred_fallthru
    _
  // Predicated region
  $region34: #{weather_network_forward.1} parent=0 // pred_check
    _
  $region35: #{weather_network_forward.1} parent=0 // pred_check_branch
    %35 = sbr.rel (0) target = $region37
  $region36: #{weather_network_forward.1} parent=0 // pred_region
    _
  $region37: #{weather_network_forward.1} parent=0 // pred_fallthru
    _
  // Predicated region
  $region38: #{weather_network_forward.1} parent=0 // pred_check
    _
  $region39: #{weather_network_forward.1} parent=0 // pred_check_branch
    %37 = sbr.rel (0) target = $region41
  $region40: #{weather_network_forward.1} parent=0 // pred_region
    _
  $region41: #{weather_network_forward.1} parent=0 // pred_fallthru
    _
  // Predicated region
  $region42: #{weather_network_forward.1} parent=0 // pred_check
    _
  $region43: #{weather_network_forward.1} parent=0 // pred_check_branch
    %39 = sbr.rel (0) target = $region45
  $region44: #{weather_network_forward.1} parent=0 // pred_region
    _
  $region45: #{weather_network_forward.1} parent=0 // pred_fallthru
    _
  // Predicated region
  $region46: #{weather_network_forward.1} parent=0 // pred_check
    _
  $region47: #{weather_network_forward.1} parent=0 // pred_check_branch
    %41 = sbr.rel (0) target = $region49
  $region48: #{weather_network_forward.1} parent=0 // pred_region
    _
  $region49: #{weather_network_forward.1} parent=0 // pred_fallthru
    _
  // Predicated region
  $region50: #{weather_network_forward.1} parent=0 // pred_check
    _
  $region51: #{weather_network_forward.1} parent=0 // pred_check_branch
    %43 = sbr.rel (0) target = $region53
  $region52: #{weather_network_forward.1} parent=0 // pred_region
    _
  $region53: #{weather_network_forward.1} parent=0 // pred_fallthru
    _
  %v44 = vld [vmem:[%s0] sm:$0xff]
  %v45 = vld [vmem:[%s1] sm:$0xff]
  %v46 = vld [vmem:[%s2] sm:$0xff]
  %v47 = vld [vmem:[%s2 + $0x8] sm:$0xff]
  %v48 = vld [vmem:[%s2 + $0x10] sm:$0xff]
  %v49 = vld [vmem:[%s2 + $0x18] sm:$0xff]
  %vm50 = vcmask 261120
  %v52 = vsel %vm50, 0.0, 0
  %54 = vmatprep.subr.mxu0 0.0
  %55 = vmatpush1.msra.mxu0 %v46
  %56 = vmatprep.subr.mxu0 0.0
  %57 = vmatpush1.msra.mxu0 %v47
  %58 = vmatprep.subr.mxu0 0.0
  %59 = vmatpush1.msra.mxu0 %v48
  %60 = vmatprep.subr.mxu0 0.0
  %61 = vmatpush1.msra.mxu0 %v49
  %62 = vmatprep.subr.mxu0 0.0
  %63 = vmatpush1.msra.mxu0 0.0
  %64 = vmatprep.subr.mxu0 0.0
  %65 = vmatpush1.msra.mxu0 0.0
  %66 = vmatprep.subr.mxu0 0.0
  %67 = vmatpush1.msra.mxu0 0.0
  %68 = vmatprep.subr.mxu0 0.0
  %69 = vmatpush1.msra.mxu0 0.0
  %70 = vmatprep.subr.mxu0 0.0
  %71 = vmatpush1.msra.mxu0 0.0
  %72 = vmatprep.subr.mxu0 0.0
  %73 = vmatpush1.msra.mxu0 0.0
  %74 = vmatprep.subr.mxu0 0.0
  %75 = vmatpush1.msra.mxu0 0.0
  %76 = vmatprep.subr.mxu0 0.0
  %77 = vmatpush1.msra.mxu0 0.0
  %78 = vmatprep.subr.mxu0 0.0
  %79 = vmatpush1.msra.mxu0 0.0
  %80 = vmatprep.subr.mxu0 0.0
  %81 = vmatpush1.msra.mxu0 0.0
  %82 = vmatprep.subr.mxu0 0.0
  %83 = vmatpush1.msra.mxu0 0.0
  %84 = vmatprep.subr.mxu0 0.0
  %85 = vmatpush1.msra.mxu0 0.0
  %86 = vmatprep.subr.mxu0 0.0
  %87 = vmatpush1.msra.mxu0 0.0
  %88 = vmatprep.subr.mxu0 0.0
  %89 = vmatpush1.msra.mxu0 0.0
  %90 = vmatprep.subr.mxu0 0.0
  %91 = vmatpush1.msra.mxu0 0.0
  %92 = vmatprep.subr.mxu0 0.0
  %93 = vmatpush1.msra.mxu0 0.0
  %94 = vmatprep.subr.mxu0 0.0
  %95 = vmatpush1.msra.mxu0 0.0
  %96 = vmatprep.subr.mxu0 0.0
  %97 = vmatpush1.msra.mxu0 0.0
  %98 = vmatprep.subr.mxu0 0.0
  %99 = vmatpush1.msra.mxu0 0.0
  %100 = vmatprep.subr.mxu0 0.0
  %101 = vmatpush1.msra.mxu0 0.0
  %102 = vmatprep.subr.mxu0 0.0
  %103 = vmatpush1.msra.mxu0 0.0
  %104 = vmatprep.subr.mxu0 0.0
  %105 = vmatpush1.msra.mxu0 0.0
  %106 = vmatprep.subr.mxu0 0.0
  %107 = vmatpush1.msra.mxu0 0.0
  %108 = vmatprep.subr.mxu0 0.0
  %109 = vmatpush1.msra.mxu0 0.0
  %110 = vmatprep.subr.mxu0 0.0
  %111 = vmatpush1.msra.mxu0 0.0
  %112 = vmatprep.subr.mxu0 0.0
  %113 = vmatpush1.msra.mxu0 0.0
  %114 = vmatprep.subr.mxu0 0.0
  %115 = vmatpush1.msra.mxu0 0.0
  %116 = vmatprep.subr.mxu0 0.0
  %117 = vmatpush1.msra.mxu0 0.0
  %118 = vmatprep.mubr.f32.mxu0 0.0
  %119 = vmatmul.mubr.f32.gmra.mrb[0].mxu0 %v52
  %v120 = vpop.f32.mrb[0].mxu0
  %v121 = vadd.f32 0.0, %v120
  %v122 = vpop.f32.mrb[0].mxu0
  %123 = vdwg.mxu0
  %vm124 = vcmask 64512
  %v126 = vsel %vm124, %v44, 0
  %128 = vmatprep.subr.mxu0 0.0
  %129 = vmatpush1.msra.mxu0 %v45
  %130 = vmatprep.subr.mxu0 0.0
  %131 = vmatpush1.msra.mxu0 0.0
  %132 = vmatprep.subr.mxu0 0.0
  %133 = vmatpush1.msra.mxu0 0.0
  %134 = vmatprep.subr.mxu0 0.0
  %135 = vmatpush1.msra.mxu0 0.0
  %136 = vmatprep.subr.mxu0 0.0
  %137 = vmatpush1.msra.mxu0 0.0
  %138 = vmatprep.subr.mxu0 0.0
  %139 = vmatpush1.msra.mxu0 0.0
  %140 = vmatprep.subr.mxu0 0.0
  %141 = vmatpush1.msra.mxu0 0.0
  %142 = vmatprep.subr.mxu0 0.0
  %143 = vmatpush1.msra.mxu0 0.0
  %144 = vmatprep.subr.mxu0 0.0
  %145 = vmatpush1.msra.mxu0 0.0
  %146 = vmatprep.subr.mxu0 0.0
  %147 = vmatpush1.msra.mxu0 0.0
  %148 = vmatprep.subr.mxu0 0.0
  %149 = vmatpush1.msra.mxu0 0.0
  %150 = vmatprep.subr.mxu0 0.0
  %151 = vmatpush1.msra.mxu0 0.0
  %152 = vmatprep.subr.mxu0 0.0
  %153 = vmatpush1.msra.mxu0 0.0
  %154 = vmatprep.subr.mxu0 0.0
  %155 = vmatpush1.msra.mxu0 0.0
  %156 = vmatprep.subr.mxu0 0.0
  %157 = vmatpush1.msra.mxu0 0.0
  %158 = vmatprep.subr.mxu0 0.0
  %159 = vmatpush1.msra.mxu0 0.0
  %160 = vmatprep.subr.mxu0 0.0
  %161 = vmatpush1.msra.mxu0 0.0
  %162 = vmatprep.subr.mxu0 0.0
  %163 = vmatpush1.msra.mxu0 0.0
  %164 = vmatprep.subr.mxu0 0.0
  %165 = vmatpush1.msra.mxu0 0.0
  %166 = vmatprep.subr.mxu0 0.0
  %167 = vmatpush1.msra.mxu0 0.0
  %168 = vmatprep.subr.mxu0 0.0
  %169 = vmatpush1.msra.mxu0 0.0
  %170 = vmatprep.subr.mxu0 0.0
  %171 = vmatpush1.msra.mxu0 0.0
  %172 = vmatprep.subr.mxu0 0.0
  %173 = vmatpush1.msra.mxu0 0.0
  %174 = vmatprep.subr.mxu0 0.0
  %175 = vmatpush1.msra.mxu0 0.0
  %176 = vmatprep.subr.mxu0 0.0
  %177 = vmatpush1.msra.mxu0 0.0
  %178 = vmatprep.subr.mxu0 0.0
  %179 = vmatpush1.msra.mxu0 0.0
  %180 = vmatprep.subr.mxu0 0.0
  %181 = vmatpush1.msra.mxu0 0.0
  %182 = vmatprep.subr.mxu0 0.0
  %183 = vmatpush1.msra.mxu0 0.0
  %184 = vmatprep.subr.mxu0 0.0
  %185 = vmatpush1.msra.mxu0 0.0
  %186 = vmatprep.subr.mxu0 0.0
  %187 = vmatpush1.msra.mxu0 0.0
  %188 = vmatprep.subr.mxu0 0.0
  %189 = vmatpush1.msra.mxu0 0.0
  %190 = vmatprep.subr.mxu0 0.0
  %191 = vmatpush1.msra.mxu0 0.0
  %192 = vmatprep.mubr.f32.mxu0 0.0
  %193 = vmatmul.mubr.f32.gmra.mrb[0].mxu0 %v126
  %v194 = vpop.f32.mrb[0].mxu0
  %v195 = vadd.f32 %v121, %v194
  %v196 = vpop.f32.mrb[0].mxu0
  %197 = vdwg.mxu0
  %v198 = vld [vmem:[%s3] sm:$0x1]
  %v200 = vlaneseq
  %v201 = vshrl.u32 %v200, 7
  %v202 = vsub.s32 0, %v201
  %v203 = vrot.slane %v198, %v202
  %v205 = vadd.f32 %v195, %v203
  %v206 = vxor.u32 %v205, 2147483648
  %v207 = vmul.f32 %v206, 1.442695
  %v208 = vpow.pop %v207
  %v209 = vadd.f32 %v208, 1.0
  %v210 = vrcp.pop %v209
  %v211 = vmul.f32 1.0, %v210
  %v212 = vtanh.pop %v205
  %v213 = vmul.f32 %v211, 0.0
  %215 = vrot.lane.b32.xlu0 %v212, 64
  %v216 = vpop.permute.xlu0 %215
  %v218 = vmul.f32 %v211, %v216
  %220 = vrot.lane.b32.xlu0 %v218, 32
  %v221 = vpop.permute.xlu0 %220
  %v223 = vadd.f32 %v213, %v221
  %v224 = vtanh.pop %v223
  %226 = vrot.lane.b32.xlu0 %v224, 64
  %v227 = vpop.permute.xlu0 %226
  %v229 = vmul.f32 %v211, %v227
  %v230 = vld [vmem:[%s4] sm:$0xff]
  %v231 = vld [vmem:[%s4 + $0x8] sm:$0xff]
  %v232 = vld [vmem:[%s4 + $0x10] sm:$0xff]
  %v233 = vld [vmem:[%s4 + $0x18] sm:$0xff]
  %v234 = vld [vmem:[%s5] sm:$0xff]
  %v235 = vld [vmem:[%s5 + $0x8] sm:$0xff]
  %v236 = vld [vmem:[%s5 + $0x10] sm:$0xff]
  %v237 = vld [vmem:[%s5 + $0x18] sm:$0xff]
  %238 = vmatprep.subr.mxu0 0.0
  %239 = vmatpush1.msra.mxu0 %v234
  %240 = vmatprep.subr.mxu0 0.0
  %241 = vmatpush1.msra.mxu0 %v235
  %242 = vmatprep.subr.mxu0 0.0
  %243 = vmatpush1.msra.mxu0 %v236
  %244 = vmatprep.subr.mxu0 0.0
  %245 = vmatpush1.msra.mxu0 %v237
  %246 = vmatprep.subr.mxu0 0.0
  %247 = vmatpush1.msra.mxu0 0.0
  %248 = vmatprep.subr.mxu0 0.0
  %249 = vmatpush1.msra.mxu0 0.0
  %250 = vmatprep.subr.mxu0 0.0
  %251 = vmatpush1.msra.mxu0 0.0
  %252 = vmatprep.subr.mxu0 0.0
  %253 = vmatpush1.msra.mxu0 0.0
  %254 = vmatprep.subr.mxu0 0.0
  %255 = vmatpush1.msra.mxu0 0.0
  %256 = vmatprep.subr.mxu0 0.0
  %257 = vmatpush1.msra.mxu0 0.0
  %258 = vmatprep.subr.mxu0 0.0
  %259 = vmatpush1.msra.mxu0 0.0
  %260 = vmatprep.subr.mxu0 0.0
  %261 = vmatpush1.msra.mxu0 0.0
  %262 = vmatprep.subr.mxu0 0.0
  %263 = vmatpush1.msra.mxu0 0.0
  %264 = vmatprep.subr.mxu0 0.0
  %265 = vmatpush1.msra.mxu0 0.0
  %266 = vmatprep.subr.mxu0 0.0
  %267 = vmatpush1.msra.mxu0 0.0
  %268 = vmatprep.subr.mxu0 0.0
  %269 = vmatpush1.msra.mxu0 0.0
  %270 = vmatprep.subr.mxu0 0.0
  %271 = vmatpush1.msra.mxu0 0.0
  %272 = vmatprep.subr.mxu0 0.0
  %273 = vmatpush1.msra.mxu0 0.0
  %274 = vmatprep.subr.mxu0 0.0
  %275 = vmatpush1.msra.mxu0 0.0
  %276 = vmatprep.subr.mxu0 0.0
  %277 = vmatpush1.msra.mxu0 0.0
  %278 = vmatprep.subr.mxu0 0.0
  %279 = vmatpush1.msra.mxu0 0.0
  %280 = vmatprep.subr.mxu0 0.0
  %281 = vmatpush1.msra.mxu0 0.0
  %282 = vmatprep.subr.mxu0 0.0
  %283 = vmatpush1.msra.mxu0 0.0
  %284 = vmatprep.subr.mxu0 0.0
  %285 = vmatpush1.msra.mxu0 0.0
  %286 = vmatprep.subr.mxu0 0.0
  %287 = vmatpush1.msra.mxu0 0.0
  %288 = vmatprep.subr.mxu0 0.0
  %289 = vmatpush1.msra.mxu0 0.0
  %290 = vmatprep.subr.mxu0 0.0
  %291 = vmatpush1.msra.mxu0 0.0
  %292 = vmatprep.subr.mxu0 0.0
  %293 = vmatpush1.msra.mxu0 0.0
  %294 = vmatprep.subr.mxu0 0.0
  %295 = vmatpush1.msra.mxu0 0.0
  %296 = vmatprep.subr.mxu0 0.0
  %297 = vmatpush1.msra.mxu0 0.0
  %298 = vmatprep.subr.mxu0 0.0
  %299 = vmatpush1.msra.mxu0 0.0
  %300 = vmatprep.subr.mxu0 0.0
  %301 = vmatpush1.msra.mxu0 0.0
  %302 = vmatprep.mubr.f32.mxu0 0.0
  %303 = vmatmul.mubr.f32.gmra.mrb[0].mxu0 %v52
  %v304 = vpop.f32.mrb[0].mxu0
  %v305 = vadd.f32 0.0, %v304
  %v306 = vpop.f32.mrb[0].mxu0
  %307 = vdwg.mxu0
  %309 = vrot.lane.b32.xlu0 %v229, 32
  %v310 = vpop.permute.xlu0 %309
  %v311 = vsel %vm50, %v310, 0
  %313 = vmatprep.subr.mxu0 0.0
  %314 = vmatpush1.msra.mxu0 %v230
  %315 = vmatprep.subr.mxu0 0.0
  %316 = vmatpush1.msra.mxu0 %v231
  %317 = vmatprep.subr.mxu0 0.0
  %318 = vmatpush1.msra.mxu0 %v232
  %319 = vmatprep.subr.mxu0 0.0
  %320 = vmatpush1.msra.mxu0 %v233
  %321 = vmatprep.subr.mxu0 0.0
  %322 = vmatpush1.msra.mxu0 0.0
  %323 = vmatprep.subr.mxu0 0.0
  %324 = vmatpush1.msra.mxu0 0.0
  %325 = vmatprep.subr.mxu0 0.0
  %326 = vmatpush1.msra.mxu0 0.0
  %327 = vmatprep.subr.mxu0 0.0
  %328 = vmatpush1.msra.mxu0 0.0
  %329 = vmatprep.subr.mxu0 0.0
  %330 = vmatpush1.msra.mxu0 0.0
  %331 = vmatprep.subr.mxu0 0.0
  %332 = vmatpush1.msra.mxu0 0.0
  %333 = vmatprep.subr.mxu0 0.0
  %334 = vmatpush1.msra.mxu0 0.0
  %335 = vmatprep.subr.mxu0 0.0
  %336 = vmatpush1.msra.mxu0 0.0
  %337 = vmatprep.subr.mxu0 0.0
  %338 = vmatpush1.msra.mxu0 0.0
  %339 = vmatprep.subr.mxu0 0.0
  %340 = vmatpush1.msra.mxu0 0.0
  %341 = vmatprep.subr.mxu0 0.0
  %342 = vmatpush1.msra.mxu0 0.0
  %343 = vmatprep.subr.mxu0 0.0
  %344 = vmatpush1.msra.mxu0 0.0
  %345 = vmatprep.subr.mxu0 0.0
  %346 = vmatpush1.msra.mxu0 0.0
  %347 = vmatprep.subr.mxu0 0.0
  %348 = vmatpush1.msra.mxu0 0.0
  %349 = vmatprep.subr.mxu0 0.0
  %350 = vmatpush1.msra.mxu0 0.0
  %351 = vmatprep.subr.mxu0 0.0
  %352 = vmatpush1.msra.mxu0 0.0
  %353 = vmatprep.subr.mxu0 0.0
  %354 = vmatpush1.msra.mxu0 0.0
  %355 = vmatprep.subr.mxu0 0.0
  %356 = vmatpush1.msra.mxu0 0.0
  %357 = vmatprep.subr.mxu0 0.0
  %358 = vmatpush1.msra.mxu0 0.0
  %359 = vmatprep.subr.mxu0 0.0
  %360 = vmatpush1.msra.mxu0 0.0
  %361 = vmatprep.subr.mxu0 0.0
  %362 = vmatpush1.msra.mxu0 0.0
  %363 = vmatprep.subr.mxu0 0.0
  %364 = vmatpush1.msra.mxu0 0.0
  %365 = vmatprep.subr.mxu0 0.0
  %366 = vmatpush1.msra.mxu0 0.0
  %367 = vmatprep.subr.mxu0 0.0
  %368 = vmatpush1.msra.mxu0 0.0
  %369 = vmatprep.subr.mxu0 0.0
  %370 = vmatpush1.msra.mxu0 0.0
  %371 = vmatprep.subr.mxu0 0.0
  %372 = vmatpush1.msra.mxu0 0.0
  %373 = vmatprep.subr.mxu0 0.0
  %374 = vmatpush1.msra.mxu0 0.0
  %375 = vmatprep.subr.mxu0 0.0
  %376 = vmatpush1.msra.mxu0 0.0
  %377 = vmatprep.mubr.f32.mxu0 0.0
  %378 = vmatmul.mubr.f32.gmra.mrb[0].mxu0 %v311
  %v379 = vpop.f32.mrb[0].mxu0
  %v380 = vadd.f32 %v305, %v379
  %v381 = vpop.f32.mrb[0].mxu0
  %382 = vdwg.mxu0
  %v383 = vld [vmem:[%s6] sm:$0x1]
  %v385 = vlaneseq
  %v386 = vshrl.u32 %v385, 7
  %v387 = vsub.s32 0, %v386
  %v388 = vrot.slane %v383, %v387
  %v390 = vadd.f32 %v380, %v388
  %v391 = vxor.u32 %v390, 2147483648
  %v392 = vmul.f32 %v391, 1.442695
  %v393 = vpow.pop %v392
  %v394 = vadd.f32 %v393, 1.0
  %v395 = vrcp.pop %v394
  %v396 = vmul.f32 1.0, %v395
  %v397 = vtanh.pop %v390
  %v398 = vmul.f32 %v396, 0.0
  %400 = vrot.lane.b32.xlu0 %v397, 64
  %v401 = vpop.permute.xlu0 %400
  %v403 = vmul.f32 %v396, %v401
  %405 = vrot.lane.b32.xlu0 %v403, 32
  %v406 = vpop.permute.xlu0 %405
  %v408 = vadd.f32 %v398, %v406
  %v409 = vtanh.pop %v408
  %411 = vrot.lane.b32.xlu0 %v409, 64
  %v412 = vpop.permute.xlu0 %411
  %v414 = vmul.f32 %v396, %v412
  %v415 = vld [vmem:[%s0 + $0x8] sm:$0xff]
  %416 = vmatprep.subr.mxu0 0.0
  %417 = vmatpush1.msra.mxu0 %v46
  %418 = vmatprep.subr.mxu0 0.0
  %419 = vmatpush1.msra.mxu0 %v47
  %420 = vmatprep.subr.mxu0 0.0
  %421 = vmatpush1.msra.mxu0 %v48
  %422 = vmatprep.subr.mxu0 0.0
  %423 = vmatpush1.msra.mxu0 %v49
  %424 = vmatprep.subr.mxu0 0.0
  %425 = vmatpush1.msra.mxu0 0.0
  %426 = vmatprep.subr.mxu0 0.0
  %427 = vmatpush1.msra.mxu0 0.0
  %428 = vmatprep.subr.mxu0 0.0
  %429 = vmatpush1.msra.mxu0 0.0
  %430 = vmatprep.subr.mxu0 0.0
  %431 = vmatpush1.msra.mxu0 0.0
  %432 = vmatprep.subr.mxu0 0.0
  %433 = vmatpush1.msra.mxu0 0.0
  %434 = vmatprep.subr.mxu0 0.0
  %435 = vmatpush1.msra.mxu0 0.0
  %436 = vmatprep.subr.mxu0 0.0
  %437 = vmatpush1.msra.mxu0 0.0
  %438 = vmatprep.subr.mxu0 0.0
  %439 = vmatpush1.msra.mxu0 0.0
  %440 = vmatprep.subr.mxu0 0.0
  %441 = vmatpush1.msra.mxu0 0.0
  %442 = vmatprep.subr.mxu0 0.0
  %443 = vmatpush1.msra.mxu0 0.0
  %444 = vmatprep.subr.mxu0 0.0
  %445 = vmatpush1.msra.mxu0 0.0
  %446 = vmatprep.subr.mxu0 0.0
  %447 = vmatpush1.msra.mxu0 0.0
  %448 = vmatprep.subr.mxu0 0.0
  %449 = vmatpush1.msra.mxu0 0.0
  %450 = vmatprep.subr.mxu0 0.0
  %451 = vmatpush1.msra.mxu0 0.0
  %452 = vmatprep.subr.mxu0 0.0
  %453 = vmatpush1.msra.mxu0 0.0
  %454 = vmatprep.subr.mxu0 0.0
  %455 = vmatpush1.msra.mxu0 0.0
  %456 = vmatprep.subr.mxu0 0.0
  %457 = vmatpush1.msra.mxu0 0.0
  %458 = vmatprep.subr.mxu0 0.0
  %459 = vmatpush1.msra.mxu0 0.0
  %460 = vmatprep.subr.mxu0 0.0
  %461 = vmatpush1.msra.mxu0 0.0
  %462 = vmatprep.subr.mxu0 0.0
  %463 = vmatpush1.msra.mxu0 0.0
  %464 = vmatprep.subr.mxu0 0.0
  %465 = vmatpush1.msra.mxu0 0.0
  %466 = vmatprep.subr.mxu0 0.0
  %467 = vmatpush1.msra.mxu0 0.0
  %468 = vmatprep.subr.mxu0 0.0
  %469 = vmatpush1.msra.mxu0 0.0
  %470 = vmatprep.subr.mxu0 0.0
  %471 = vmatpush1.msra.mxu0 0.0
  %472 = vmatprep.subr.mxu0 0.0
  %473 = vmatpush1.msra.mxu0 0.0
  %474 = vmatprep.subr.mxu0 0.0
  %475 = vmatpush1.msra.mxu0 0.0
  %476 = vmatprep.subr.mxu0 0.0
  %477 = vmatpush1.msra.mxu0 0.0
  %478 = vmatprep.subr.mxu0 0.0
  %479 = vmatpush1.msra.mxu0 0.0
  %480 = vmatprep.mubr.f32.mxu0 0.0
  %481 = vmatmul.mubr.f32.gmra.mrb[0].mxu0 %v311
  %v482 = vpop.f32.mrb[0].mxu0
  %v483 = vadd.f32 0.0, %v482
  %v484 = vpop.f32.mrb[0].mxu0
  %485 = vdwg.mxu0
  %v487 = vsel %vm124, %v415, 0
  %489 = vmatprep.subr.mxu0 0.0
  %490 = vmatpush1.msra.mxu0 %v45
  %491 = vmatprep.subr.mxu0 0.0
  %492 = vmatpush1.msra.mxu0 0.0
  %493 = vmatprep.subr.mxu0 0.0
  %494 = vmatpush1.msra.mxu0 0.0
  %495 = vmatprep.subr.mxu0 0.0
  %496 = vmatpush1.msra.mxu0 0.0
  %497 = vmatprep.subr.mxu0 0.0
  %498 = vmatpush1.msra.mxu0 0.0
  %499 = vmatprep.subr.mxu0 0.0
  %500 = vmatpush1.msra.mxu0 0.0
  %501 = vmatprep.subr.mxu0 0.0
  %502 = vmatpush1.msra.mxu0 0.0
  %503 = vmatprep.subr.mxu0 0.0
  %504 = vmatpush1.msra.mxu0 0.0
  %505 = vmatprep.subr.mxu0 0.0
  %506 = vmatpush1.msra.mxu0 0.0
  %507 = vmatprep.subr.mxu0 0.0
  %508 = vmatpush1.msra.mxu0 0.0
  %509 = vmatprep.subr.mxu0 0.0
  %510 = vmatpush1.msra.mxu0 0.0
  %511 = vmatprep.subr.mxu0 0.0
  %512 = vmatpush1.msra.mxu0 0.0
  %513 = vmatprep.subr.mxu0 0.0
  %514 = vmatpush1.msra.mxu0 0.0
  %515 = vmatprep.subr.mxu0 0.0
  %516 = vmatpush1.msra.mxu0 0.0
  %517 = vmatprep.subr.mxu0 0.0
  %518 = vmatpush1.msra.mxu0 0.0
  %519 = vmatprep.subr.mxu0 0.0
  %520 = vmatpush1.msra.mxu0 0.0
  %521 = vmatprep.subr.mxu0 0.0
  %522 = vmatpush1.msra.mxu0 0.0
  %523 = vmatprep.subr.mxu0 0.0
  %524 = vmatpush1.msra.mxu0 0.0
  %525 = vmatprep.subr.mxu0 0.0
  %526 = vmatpush1.msra.mxu0 0.0
  %527 = vmatprep.subr.mxu0 0.0
  %528 = vmatpush1.msra.mxu0 0.0
  %529 = vmatprep.subr.mxu0 0.0
  %530 = vmatpush1.msra.mxu0 0.0
  %531 = vmatprep.subr.mxu0 0.0
  %532 = vmatpush1.msra.mxu0 0.0
  %533 = vmatprep.subr.mxu0 0.0
  %534 = vmatpush1.msra.mxu0 0.0
  %535 = vmatprep.subr.mxu0 0.0
  %536 = vmatpush1.msra.mxu0 0.0
  %537 = vmatprep.subr.mxu0 0.0
  %538 = vmatpush1.msra.mxu0 0.0
  %539 = vmatprep.subr.mxu0 0.0
  %540 = vmatpush1.msra.mxu0 0.0
  %541 = vmatprep.subr.mxu0 0.0
  %542 = vmatpush1.msra.mxu0 0.0
  %543 = vmatprep.subr.mxu0 0.0
  %544 = vmatpush1.msra.mxu0 0.0
  %545 = vmatprep.subr.mxu0 0.0
  %546 = vmatpush1.msra.mxu0 0.0
  %547 = vmatprep.subr.mxu0 0.0
  %548 = vmatpush1.msra.mxu0 0.0
  %549 = vmatprep.subr.mxu0 0.0
  %550 = vmatpush1.msra.mxu0 0.0
  %551 = vmatprep.subr.mxu0 0.0
  %552 = vmatpush1.msra.mxu0 0.0
  %553 = vmatprep.mubr.f32.mxu0 0.0
  %554 = vmatmul.mubr.f32.gmra.mrb[0].mxu0 %v487
  %v555 = vpop.f32.mrb[0].mxu0
  %v556 = vadd.f32 %v483, %v555
  %v557 = vpop.f32.mrb[0].mxu0
  %558 = vdwg.mxu0
  %v559 = vadd.f32 %v556, %v203
  %v560 = vxor.u32 %v559, 2147483648
  %v561 = vmul.f32 %v560, 1.442695
  %v562 = vpow.pop %v561
  %v563 = vadd.f32 %v562, 1.0
  %v564 = vrcp.pop %v563
  %v565 = vmul.f32 1.0, %v564
  %v566 = vtanh.pop %v559
  %v567 = vmul.f32 %v565, %v223
  %569 = vrot.lane.b32.xlu0 %v566, 64
  %v570 = vpop.permute.xlu0 %569
  %v572 = vmul.f32 %v565, %v570
  %574 = vrot.lane.b32.xlu0 %v572, 32
  %v575 = vpop.permute.xlu0 %574
  %v577 = vadd.f32 %v567, %v575
  %v578 = vtanh.pop %v577
  %580 = vrot.lane.b32.xlu0 %v578, 64
  %v581 = vpop.permute.xlu0 %580
  %v583 = vmul.f32 %v565, %v581
  %v584 = vld [vmem:[%s7] sm:$0xff]
  %v585 = vld [vmem:[%s7 + $0x8] sm:$0xff]
  %v586 = vld [vmem:[%s7 + $0x10] sm:$0xff]
  %v587 = vld [vmem:[%s7 + $0x18] sm:$0xff]
  %v588 = vld [vmem:[%s8] sm:$0xff]
  %v589 = vld [vmem:[%s8 + $0x8] sm:$0xff]
  %v590 = vld [vmem:[%s8 + $0x10] sm:$0xff]
  %v591 = vld [vmem:[%s8 + $0x18] sm:$0xff]
  %592 = vmatprep.subr.mxu0 0.0
  %593 = vmatpush1.msra.mxu0 %v588
  %594 = vmatprep.subr.mxu0 0.0
  %595 = vmatpush1.msra.mxu0 %v589
  %596 = vmatprep.subr.mxu0 0.0
  %597 = vmatpush1.msra.mxu0 %v590
  %598 = vmatprep.subr.mxu0 0.0
  %599 = vmatpush1.msra.mxu0 %v591
  %600 = vmatprep.subr.mxu0 0.0
  %601 = vmatpush1.msra.mxu0 0.0
  %602 = vmatprep.subr.mxu0 0.0
  %603 = vmatpush1.msra.mxu0 0.0
  %604 = vmatprep.subr.mxu0 0.0
  %605 = vmatpush1.msra.mxu0 0.0
  %606 = vmatprep.subr.mxu0 0.0
  %607 = vmatpush1.msra.mxu0 0.0
  %608 = vmatprep.subr.mxu0 0.0
  %609 = vmatpush1.msra.mxu0 0.0
  %610 = vmatprep.subr.mxu0 0.0
  %611 = vmatpush1.msra.mxu0 0.0
  %612 = vmatprep.subr.mxu0 0.0
  %613 = vmatpush1.msra.mxu0 0.0
  %614 = vmatprep.subr.mxu0 0.0
  %615 = vmatpush1.msra.mxu0 0.0
  %616 = vmatprep.subr.mxu0 0.0
  %617 = vmatpush1.msra.mxu0 0.0
  %618 = vmatprep.subr.mxu0 0.0
  %619 = vmatpush1.msra.mxu0 0.0
  %620 = vmatprep.subr.mxu0 0.0
  %621 = vmatpush1.msra.mxu0 0.0
  %622 = vmatprep.subr.mxu0 0.0
  %623 = vmatpush1.msra.mxu0 0.0
  %624 = vmatprep.subr.mxu0 0.0
  %625 = vmatpush1.msra.mxu0 0.0
  %626 = vmatprep.subr.mxu0 0.0
  %627 = vmatpush1.msra.mxu0 0.0
  %628 = vmatprep.subr.mxu0 0.0
  %629 = vmatpush1.msra.mxu0 0.0
  %630 = vmatprep.subr.mxu0 0.0
  %631 = vmatpush1.msra.mxu0 0.0
  %632 = vmatprep.subr.mxu0 0.0
  %633 = vmatpush1.msra.mxu0 0.0
  %634 = vmatprep.subr.mxu0 0.0
  %635 = vmatpush1.msra.mxu0 0.0
  %636 = vmatprep.subr.mxu0 0.0
  %637 = vmatpush1.msra.mxu0 0.0
  %638 = vmatprep.subr.mxu0 0.0
  %639 = vmatpush1.msra.mxu0 0.0
  %640 = vmatprep.subr.mxu0 0.0
  %641 = vmatpush1.msra.mxu0 0.0
  %642 = vmatprep.subr.mxu0 0.0
  %643 = vmatpush1.msra.mxu0 0.0
  %644 = vmatprep.subr.mxu0 0.0
  %645 = vmatpush1.msra.mxu0 0.0
  %646 = vmatprep.subr.mxu0 0.0
  %647 = vmatpush1.msra.mxu0 0.0
  %648 = vmatprep.subr.mxu0 0.0
  %649 = vmatpush1.msra.mxu0 0.0
  %650 = vmatprep.subr.mxu0 0.0
  %651 = vmatpush1.msra.mxu0 0.0
  %652 = vmatprep.subr.mxu0 0.0
  %653 = vmatpush1.msra.mxu0 0.0
  %654 = vmatprep.subr.mxu0 0.0
  %655 = vmatpush1.msra.mxu0 0.0
  %656 = vmatprep.mubr.f32.mxu0 0.0
  %657 = vmatmul.mubr.f32.gmra.mrb[0].mxu0 %v52
  %v658 = vpop.f32.mrb[0].mxu0
  %v659 = vadd.f32 0.0, %v658
  %v660 = vpop.f32.mrb[0].mxu0
  %661 = vdwg.mxu0
  %663 = vrot.lane.b32.xlu0 %v414, 32
  %v664 = vpop.permute.xlu0 %663
  %v665 = vsel %vm50, %v664, 0
  %667 = vmatprep.subr.mxu0 0.0
  %668 = vmatpush1.msra.mxu0 %v584
  %669 = vmatprep.subr.mxu0 0.0
  %670 = vmatpush1.msra.mxu0 %v585
  %671 = vmatprep.subr.mxu0 0.0
  %672 = vmatpush1.msra.mxu0 %v586
  %673 = vmatprep.subr.mxu0 0.0
  %674 = vmatpush1.msra.mxu0 %v587
  %675 = vmatprep.subr.mxu0 0.0
  %676 = vmatpush1.msra.mxu0 0.0
  %677 = vmatprep.subr.mxu0 0.0
  %678 = vmatpush1.msra.mxu0 0.0
  %679 = vmatprep.subr.mxu0 0.0
  %680 = vmatpush1.msra.mxu0 0.0
  %681 = vmatprep.subr.mxu0 0.0
  %682 = vmatpush1.msra.mxu0 0.0
  %683 = vmatprep.subr.mxu0 0.0
  %684 = vmatpush1.msra.mxu0 0.0
  %685 = vmatprep.subr.mxu0 0.0
  %686 = vmatpush1.msra.mxu0 0.0
  %687 = vmatprep.subr.mxu0 0.0
  %688 = vmatpush1.msra.mxu0 0.0
  %689 = vmatprep.subr.mxu0 0.0
  %690 = vmatpush1.msra.mxu0 0.0
  %691 = vmatprep.subr.mxu0 0.0
  %692 = vmatpush1.msra.mxu0 0.0
  %693 = vmatprep.subr.mxu0 0.0
  %694 = vmatpush1.msra.mxu0 0.0
  %695 = vmatprep.subr.mxu0 0.0
  %696 = vmatpush1.msra.mxu0 0.0
  %697 = vmatprep.subr.mxu0 0.0
  %698 = vmatpush1.msra.mxu0 0.0
  %699 = vmatprep.subr.mxu0 0.0
  %700 = vmatpush1.msra.mxu0 0.0
  %701 = vmatprep.subr.mxu0 0.0
  %702 = vmatpush1.msra.mxu0 0.0
  %703 = vmatprep.subr.mxu0 0.0
  %704 = vmatpush1.msra.mxu0 0.0
  %705 = vmatprep.subr.mxu0 0.0
  %706 = vmatpush1.msra.mxu0 0.0
  %707 = vmatprep.subr.mxu0 0.0
  %708 = vmatpush1.msra.mxu0 0.0
  %709 = vmatprep.subr.mxu0 0.0
  %710 = vmatpush1.msra.mxu0 0.0
  %711 = vmatprep.subr.mxu0 0.0
  %712 = vmatpush1.msra.mxu0 0.0
  %713 = vmatprep.subr.mxu0 0.0
  %714 = vmatpush1.msra.mxu0 0.0
  %715 = vmatprep.subr.mxu0 0.0
  %716 = vmatpush1.msra.mxu0 0.0
  %717 = vmatprep.subr.mxu0 0.0
  %718 = vmatpush1.msra.mxu0 0.0
  %719 = vmatprep.subr.mxu0 0.0
  %720 = vmatpush1.msra.mxu0 0.0
  %721 = vmatprep.subr.mxu0 0.0
  %722 = vmatpush1.msra.mxu0 0.0
  %723 = vmatprep.subr.mxu0 0.0
  %724 = vmatpush1.msra.mxu0 0.0
  %725 = vmatprep.subr.mxu0 0.0
  %726 = vmatpush1.msra.mxu0 0.0
  %727 = vmatprep.subr.mxu0 0.0
  %728 = vmatpush1.msra.mxu0 0.0
  %729 = vmatprep.subr.mxu0 0.0
  %730 = vmatpush1.msra.mxu0 0.0
  %731 = vmatprep.mubr.f32.mxu0 0.0
  %732 = vmatmul.mubr.f32.gmra.mrb[0].mxu0 %v665
  %v733 = vpop.f32.mrb[0].mxu0
  %v734 = vadd.f32 %v659, %v733
  %v735 = vpop.f32.mrb[0].mxu0
  %736 = vdwg.mxu0
  %v737 = vld [vmem:[%s9] sm:$0x1]
  %v739 = vlaneseq
  %v740 = vshrl.u32 %v739, 7
  %v741 = vsub.s32 0, %v740
  %v742 = vrot.slane %v737, %v741
  %v744 = vadd.f32 %v734, %v742
  %v745 = vxor.u32 %v744, 2147483648
  %v746 = vmul.f32 %v745, 1.442695
  %v747 = vpow.pop %v746
  %v748 = vadd.f32 %v747, 1.0
  %v749 = vrcp.pop %v748
  %v750 = vmul.f32 1.0, %v749
  %v751 = vtanh.pop %v744
  %v752 = vmul.f32 %v750, 0.0
  %754 = vrot.lane.b32.xlu0 %v751, 64
  %v755 = vpop.permute.xlu0 %754
  %v757 = vmul.f32 %v750, %v755
  %759 = vrot.lane.b32.xlu0 %v757, 32
  %v760 = vpop.permute.xlu0 %759
  %v762 = vadd.f32 %v752, %v760
  %v763 = vtanh.pop %v762
  %765 = vrot.lane.b32.xlu0 %v763, 64
  %v766 = vpop.permute.xlu0 %765
  %v768 = vmul.f32 %v750, %v766
  %770 = vrot.lane.b32.xlu0 %v768, 32
  %v771 = vpop.permute.xlu0 %770
  %773 = vst.msk [vmem:[#allocation2] sm:$0xff] %vm50, %v771
  %v774 = vld [vmem:[%s4] sm:$0xff]
  %v775 = vld [vmem:[%s4 + $0x8] sm:$0xff]
  %v776 = vld [vmem:[%s4 + $0x10] sm:$0xff]
  %v777 = vld [vmem:[%s4 + $0x18] sm:$0xff]
  %v778 = vld [vmem:[%s5] sm:$0xff]
  %v779 = vld [vmem:[%s5 + $0x8] sm:$0xff]
  %v780 = vld [vmem:[%s5 + $0x10] sm:$0xff]
  %v781 = vld [vmem:[%s5 + $0x18] sm:$0xff]
  %782 = vmatprep.subr.mxu0 0.0
  %783 = vmatpush1.msra.mxu0 %v778
  %784 = vmatprep.subr.mxu0 0.0
  %785 = vmatpush1.msra.mxu0 %v779
  %786 = vmatprep.subr.mxu0 0.0
  %787 = vmatpush1.msra.mxu0 %v780
  %788 = vmatprep.subr.mxu0 0.0
  %789 = vmatpush1.msra.mxu0 %v781
  %790 = vmatprep.subr.mxu0 0.0
  %791 = vmatpush1.msra.mxu0 0.0
  %792 = vmatprep.subr.mxu0 0.0
  %793 = vmatpush1.msra.mxu0 0.0
  %794 = vmatprep.subr.mxu0 0.0
  %795 = vmatpush1.msra.mxu0 0.0
  %796 = vmatprep.subr.mxu0 0.0
  %797 = vmatpush1.msra.mxu0 0.0
  %798 = vmatprep.subr.mxu0 0.0
  %799 = vmatpush1.msra.mxu0 0.0
  %800 = vmatprep.subr.mxu0 0.0
  %801 = vmatpush1.msra.mxu0 0.0
  %802 = vmatprep.subr.mxu0 0.0
  %803 = vmatpush1.msra.mxu0 0.0
  %804 = vmatprep.subr.mxu0 0.0
  %805 = vmatpush1.msra.mxu0 0.0
  %806 = vmatprep.subr.mxu0 0.0
  %807 = vmatpush1.msra.mxu0 0.0
  %808 = vmatprep.subr.mxu0 0.0
  %809 = vmatpush1.msra.mxu0 0.0
  %810 = vmatprep.subr.mxu0 0.0
  %811 = vmatpush1.msra.mxu0 0.0
  %812 = vmatprep.subr.mxu0 0.0
  %813 = vmatpush1.msra.mxu0 0.0
  %814 = vmatprep.subr.mxu0 0.0
  %815 = vmatpush1.msra.mxu0 0.0
  %816 = vmatprep.subr.mxu0 0.0
  %817 = vmatpush1.msra.mxu0 0.0
  %818 = vmatprep.subr.mxu0 0.0
  %819 = vmatpush1.msra.mxu0 0.0
  %820 = vmatprep.subr.mxu0 0.0
  %821 = vmatpush1.msra.mxu0 0.0
  %822 = vmatprep.subr.mxu0 0.0
  %823 = vmatpush1.msra.mxu0 0.0
  %824 = vmatprep.subr.mxu0 0.0
  %825 = vmatpush1.msra.mxu0 0.0
  %826 = vmatprep.subr.mxu0 0.0
  %827 = vmatpush1.msra.mxu0 0.0
  %828 = vmatprep.subr.mxu0 0.0
  %829 = vmatpush1.msra.mxu0 0.0
  %830 = vmatprep.subr.mxu0 0.0
  %831 = vmatpush1.msra.mxu0 0.0
  %832 = vmatprep.subr.mxu0 0.0
  %833 = vmatpush1.msra.mxu0 0.0
  %834 = vmatprep.subr.mxu0 0.0
  %835 = vmatpush1.msra.mxu0 0.0
  %836 = vmatprep.subr.mxu0 0.0
  %837 = vmatpush1.msra.mxu0 0.0
  %838 = vmatprep.subr.mxu0 0.0
  %839 = vmatpush1.msra.mxu0 0.0
  %840 = vmatprep.subr.mxu0 0.0
  %841 = vmatpush1.msra.mxu0 0.0
  %842 = vmatprep.subr.mxu0 0.0
  %843 = vmatpush1.msra.mxu0 0.0
  %844 = vmatprep.subr.mxu0 0.0
  %845 = vmatpush1.msra.mxu0 0.0
  %846 = vmatprep.mubr.f32.mxu0 0.0
  %847 = vmatmul.mubr.f32.gmra.mrb[0].mxu0 %v665
  %v848 = vpop.f32.mrb[0].mxu0
  %v849 = vadd.f32 0.0, %v848
  %v850 = vpop.f32.mrb[0].mxu0
  %851 = vdwg.mxu0
  %853 = vrot.lane.b32.xlu0 %v583, 32
  %v854 = vpop.permute.xlu0 %853
  %v855 = vsel %vm50, %v854, 0
  %857 = vmatprep.subr.mxu0 0.0
  %858 = vmatpush1.msra.mxu0 %v774
  %859 = vmatprep.subr.mxu0 0.0
  %860 = vmatpush1.msra.mxu0 %v775
  %861 = vmatprep.subr.mxu0 0.0
  %862 = vmatpush1.msra.mxu0 %v776
  %863 = vmatprep.subr.mxu0 0.0
  %864 = vmatpush1.msra.mxu0 %v777
  %865 = vmatprep.subr.mxu0 0.0
  %866 = vmatpush1.msra.mxu0 0.0
  %867 = vmatprep.subr.mxu0 0.0
  %868 = vmatpush1.msra.mxu0 0.0
  %869 = vmatprep.subr.mxu0 0.0
  %870 = vmatpush1.msra.mxu0 0.0
  %871 = vmatprep.subr.mxu0 0.0
  %872 = vmatpush1.msra.mxu0 0.0
  %873 = vmatprep.subr.mxu0 0.0
  %874 = vmatpush1.msra.mxu0 0.0
  %875 = vmatprep.subr.mxu0 0.0
  %876 = vmatpush1.msra.mxu0 0.0
  %877 = vmatprep.subr.mxu0 0.0
  %878 = vmatpush1.msra.mxu0 0.0
  %879 = vmatprep.subr.mxu0 0.0
  %880 = vmatpush1.msra.mxu0 0.0
  %881 = vmatprep.subr.mxu0 0.0
  %882 = vmatpush1.msra.mxu0 0.0
  %883 = vmatprep.subr.mxu0 0.0
  %884 = vmatpush1.msra.mxu0 0.0
  %885 = vmatprep.subr.mxu0 0.0
  %886 = vmatpush1.msra.mxu0 0.0
  %887 = vmatprep.subr.mxu0 0.0
  %888 = vmatpush1.msra.mxu0 0.0
  %889 = vmatprep.subr.mxu0 0.0
  %890 = vmatpush1.msra.mxu0 0.0
  %891 = vmatprep.subr.mxu0 0.0
  %892 = vmatpush1.msra.mxu0 0.0
  %893 = vmatprep.subr.mxu0 0.0
  %894 = vmatpush1.msra.mxu0 0.0
  %895 = vmatprep.subr.mxu0 0.0
  %896 = vmatpush1.msra.mxu0 0.0
  %897 = vmatprep.subr.mxu0 0.0
  %898 = vmatpush1.msra.mxu0 0.0
  %899 = vmatprep.subr.mxu0 0.0
  %900 = vmatpush1.msra.mxu0 0.0
  %901 = vmatprep.subr.mxu0 0.0
  %902 = vmatpush1.msra.mxu0 0.0
  %903 = vmatprep.subr.mxu0 0.0
  %904 = vmatpush1.msra.mxu0 0.0
  %905 = vmatprep.subr.mxu0 0.0
  %906 = vmatpush1.msra.mxu0 0.0
  %907 = vmatprep.subr.mxu0 0.0
  %908 = vmatpush1.msra.mxu0 0.0
  %909 = vmatprep.subr.mxu0 0.0
  %910 = vmatpush1.msra.mxu0 0.0
  %911 = vmatprep.subr.mxu0 0.0
  %912 = vmatpush1.msra.mxu0 0.0
  %913 = vmatprep.subr.mxu0 0.0
  %914 = vmatpush1.msra.mxu0 0.0
  %915 = vmatprep.subr.mxu0 0.0
  %916 = vmatpush1.msra.mxu0 0.0
  %917 = vmatprep.subr.mxu0 0.0
  %918 = vmatpush1.msra.mxu0 0.0
  %919 = vmatprep.subr.mxu0 0.0
  %920 = vmatpush1.msra.mxu0 0.0
  %921 = vmatprep.mubr.f32.mxu0 0.0
  %922 = vmatmul.mubr.f32.gmra.mrb[0].mxu0 %v855
  %v923 = vpop.f32.mrb[0].mxu0
  %v924 = vadd.f32 %v849, %v923
  %v925 = vpop.f32.mrb[0].mxu0
  %926 = vdwg.mxu0
  %v927 = vld [vmem:[%s6] sm:$0x1]
  %v929 = vlaneseq
  %v930 = vshrl.u32 %v929, 7
  %v931 = vsub.s32 0, %v930
  %v932 = vrot.slane %v927, %v931
  %v934 = vadd.f32 %v924, %v932
  %v935 = vxor.u32 %v934, 2147483648
  %v936 = vmul.f32 %v935, 1.442695
  %v937 = vpow.pop %v936
  %v938 = vadd.f32 %v937, 1.0
  %v939 = vrcp.pop %v938
  %v940 = vmul.f32 1.0, %v939
  %v941 = vtanh.pop %v934
  %v942 = vmul.f32 %v940, %v408
  %944 = vrot.lane.b32.xlu0 %v941, 64
  %v945 = vpop.permute.xlu0 %944
  %v947 = vmul.f32 %v940, %v945
  %949 = vrot.lane.b32.xlu0 %v947, 32
  %v950 = vpop.permute.xlu0 %949
  %v952 = vadd.f32 %v942, %v950
  %v953 = vtanh.pop %v952
  %955 = vrot.lane.b32.xlu0 %v953, 64
  %v956 = vpop.permute.xlu0 %955
  %v958 = vmul.f32 %v940, %v956
  %v959 = vld [vmem:[%s0 + $0x10] sm:$0xff]
  %v960 = vld [vmem:[%s1] sm:$0xff]
  %v961 = vld [vmem:[%s2] sm:$0xff]
  %v962 = vld [vmem:[%s2 + $0x8] sm:$0xff]
  %v963 = vld [vmem:[%s2 + $0x10] sm:$0xff]
  %v964 = vld [vmem:[%s2 + $0x18] sm:$0xff]
  %965 = vmatprep.subr.mxu0 0.0
  %966 = vmatpush1.msra.mxu0 %v961
  %967 = vmatprep.subr.mxu0 0.0
  %968 = vmatpush1.msra.mxu0 %v962
  %969 = vmatprep.subr.mxu0 0.0
  %970 = vmatpush1.msra.mxu0 %v963
  %971 = vmatprep.subr.mxu0 0.0
  %972 = vmatpush1.msra.mxu0 %v964
  %973 = vmatprep.subr.mxu0 0.0
  %974 = vmatpush1.msra.mxu0 0.0
  %975 = vmatprep.subr.mxu0 0.0
  %976 = vmatpush1.msra.mxu0 0.0
  %977 = vmatprep.subr.mxu0 0.0
  %978 = vmatpush1.msra.mxu0 0.0
  %979 = vmatprep.subr.mxu0 0.0
  %980 = vmatpush1.msra.mxu0 0.0
  %981 = vmatprep.subr.mxu0 0.0
  %982 = vmatpush1.msra.mxu0 0.0
  %983 = vmatprep.subr.mxu0 0.0
  %984 = vmatpush1.msra.mxu0 0.0
  %985 = vmatprep.subr.mxu0 0.0
  %986 = vmatpush1.msra.mxu0 0.0
  %987 = vmatprep.subr.mxu0 0.0
  %988 = vmatpush1.msra.mxu0 0.0
  %989 = vmatprep.subr.mxu0 0.0
  %990 = vmatpush1.msra.mxu0 0.0
  %991 = vmatprep.subr.mxu0 0.0
  %992 = vmatpush1.msra.mxu0 0.0
  %993 = vmatprep.subr.mxu0 0.0
  %994 = vmatpush1.msra.mxu0 0.0
  %995 = vmatprep.subr.mxu0 0.0
  %996 = vmatpush1.msra.mxu0 0.0
  %997 = vmatprep.subr.mxu0 0.0
  %998 = vmatpush1.msra.mxu0 0.0
  %999 = vmatprep.subr.mxu0 0.0
  %1000 = vmatpush1.msra.mxu0 0.0
  %1001 = vmatprep.subr.mxu0 0.0
  %1002 = vmatpush1.msra.mxu0 0.0
  %1003 = vmatprep.subr.mxu0 0.0
  %1004 = vmatpush1.msra.mxu0 0.0
  %1005 = vmatprep.subr.mxu0 0.0
  %1006 = vmatpush1.msra.mxu0 0.0
  %1007 = vmatprep.subr.mxu0 0.0
  %1008 = vmatpush1.msra.mxu0 0.0
  %1009 = vmatprep.subr.mxu0 0.0
  %1010 = vmatpush1.msra.mxu0 0.0
  %1011 = vmatprep.subr.mxu0 0.0
  %1012 = vmatpush1.msra.mxu0 0.0
  %1013 = vmatprep.subr.mxu0 0.0
  %1014 = vmatpush1.msra.mxu0 0.0
  %1015 = vmatprep.subr.mxu0 0.0
  %1016 = vmatpush1.msra.mxu0 0.0
  %1017 = vmatprep.subr.mxu0 0.0
  %1018 = vmatpush1.msra.mxu0 0.0
  %1019 = vmatprep.subr.mxu0 0.0
  %1020 = vmatpush1.msra.mxu0 0.0
  %1021 = vmatprep.subr.mxu0 0.0
  %1022 = vmatpush1.msra.mxu0 0.0
  %1023 = vmatprep.subr.mxu0 0.0
  %1024 = vmatpush1.msra.mxu0 0.0
  %1025 = vmatprep.subr.mxu0 0.0
  %1026 = vmatpush1.msra.mxu0 0.0
  %1027 = vmatprep.subr.mxu0 0.0
  %1028 = vmatpush1.msra.mxu0 0.0
  %1029 = vmatprep.mubr.f32.mxu0 0.0
  %1030 = vmatmul.mubr.f32.gmra.mrb[0].mxu0 %v855
  %v1031 = vpop.f32.mrb[0].mxu0
  %v1032 = vadd.f32 0.0, %v1031
  %v1033 = vpop.f32.mrb[0].mxu0
  %1034 = vdwg.mxu0
  %v1036 = vsel %vm124, %v959, 0
  %1038 = vmatprep.subr.mxu0 0.0
  %1039 = vmatpush1.msra.mxu0 %v960
  %1040 = vmatprep.subr.mxu0 0.0
  %1041 = vmatpush1.msra.mxu0 0.0
  %1042 = vmatprep.subr.mxu0 0.0
  %1043 = vmatpush1.msra.mxu0 0.0
  %1044 = vmatprep.subr.mxu0 0.0
  %1045 = vmatpush1.msra.mxu0 0.0
  %1046 = vmatprep.subr.mxu0 0.0
  %1047 = vmatpush1.msra.mxu0 0.0
  %1048 = vmatprep.subr.mxu0 0.0
  %1049 = vmatpush1.msra.mxu0 0.0
  %1050 = vmatprep.subr.mxu0 0.0
  %1051 = vmatpush1.msra.mxu0 0.0
  %1052 = vmatprep.subr.mxu0 0.0
  %1053 = vmatpush1.msra.mxu0 0.0
  %1054 = vmatprep.subr.mxu0 0.0
  %1055 = vmatpush1.msra.mxu0 0.0
  %1056 = vmatprep.subr.mxu0 0.0
  %1057 = vmatpush1.msra.mxu0 0.0
  %1058 = vmatprep.subr.mxu0 0.0
  %1059 = vmatpush1.msra.mxu0 0.0
  %1060 = vmatprep.subr.mxu0 0.0
  %1061 = vmatpush1.msra.mxu0 0.0
  %1062 = vmatprep.subr.mxu0 0.0
  %1063 = vmatpush1.msra.mxu0 0.0
  %1064 = vmatprep.subr.mxu0 0.0
  %1065 = vmatpush1.msra.mxu0 0.0
  %1066 = vmatprep.subr.mxu0 0.0
  %1067 = vmatpush1.msra.mxu0 0.0
  %1068 = vmatprep.subr.mxu0 0.0
  %1069 = vmatpush1.msra.mxu0 0.0
  %1070 = vmatprep.subr.mxu0 0.0
  %1071 = vmatpush1.msra.mxu0 0.0
  %1072 = vmatprep.subr.mxu0 0.0
  %1073 = vmatpush1.msra.mxu0 0.0
  %1074 = vmatprep.subr.mxu0 0.0
  %1075 = vmatpush1.msra.mxu0 0.0
  %1076 = vmatprep.subr.mxu0 0.0
  %1077 = vmatpush1.msra.mxu0 0.0
  %1078 = vmatprep.subr.mxu0 0.0
  %1079 = vmatpush1.msra.mxu0 0.0
  %1080 = vmatprep.subr.mxu0 0.0
  %1081 = vmatpush1.msra.mxu0 0.0
  %1082 = vmatprep.subr.mxu0 0.0
  %1083 = vmatpush1.msra.mxu0 0.0
  %1084 = vmatprep.subr.mxu0 0.0
  %1085 = vmatpush1.msra.mxu0 0.0
  %1086 = vmatprep.subr.mxu0 0.0
  %1087 = vmatpush1.msra.mxu0 0.0
  %1088 = vmatprep.subr.mxu0 0.0
  %1089 = vmatpush1.msra.mxu0 0.0
  %1090 = vmatprep.subr.mxu0 0.0
  %1091 = vmatpush1.msra.mxu0 0.0
  %1092 = vmatprep.subr.mxu0 0.0
  %1093 = vmatpush1.msra.mxu0 0.0
  %1094 = vmatprep.subr.mxu0 0.0
  %1095 = vmatpush1.msra.mxu0 0.0
  %1096 = vmatprep.subr.mxu0 0.0
  %1097 = vmatpush1.msra.mxu0 0.0
  %1098 = vmatprep.subr.mxu0 0.0
  %1099 = vmatpush1.msra.mxu0 0.0
  %1100 = vmatprep.subr.mxu0 0.0
  %1101 = vmatpush1.msra.mxu0 0.0
  %1102 = vmatprep.mubr.f32.mxu0 0.0
  %1103 = vmatmul.mubr.f32.gmra.mrb[0].mxu0 %v1036
  %v1104 = vpop.f32.mrb[0].mxu0
  %v1105 = vadd.f32 %v1032, %v1104
  %v1106 = vpop.f32.mrb[0].mxu0
  %1107 = vdwg.mxu0
  %v1108 = vld [vmem:[%s3] sm:$0x1]
  %v1110 = vlaneseq
  %v1111 = vshrl.u32 %v1110, 7
  %v1112 = vsub.s32 0, %v1111
  %v1113 = vrot.slane %v1108, %v1112
  %v1115 = vadd.f32 %v1105, %v1113
  %v1116 = vxor.u32 %v1115, 2147483648
  %v1117 = vmul.f32 %v1116, 1.442695
  %v1118 = vpow.pop %v1117
  %v1119 = vadd.f32 %v1118, 1.0
  %v1120 = vrcp.pop %v1119
  %v1121 = vmul.f32 1.0, %v1120
  %v1122 = vtanh.pop %v1115
  %v1123 = vmul.f32 %v1121, %v577
  %1125 = vrot.lane.b32.xlu0 %v1122, 64
  %v1126 = vpop.permute.xlu0 %1125
  %v1128 = vmul.f32 %v1121, %v1126
  %1130 = vrot.lane.b32.xlu0 %v1128, 32
  %v1131 = vpop.permute.xlu0 %1130
  %v1133 = vadd.f32 %v1123, %v1131
  %v1134 = vtanh.pop %v1133
  %1136 = vrot.lane.b32.xlu0 %v1134, 64
  %v1137 = vpop.permute.xlu0 %1136
  %v1139 = vmul.f32 %v1121, %v1137
  %v1140 = vld [vmem:[%s7] sm:$0xff]
  %v1141 = vld [vmem:[%s7 + $0x8] sm:$0xff]
  %v1142 = vld [vmem:[%s7 + $0x10] sm:$0xff]
  %v1143 = vld [vmem:[%s7 + $0x18] sm:$0xff]
  %v1144 = vld [vmem:[%s8] sm:$0xff]
  %v1145 = vld [vmem:[%s8 + $0x8] sm:$0xff]
  %v1146 = vld [vmem:[%s8 + $0x10] sm:$0xff]
  %v1147 = vld [vmem:[%s8 + $0x18] sm:$0xff]
  %v1148 = vsel %vm50, %v771, 0
  %1150 = vmatprep.subr.mxu0 0.0
  %1151 = vmatpush1.msra.mxu0 %v1144
  %1152 = vmatprep.subr.mxu0 0.0
  %1153 = vmatpush1.msra.mxu0 %v1145
  %1154 = vmatprep.subr.mxu0 0.0
  %1155 = vmatpush1.msra.mxu0 %v1146
  %1156 = vmatprep.subr.mxu0 0.0
  %1157 = vmatpush1.msra.mxu0 %v1147
  %1158 = vmatprep.subr.mxu0 0.0
  %1159 = vmatpush1.msra.mxu0 0.0
  %1160 = vmatprep.subr.mxu0 0.0
  %1161 = vmatpush1.msra.mxu0 0.0
  %1162 = vmatprep.subr.mxu0 0.0
  %1163 = vmatpush1.msra.mxu0 0.0
  %1164 = vmatprep.subr.mxu0 0.0
  %1165 = vmatpush1.msra.mxu0 0.0
  %1166 = vmatprep.subr.mxu0 0.0
  %1167 = vmatpush1.msra.mxu0 0.0
  %1168 = vmatprep.subr.mxu0 0.0
  %1169 = vmatpush1.msra.mxu0 0.0
  %1170 = vmatprep.subr.mxu0 0.0
  %1171 = vmatpush1.msra.mxu0 0.0
  %1172 = vmatprep.subr.mxu0 0.0
  %1173 = vmatpush1.msra.mxu0 0.0
  %1174 = vmatprep.subr.mxu0 0.0
  %1175 = vmatpush1.msra.mxu0 0.0
  %1176 = vmatprep.subr.mxu0 0.0
  %1177 = vmatpush1.msra.mxu0 0.0
  %1178 = vmatprep.subr.mxu0 0.0
  %1179 = vmatpush1.msra.mxu0 0.0
  %1180 = vmatprep.subr.mxu0 0.0
  %1181 = vmatpush1.msra.mxu0 0.0
  %1182 = vmatprep.subr.mxu0 0.0
  %1183 = vmatpush1.msra.mxu0 0.0
  %1184 = vmatprep.subr.mxu0 0.0
  %1185 = vmatpush1.msra.mxu0 0.0
  %1186 = vmatprep.subr.mxu0 0.0
  %1187 = vmatpush1.msra.mxu0 0.0
  %1188 = vmatprep.subr.mxu0 0.0
  %1189 = vmatpush1.msra.mxu0 0.0
  %1190 = vmatprep.subr.mxu0 0.0
  %1191 = vmatpush1.msra.mxu0 0.0
  %1192 = vmatprep.subr.mxu0 0.0
  %1193 = vmatpush1.msra.mxu0 0.0
  %1194 = vmatprep.subr.mxu0 0.0
  %1195 = vmatpush1.msra.mxu0 0.0
  %1196 = vmatprep.subr.mxu0 0.0
  %1197 = vmatpush1.msra.mxu0 0.0
  %1198 = vmatprep.subr.mxu0 0.0
  %1199 = vmatpush1.msra.mxu0 0.0
  %1200 = vmatprep.subr.mxu0 0.0
  %1201 = vmatpush1.msra.mxu0 0.0
  %1202 = vmatprep.subr.mxu0 0.0
  %1203 = vmatpush1.msra.mxu0 0.0
  %1204 = vmatprep.subr.mxu0 0.0
  %1205 = vmatpush1.msra.mxu0 0.0
  %1206 = vmatprep.subr.mxu0 0.0
  %1207 = vmatpush1.msra.mxu0 0.0
  %1208 = vmatprep.subr.mxu0 0.0
  %1209 = vmatpush1.msra.mxu0 0.0
  %1210 = vmatprep.subr.mxu0 0.0
  %1211 = vmatpush1.msra.mxu0 0.0
  %1212 = vmatprep.subr.mxu0 0.0
  %1213 = vmatpush1.msra.mxu0 0.0
  %1214 = vmatprep.mubr.f32.mxu0 0.0
  %1215 = vmatmul.mubr.f32.gmra.mrb[0].mxu0 %v1148
  %v1216 = vpop.f32.mrb[0].mxu0
  %v1217 = vadd.f32 0.0, %v1216
  %v1218 = vpop.f32.mrb[0].mxu0
  %1219 = vdwg.mxu0
  %1221 = vrot.lane.b32.xlu0 %v958, 32
  %v1222 = vpop.permute.xlu0 %1221
  %v1223 = vsel %vm50, %v1222, 0
  %1225 = vmatprep.subr.mxu0 0.0
  %1226 = vmatpush1.msra.mxu0 %v1140
  %1227 = vmatprep.subr.mxu0 0.0
  %1228 = vmatpush1.msra.mxu0 %v1141
  %1229 = vmatprep.subr.mxu0 0.0
  %1230 = vmatpush1.msra.mxu0 %v1142
  %1231 = vmatprep.subr.mxu0 0.0
  %1232 = vmatpush1.msra.mxu0 %v1143
  %1233 = vmatprep.subr.mxu0 0.0
  %1234 = vmatpush1.msra.mxu0 0.0
  %1235 = vmatprep.subr.mxu0 0.0
  %1236 = vmatpush1.msra.mxu0 0.0
  %1237 = vmatprep.subr.mxu0 0.0
  %1238 = vmatpush1.msra.mxu0 0.0
  %1239 = vmatprep.subr.mxu0 0.0
  %1240 = vmatpush1.msra.mxu0 0.0
  %1241 = vmatprep.subr.mxu0 0.0
  %1242 = vmatpush1.msra.mxu0 0.0
  %1243 = vmatprep.subr.mxu0 0.0
  %1244 = vmatpush1.msra.mxu0 0.0
  %1245 = vmatprep.subr.mxu0 0.0
  %1246 = vmatpush1.msra.mxu0 0.0
  %1247 = vmatprep.subr.mxu0 0.0
  %1248 = vmatpush1.msra.mxu0 0.0
  %1249 = vmatprep.subr.mxu0 0.0
  %1250 = vmatpush1.msra.mxu0 0.0
  %1251 = vmatprep.subr.mxu0 0.0
  %1252 = vmatpush1.msra.mxu0 0.0
  %1253 = vmatprep.subr.mxu0 0.0
  %1254 = vmatpush1.msra.mxu0 0.0
  %1255 = vmatprep.subr.mxu0 0.0
  %1256 = vmatpush1.msra.mxu0 0.0
  %1257 = vmatprep.subr.mxu0 0.0
  %1258 = vmatpush1.msra.mxu0 0.0
  %1259 = vmatprep.subr.mxu0 0.0
  %1260 = vmatpush1.msra.mxu0 0.0
  %1261 = vmatprep.subr.mxu0 0.0
  %1262 = vmatpush1.msra.mxu0 0.0
  %1263 = vmatprep.subr.mxu0 0.0
  %1264 = vmatpush1.msra.mxu0 0.0
  %1265 = vmatprep.subr.mxu0 0.0
  %1266 = vmatpush1.msra.mxu0 0.0
  %1267 = vmatprep.subr.mxu0 0.0
  %1268 = vmatpush1.msra.mxu0 0.0
  %1269 = vmatprep.subr.mxu0 0.0
  %1270 = vmatpush1.msra.mxu0 0.0
  %1271 = vmatprep.subr.mxu0 0.0
  %1272 = vmatpush1.msra.mxu0 0.0
  %1273 = vmatprep.subr.mxu0 0.0
  %1274 = vmatpush1.msra.mxu0 0.0
  %1275 = vmatprep.subr.mxu0 0.0
  %1276 = vmatpush1.msra.mxu0 0.0
  %1277 = vmatprep.subr.mxu0 0.0
  %1278 = vmatpush1.msra.mxu0 0.0
  %1279 = vmatprep.subr.mxu0 0.0
  %1280 = vmatpush1.msra.mxu0 0.0
  %1281 = vmatprep.subr.mxu0 0.0
  %1282 = vmatpush1.msra.mxu0 0.0
  %1283 = vmatprep.subr.mxu0 0.0
  %1284 = vmatpush1.msra.mxu0 0.0
  %1285 = vmatprep.subr.mxu0 0.0
  %1286 = vmatpush1.msra.mxu0 0.0
  %1287 = vmatprep.subr.mxu0 0.0
  %1288 = vmatpush1.msra.mxu0 0.0
  %1289 = vmatprep.mubr.f32.mxu0 0.0
  %1290 = vmatmul.mubr.f32.gmra.mrb[0].mxu0 %v1223
  %v1291 = vpop.f32.mrb[0].mxu0
  %v1292 = vadd.f32 %v1217, %v1291
  %v1293 = vpop.f32.mrb[0].mxu0
  %1294 = vdwg.mxu0
  %v1295 = vld [vmem:[%s9] sm:$0x1]
  %v1297 = vlaneseq
  %v1298 = vshrl.u32 %v1297, 7
  %v1299 = vsub.s32 0, %v1298
  %v1300 = vrot.slane %v1295, %v1299
  %v1302 = vadd.f32 %v1292, %v1300
  %v1303 = vxor.u32 %v1302, 2147483648
  %v1304 = vmul.f32 %v1303, 1.442695
  %v1305 = vpow.pop %v1304
  %v1306 = vadd.f32 %v1305, 1.0
  %v1307 = vrcp.pop %v1306
  %v1308 = vmul.f32 1.0, %v1307
  %v1309 = vtanh.pop %v1302
  %v1310 = vmul.f32 %v1308, %v762
  %1312 = vrot.lane.b32.xlu0 %v1309, 64
  %v1313 = vpop.permute.xlu0 %1312
  %v1315 = vmul.f32 %v1308, %v1313
  %1317 = vrot.lane.b32.xlu0 %v1315, 32
  %v1318 = vpop.permute.xlu0 %1317
  %v1320 = vadd.f32 %v1310, %v1318
  %v1321 = vtanh.pop %v1320
  %1323 = vrot.lane.b32.xlu0 %v1321, 64
  %v1324 = vpop.permute.xlu0 %1323
  %v1326 = vmul.f32 %v1308, %v1324
  %1328 = vrot.lane.b32.xlu0 %v1326, 64
  %v1329 = vpop.permute.xlu0 %1328
  %vm1331 = vcmask 523520
  %1332 = vst.msk [vmem:[#allocation2] sm:$0xff] %vm1331, %v1329
  %v1333 = vld [vmem:[%s4] sm:$0xff]
  %v1334 = vld [vmem:[%s4 + $0x8] sm:$0xff]
  %v1335 = vld [vmem:[%s4 + $0x10] sm:$0xff]
  %v1336 = vld [vmem:[%s4 + $0x18] sm:$0xff]
  %v1337 = vld [vmem:[%s5] sm:$0xff]
  %v1338 = vld [vmem:[%s5 + $0x8] sm:$0xff]
  %v1339 = vld [vmem:[%s5 + $0x10] sm:$0xff]
  %v1340 = vld [vmem:[%s5 + $0x18] sm:$0xff]
  %1341 = vmatprep.subr.mxu0 0.0
  %1342 = vmatpush1.msra.mxu0 %v1337
  %1343 = vmatprep.subr.mxu0 0.0
  %1344 = vmatpush1.msra.mxu0 %v1338
  %1345 = vmatprep.subr.mxu0 0.0
  %1346 = vmatpush1.msra.mxu0 %v1339
  %1347 = vmatprep.subr.mxu0 0.0
  %1348 = vmatpush1.msra.mxu0 %v1340
  %1349 = vmatprep.subr.mxu0 0.0
  %1350 = vmatpush1.msra.mxu0 0.0
  %1351 = vmatprep.subr.mxu0 0.0
  %1352 = vmatpush1.msra.mxu0 0.0
  %1353 = vmatprep.subr.mxu0 0.0
  %1354 = vmatpush1.msra.mxu0 0.0
  %1355 = vmatprep.subr.mxu0 0.0
  %1356 = vmatpush1.msra.mxu0 0.0
  %1357 = vmatprep.subr.mxu0 0.0
  %1358 = vmatpush1.msra.mxu0 0.0
  %1359 = vmatprep.subr.mxu0 0.0
  %1360 = vmatpush1.msra.mxu0 0.0
  %1361 = vmatprep.subr.mxu0 0.0
  %1362 = vmatpush1.msra.mxu0 0.0
  %1363 = vmatprep.subr.mxu0 0.0
  %1364 = vmatpush1.msra.mxu0 0.0
  %1365 = vmatprep.subr.mxu0 0.0
  %1366 = vmatpush1.msra.mxu0 0.0
  %1367 = vmatprep.subr.mxu0 0.0
  %1368 = vmatpush1.msra.mxu0 0.0
  %1369 = vmatprep.subr.mxu0 0.0
  %1370 = vmatpush1.msra.mxu0 0.0
  %1371 = vmatprep.subr.mxu0 0.0
  %1372 = vmatpush1.msra.mxu0 0.0
  %1373 = vmatprep.subr.mxu0 0.0
  %1374 = vmatpush1.msra.mxu0 0.0
  %1375 = vmatprep.subr.mxu0 0.0
  %1376 = vmatpush1.msra.mxu0 0.0
  %1377 = vmatprep.subr.mxu0 0.0
  %1378 = vmatpush1.msra.mxu0 0.0
  %1379 = vmatprep.subr.mxu0 0.0
  %1380 = vmatpush1.msra.mxu0 0.0
  %1381 = vmatprep.subr.mxu0 0.0
  %1382 = vmatpush1.msra.mxu0 0.0
  %1383 = vmatprep.subr.mxu0 0.0
  %1384 = vmatpush1.msra.mxu0 0.0
  %1385 = vmatprep.subr.mxu0 0.0
  %1386 = vmatpush1.msra.mxu0 0.0
  %1387 = vmatprep.subr.mxu0 0.0
  %1388 = vmatpush1.msra.mxu0 0.0
  %1389 = vmatprep.subr.mxu0 0.0
  %1390 = vmatpush1.msra.mxu0 0.0
  %1391 = vmatprep.subr.mxu0 0.0
  %1392 = vmatpush1.msra.mxu0 0.0
  %1393 = vmatprep.subr.mxu0 0.0
  %1394 = vmatpush1.msra.mxu0 0.0
  %1395 = vmatprep.subr.mxu0 0.0
  %1396 = vmatpush1.msra.mxu0 0.0
  %1397 = vmatprep.subr.mxu0 0.0
  %1398 = vmatpush1.msra.mxu0 0.0
  %1399 = vmatprep.subr.mxu0 0.0
  %1400 = vmatpush1.msra.mxu0 0.0
  %1401 = vmatprep.subr.mxu0 0.0
  %1402 = vmatpush1.msra.mxu0 0.0
  %1403 = vmatprep.subr.mxu0 0.0
  %1404 = vmatpush1.msra.mxu0 0.0
  %1405 = vmatprep.mubr.f32.mxu0 0.0
  %1406 = vmatmul.mubr.f32.gmra.mrb[0].mxu0 %v1223
  %v1407 = vpop.f32.mrb[0].mxu0
  %v1408 = vadd.f32 0.0, %v1407
  %v1409 = vpop.f32.mrb[0].mxu0
  %1410 = vdwg.mxu0
  %1412 = vrot.lane.b32.xlu0 %v1139, 32
  %v1413 = vpop.permute.xlu0 %1412
  %v1414 = vsel %vm50, %v1413, 0
  %1416 = vmatprep.subr.mxu0 0.0
  %1417 = vmatpush1.msra.mxu0 %v1333
  %1418 = vmatprep.subr.mxu0 0.0
  %1419 = vmatpush1.msra.mxu0 %v1334
  %1420 = vmatprep.subr.mxu0 0.0
  %1421 = vmatpush1.msra.mxu0 %v1335
  %1422 = vmatprep.subr.mxu0 0.0
  %1423 = vmatpush1.msra.mxu0 %v1336
  %1424 = vmatprep.subr.mxu0 0.0
  %1425 = vmatpush1.msra.mxu0 0.0
  %1426 = vmatprep.subr.mxu0 0.0
  %1427 = vmatpush1.msra.mxu0 0.0
  %1428 = vmatprep.subr.mxu0 0.0
  %1429 = vmatpush1.msra.mxu0 0.0
  %1430 = vmatprep.subr.mxu0 0.0
  %1431 = vmatpush1.msra.mxu0 0.0
  %1432 = vmatprep.subr.mxu0 0.0
  %1433 = vmatpush1.msra.mxu0 0.0
  %1434 = vmatprep.subr.mxu0 0.0
  %1435 = vmatpush1.msra.mxu0 0.0
  %1436 = vmatprep.subr.mxu0 0.0
  %1437 = vmatpush1.msra.mxu0 0.0
  %1438 = vmatprep.subr.mxu0 0.0
  %1439 = vmatpush1.msra.mxu0 0.0
  %1440 = vmatprep.subr.mxu0 0.0
  %1441 = vmatpush1.msra.mxu0 0.0
  %1442 = vmatprep.subr.mxu0 0.0
  %1443 = vmatpush1.msra.mxu0 0.0
  %1444 = vmatprep.subr.mxu0 0.0
  %1445 = vmatpush1.msra.mxu0 0.0
  %1446 = vmatprep.subr.mxu0 0.0
  %1447 = vmatpush1.msra.mxu0 0.0
  %1448 = vmatprep.subr.mxu0 0.0
  %1449 = vmatpush1.msra.mxu0 0.0
  %1450 = vmatprep.subr.mxu0 0.0
  %1451 = vmatpush1.msra.mxu0 0.0
  %1452 = vmatprep.subr.mxu0 0.0
  %1453 = vmatpush1.msra.mxu0 0.0
  %1454 = vmatprep.subr.mxu0 0.0
  %1455 = vmatpush1.msra.mxu0 0.0
  %1456 = vmatprep.subr.mxu0 0.0
  %1457 = vmatpush1.msra.mxu0 0.0
  %1458 = vmatprep.subr.mxu0 0.0
  %1459 = vmatpush1.msra.mxu0 0.0
  %1460 = vmatprep.subr.mxu0 0.0
  %1461 = vmatpush1.msra.mxu0 0.0
  %1462 = vmatprep.subr.mxu0 0.0
  %1463 = vmatpush1.msra.mxu0 0.0
  %1464 = vmatprep.subr.mxu0 0.0
  %1465 = vmatpush1.msra.mxu0 0.0
  %1466 = vmatprep.subr.mxu0 0.0
  %1467 = vmatpush1.msra.mxu0 0.0
  %1468 = vmatprep.subr.mxu0 0.0
  %1469 = vmatpush1.msra.mxu0 0.0
  %1470 = vmatprep.subr.mxu0 0.0
  %1471 = vmatpush1.msra.mxu0 0.0
  %1472 = vmatprep.subr.mxu0 0.0
  %1473 = vmatpush1.msra.mxu0 0.0
  %1474 = vmatprep.subr.mxu0 0.0
  %1475 = vmatpush1.msra.mxu0 0.0
  %1476 = vmatprep.subr.mxu0 0.0
  %1477 = vmatpush1.msra.mxu0 0.0
  %1478 = vmatprep.subr.mxu0 0.0
  %1479 = vmatpush1.msra.mxu0 0.0
  %1480 = vmatprep.mubr.f32.mxu0 0.0
  %1481 = vmatmul.mubr.f32.gmra.mrb[0].mxu0 %v1414
  %v1482 = vpop.f32.mrb[0].mxu0
  %v1483 = vadd.f32 %v1408, %v1482
  %v1484 = vpop.f32.mrb[0].mxu0
  %1485 = vdwg.mxu0
  %v1486 = vld [vmem:[%s6] sm:$0x1]
  %v1488 = vlaneseq
  %v1489 = vshrl.u32 %v1488, 7
  %v1490 = vsub.s32 0, %v1489
  %v1491 = vrot.slane %v1486, %v1490
  %v1493 = vadd.f32 %v1483, %v1491
  %v1494 = vxor.u32 %v1493, 2147483648
  %v1495 = vmul.f32 %v1494, 1.442695
  %v1496 = vpow.pop %v1495
  %v1497 = vadd.f32 %v1496, 1.0
  %v1498 = vrcp.pop %v1497
  %v1499 = vmul.f32 1.0, %v1498
  %v1500 = vtanh.pop %v1493
  %v1501 = vmul.f32 %v1499, %v952
  %1503 = vrot.lane.b32.xlu0 %v1500, 64
  %v1504 = vpop.permute.xlu0 %1503
  %v1506 = vmul.f32 %v1499, %v1504
  %1508 = vrot.lane.b32.xlu0 %v1506, 32
  %v1509 = vpop.permute.xlu0 %1508
  %v1511 = vadd.f32 %v1501, %v1509
  %v1512 = vtanh.pop %v1511
  %1514 = vrot.lane.b32.xlu0 %v1512, 64
  %v1515 = vpop.permute.xlu0 %1514
  %v1517 = vmul.f32 %v1499, %v1515
  %v1518 = vld [vmem:[%s0 + $0x18] sm:$0xff]
  %v1519 = vld [vmem:[%s1] sm:$0xff]
  %v1520 = vld [vmem:[%s2] sm:$0xff]
  %v1521 = vld [vmem:[%s2 + $0x8] sm:$0xff]
  %v1522 = vld [vmem:[%s2 + $0x10] sm:$0xff]
  %v1523 = vld [vmem:[%s2 + $0x18] sm:$0xff]
  %1524 = vmatprep.subr.mxu0 0.0
  %1525 = vmatpush1.msra.mxu0 %v1520
  %1526 = vmatprep.subr.mxu0 0.0
  %1527 = vmatpush1.msra.mxu0 %v1521
  %1528 = vmatprep.subr.mxu0 0.0
  %1529 = vmatpush1.msra.mxu0 %v1522
  %1530 = vmatprep.subr.mxu0 0.0
  %1531 = vmatpush1.msra.mxu0 %v1523
  %1532 = vmatprep.subr.mxu0 0.0
  %1533 = vmatpush1.msra.mxu0 0.0
  %1534 = vmatprep.subr.mxu0 0.0
  %1535 = vmatpush1.msra.mxu0 0.0
  %1536 = vmatprep.subr.mxu0 0.0
  %1537 = vmatpush1.msra.mxu0 0.0
  %1538 = vmatprep.subr.mxu0 0.0
  %1539 = vmatpush1.msra.mxu0 0.0
  %1540 = vmatprep.subr.mxu0 0.0
  %1541 = vmatpush1.msra.mxu0 0.0
  %1542 = vmatprep.subr.mxu0 0.0
  %1543 = vmatpush1.msra.mxu0 0.0
  %1544 = vmatprep.subr.mxu0 0.0
  %1545 = vmatpush1.msra.mxu0 0.0
  %1546 = vmatprep.subr.mxu0 0.0
  %1547 = vmatpush1.msra.mxu0 0.0
  %1548 = vmatprep.subr.mxu0 0.0
  %1549 = vmatpush1.msra.mxu0 0.0
  %1550 = vmatprep.subr.mxu0 0.0
  %1551 = vmatpush1.msra.mxu0 0.0
  %1552 = vmatprep.subr.mxu0 0.0
  %1553 = vmatpush1.msra.mxu0 0.0
  %1554 = vmatprep.subr.mxu0 0.0
  %1555 = vmatpush1.msra.mxu0 0.0
  %1556 = vmatprep.subr.mxu0 0.0
  %1557 = vmatpush1.msra.mxu0 0.0
  %1558 = vmatprep.subr.mxu0 0.0
  %1559 = vmatpush1.msra.mxu0 0.0
  %1560 = vmatprep.subr.mxu0 0.0
  %1561 = vmatpush1.msra.mxu0 0.0
  %1562 = vmatprep.subr.mxu0 0.0
  %1563 = vmatpush1.msra.mxu0 0.0
  %1564 = vmatprep.subr.mxu0 0.0
  %1565 = vmatpush1.msra.mxu0 0.0
  %1566 = vmatprep.subr.mxu0 0.0
  %1567 = vmatpush1.msra.mxu0 0.0
  %1568 = vmatprep.subr.mxu0 0.0
  %1569 = vmatpush1.msra.mxu0 0.0
  %1570 = vmatprep.subr.mxu0 0.0
  %1571 = vmatpush1.msra.mxu0 0.0
  %1572 = vmatprep.subr.mxu0 0.0
  %1573 = vmatpush1.msra.mxu0 0.0
  %1574 = vmatprep.subr.mxu0 0.0
  %1575 = vmatpush1.msra.mxu0 0.0
  %1576 = vmatprep.subr.mxu0 0.0
  %1577 = vmatpush1.msra.mxu0 0.0
  %1578 = vmatprep.subr.mxu0 0.0
  %1579 = vmatpush1.msra.mxu0 0.0
  %1580 = vmatprep.subr.mxu0 0.0
  %1581 = vmatpush1.msra.mxu0 0.0
  %1582 = vmatprep.subr.mxu0 0.0
  %1583 = vmatpush1.msra.mxu0 0.0
  %1584 = vmatprep.subr.mxu0 0.0
  %1585 = vmatpush1.msra.mxu0 0.0
  %1586 = vmatprep.subr.mxu0 0.0
  %1587 = vmatpush1.msra.mxu0 0.0
  %1588 = vmatprep.mubr.f32.mxu0 0.0
  %1589 = vmatmul.mubr.f32.gmra.mrb[0].mxu0 %v1414
  %v1590 = vpop.f32.mrb[0].mxu0
  %v1591 = vadd.f32 0.0, %v1590
  %v1592 = vpop.f32.mrb[0].mxu0
  %1593 = vdwg.mxu0
  %v1595 = vsel %vm124, %v1518, 0
  %1597 = vmatprep.subr.mxu0 0.0
  %1598 = vmatpush1.msra.mxu0 %v1519
  %1599 = vmatprep.subr.mxu0 0.0
  %1600 = vmatpush1.msra.mxu0 0.0
  %1601 = vmatprep.subr.mxu0 0.0
  %1602 = vmatpush1.msra.mxu0 0.0
  %1603 = vmatprep.subr.mxu0 0.0
  %1604 = vmatpush1.msra.mxu0 0.0
  %1605 = vmatprep.subr.mxu0 0.0
  %1606 = vmatpush1.msra.mxu0 0.0
  %1607 = vmatprep.subr.mxu0 0.0
  %1608 = vmatpush1.msra.mxu0 0.0
  %1609 = vmatprep.subr.mxu0 0.0
  %1610 = vmatpush1.msra.mxu0 0.0
  %1611 = vmatprep.subr.mxu0 0.0
  %1612 = vmatpush1.msra.mxu0 0.0
  %1613 = vmatprep.subr.mxu0 0.0
  %1614 = vmatpush1.msra.mxu0 0.0
  %1615 = vmatprep.subr.mxu0 0.0
  %1616 = vmatpush1.msra.mxu0 0.0
  %1617 = vmatprep.subr.mxu0 0.0
  %1618 = vmatpush1.msra.mxu0 0.0
  %1619 = vmatprep.subr.mxu0 0.0
  %1620 = vmatpush1.msra.mxu0 0.0
  %1621 = vmatprep.subr.mxu0 0.0
  %1622 = vmatpush1.msra.mxu0 0.0
  %1623 = vmatprep.subr.mxu0 0.0
  %1624 = vmatpush1.msra.mxu0 0.0
  %1625 = vmatprep.subr.mxu0 0.0
  %1626 = vmatpush1.msra.mxu0 0.0
  %1627 = vmatprep.subr.mxu0 0.0
  %1628 = vmatpush1.msra.mxu0 0.0
  %1629 = vmatprep.subr.mxu0 0.0
  %1630 = vmatpush1.msra.mxu0 0.0
  %1631 = vmatprep.subr.mxu0 0.0
  %1632 = vmatpush1.msra.mxu0 0.0
  %1633 = vmatprep.subr.mxu0 0.0
  %1634 = vmatpush1.msra.mxu0 0.0
  %1635 = vmatprep.subr.mxu0 0.0
  %1636 = vmatpush1.msra.mxu0 0.0
  %1637 = vmatprep.subr.mxu0 0.0
  %1638 = vmatpush1.msra.mxu0 0.0
  %1639 = vmatprep.subr.mxu0 0.0
  %1640 = vmatpush1.msra.mxu0 0.0
  %1641 = vmatprep.subr.mxu0 0.0
  %1642 = vmatpush1.msra.mxu0 0.0
  %1643 = vmatprep.subr.mxu0 0.0
  %1644 = vmatpush1.msra.mxu0 0.0
  %1645 = vmatprep.subr.mxu0 0.0
  %1646 = vmatpush1.msra.mxu0 0.0
  %1647 = vmatprep.subr.mxu0 0.0
  %1648 = vmatpush1.msra.mxu0 0.0
  %1649 = vmatprep.subr.mxu0 0.0
  %1650 = vmatpush1.msra.mxu0 0.0
  %1651 = vmatprep.subr.mxu0 0.0
  %1652 = vmatpush1.msra.mxu0 0.0
  %1653 = vmatprep.subr.mxu0 0.0
  %1654 = vmatpush1.msra.mxu0 0.0
  %1655 = vmatprep.subr.mxu0 0.0
  %1656 = vmatpush1.msra.mxu0 0.0
  %1657 = vmatprep.subr.mxu0 0.0
  %1658 = vmatpush1.msra.mxu0 0.0
  %1659 = vmatprep.subr.mxu0 0.0
  %1660 = vmatpush1.msra.mxu0 0.0
  %1661 = vmatprep.mubr.f32.mxu0 0.0
  %1662 = vmatmul.mubr.f32.gmra.mrb[0].mxu0 %v1595
  %v1663 = vpop.f32.mrb[0].mxu0
  %v1664 = vadd.f32 %v1591, %v1663
  %v1665 = vpop.f32.mrb[0].mxu0
  %1666 = vdwg.mxu0
  %v1667 = vld [vmem:[%s3] sm:$0x1]
  %v1669 = vlaneseq
  %v1670 = vshrl.u32 %v1669, 7
  %v1671 = vsub.s32 0, %v1670
  %v1672 = vrot.slane %v1667, %v1671
  %v1674 = vadd.f32 %v1664, %v1672
  %v1675 = vxor.u32 %v1674, 2147483648
  %v1676 = vmul.f32 %v1675, 1.442695
  %v1677 = vpow.pop %v1676
  %v1678 = vadd.f32 %v1677, 1.0
  %v1679 = vrcp.pop %v1678
  %v1680 = vmul.f32 1.0, %v1679
  %v1681 = vtanh.pop %v1674
  %v1682 = vmul.f32 %v1680, %v1133
  %1684 = vrot.lane.b32.xlu0 %v1681, 64
  %v1685 = vpop.permute.xlu0 %1684
  %v1687 = vmul.f32 %v1680, %v1685
  %1689 = vrot.lane.b32.xlu0 %v1687, 32
  %v1690 = vpop.permute.xlu0 %1689
  %v1692 = vadd.f32 %v1682, %v1690
  %v1693 = vtanh.pop %v1692
  %1695 = vrot.lane.b32.xlu0 %v1693, 64
  %v1696 = vpop.permute.xlu0 %1695
  %v1698 = vmul.f32 %v1680, %v1696
  %v1699 = vld [vmem:[%s7] sm:$0xff]
  %v1700 = vld [vmem:[%s7 + $0x8] sm:$0xff]
  %v1701 = vld [vmem:[%s7 + $0x10] sm:$0xff]
  %v1702 = vld [vmem:[%s7 + $0x18] sm:$0xff]
  %v1703 = vld [vmem:[%s8] sm:$0xff]
  %v1704 = vld [vmem:[%s8 + $0x8] sm:$0xff]
  %v1705 = vld [vmem:[%s8 + $0x10] sm:$0xff]
  %v1706 = vld [vmem:[%s8 + $0x18] sm:$0xff]
  %1707 = vrot.lane.b32.xlu0 %v1326, 32
  %v1708 = vpop.permute.xlu0 %1707
  %v1709 = vsel %vm50, %v1708, 0
  %1711 = vmatprep.subr.mxu0 0.0
  %1712 = vmatpush1.msra.mxu0 %v1703
  %1713 = vmatprep.subr.mxu0 0.0
  %1714 = vmatpush1.msra.mxu0 %v1704
  %1715 = vmatprep.subr.mxu0 0.0
  %1716 = vmatpush1.msra.mxu0 %v1705
  %1717 = vmatprep.subr.mxu0 0.0
  %1718 = vmatpush1.msra.mxu0 %v1706
  %1719 = vmatprep.subr.mxu0 0.0
  %1720 = vmatpush1.msra.mxu0 0.0
  %1721 = vmatprep.subr.mxu0 0.0
  %1722 = vmatpush1.msra.mxu0 0.0
  %1723 = vmatprep.subr.mxu0 0.0
  %1724 = vmatpush1.msra.mxu0 0.0
  %1725 = vmatprep.subr.mxu0 0.0
  %1726 = vmatpush1.msra.mxu0 0.0
  %1727 = vmatprep.subr.mxu0 0.0
  %1728 = vmatpush1.msra.mxu0 0.0
  %1729 = vmatprep.subr.mxu0 0.0
  %1730 = vmatpush1.msra.mxu0 0.0
  %1731 = vmatprep.subr.mxu0 0.0
  %1732 = vmatpush1.msra.mxu0 0.0
  %1733 = vmatprep.subr.mxu0 0.0
  %1734 = vmatpush1.msra.mxu0 0.0
  %1735 = vmatprep.subr.mxu0 0.0
  %1736 = vmatpush1.msra.mxu0 0.0
  %1737 = vmatprep.subr.mxu0 0.0
  %1738 = vmatpush1.msra.mxu0 0.0
  %1739 = vmatprep.subr.mxu0 0.0
  %1740 = vmatpush1.msra.mxu0 0.0
  %1741 = vmatprep.subr.mxu0 0.0
  %1742 = vmatpush1.msra.mxu0 0.0
  %1743 = vmatprep.subr.mxu0 0.0
  %1744 = vmatpush1.msra.mxu0 0.0
  %1745 = vmatprep.subr.mxu0 0.0
  %1746 = vmatpush1.msra.mxu0 0.0
  %1747 = vmatprep.subr.mxu0 0.0
  %1748 = vmatpush1.msra.mxu0 0.0
  %1749 = vmatprep.subr.mxu0 0.0
  %1750 = vmatpush1.msra.mxu0 0.0
  %1751 = vmatprep.subr.mxu0 0.0
  %1752 = vmatpush1.msra.mxu0 0.0
  %1753 = vmatprep.subr.mxu0 0.0
  %1754 = vmatpush1.msra.mxu0 0.0
  %1755 = vmatprep.subr.mxu0 0.0
  %1756 = vmatpush1.msra.mxu0 0.0
  %1757 = vmatprep.subr.mxu0 0.0
  %1758 = vmatpush1.msra.mxu0 0.0
  %1759 = vmatprep.subr.mxu0 0.0
  %1760 = vmatpush1.msra.mxu0 0.0
  %1761 = vmatprep.subr.mxu0 0.0
  %1762 = vmatpush1.msra.mxu0 0.0
  %1763 = vmatprep.subr.mxu0 0.0
  %1764 = vmatpush1.msra.mxu0 0.0
  %1765 = vmatprep.subr.mxu0 0.0
  %1766 = vmatpush1.msra.mxu0 0.0
  %1767 = vmatprep.subr.mxu0 0.0
  %1768 = vmatpush1.msra.mxu0 0.0
  %1769 = vmatprep.subr.mxu0 0.0
  %1770 = vmatpush1.msra.mxu0 0.0
  %1771 = vmatprep.subr.mxu0 0.0
  %1772 = vmatpush1.msra.mxu0 0.0
  %1773 = vmatprep.subr.mxu0 0.0
  %1774 = vmatpush1.msra.mxu0 0.0
  %1775 = vmatprep.mubr.f32.mxu0 0.0
  %1776 = vmatmul.mubr.f32.gmra.mrb[0].mxu0 %v1709
  %v1777 = vpop.f32.mrb[0].mxu0
  %v1778 = vadd.f32 0.0, %v1777
  %v1779 = vpop.f32.mrb[0].mxu0
  %1780 = vdwg.mxu0
  %1782 = vrot.lane.b32.xlu0 %v1517, 32
  %v1783 = vpop.permute.xlu0 %1782
  %v1784 = vsel %vm50, %v1783, 0
  %1786 = vmatprep.subr.mxu0 0.0
  %1787 = vmatpush1.msra.mxu0 %v1699
  %1788 = vmatprep.subr.mxu0 0.0
  %1789 = vmatpush1.msra.mxu0 %v1700
  %1790 = vmatprep.subr.mxu0 0.0
  %1791 = vmatpush1.msra.mxu0 %v1701
  %1792 = vmatprep.subr.mxu0 0.0
  %1793 = vmatpush1.msra.mxu0 %v1702
  %1794 = vmatprep.subr.mxu0 0.0
  %1795 = vmatpush1.msra.mxu0 0.0
  %1796 = vmatprep.subr.mxu0 0.0
  %1797 = vmatpush1.msra.mxu0 0.0
  %1798 = vmatprep.subr.mxu0 0.0
  %1799 = vmatpush1.msra.mxu0 0.0
  %1800 = vmatprep.subr.mxu0 0.0
  %1801 = vmatpush1.msra.mxu0 0.0
  %1802 = vmatprep.subr.mxu0 0.0
  %1803 = vmatpush1.msra.mxu0 0.0
  %1804 = vmatprep.subr.mxu0 0.0
  %1805 = vmatpush1.msra.mxu0 0.0
  %1806 = vmatprep.subr.mxu0 0.0
  %1807 = vmatpush1.msra.mxu0 0.0
  %1808 = vmatprep.subr.mxu0 0.0
  %1809 = vmatpush1.msra.mxu0 0.0
  %1810 = vmatprep.subr.mxu0 0.0
  %1811 = vmatpush1.msra.mxu0 0.0
  %1812 = vmatprep.subr.mxu0 0.0
  %1813 = vmatpush1.msra.mxu0 0.0
  %1814 = vmatprep.subr.mxu0 0.0
  %1815 = vmatpush1.msra.mxu0 0.0
  %1816 = vmatprep.subr.mxu0 0.0
  %1817 = vmatpush1.msra.mxu0 0.0
  %1818 = vmatprep.subr.mxu0 0.0
  %1819 = vmatpush1.msra.mxu0 0.0
  %1820 = vmatprep.subr.mxu0 0.0
  %1821 = vmatpush1.msra.mxu0 0.0
  %1822 = vmatprep.subr.mxu0 0.0
  %1823 = vmatpush1.msra.mxu0 0.0
  %1824 = vmatprep.subr.mxu0 0.0
  %1825 = vmatpush1.msra.mxu0 0.0
  %1826 = vmatprep.subr.mxu0 0.0
  %1827 = vmatpush1.msra.mxu0 0.0
  %1828 = vmatprep.subr.mxu0 0.0
  %1829 = vmatpush1.msra.mxu0 0.0
  %1830 = vmatprep.subr.mxu0 0.0
  %1831 = vmatpush1.msra.mxu0 0.0
  %1832 = vmatprep.subr.mxu0 0.0
  %1833 = vmatpush1.msra.mxu0 0.0
  %1834 = vmatprep.subr.mxu0 0.0
  %1835 = vmatpush1.msra.mxu0 0.0
  %1836 = vmatprep.subr.mxu0 0.0
  %1837 = vmatpush1.msra.mxu0 0.0
  %1838 = vmatprep.subr.mxu0 0.0
  %1839 = vmatpush1.msra.mxu0 0.0
  %1840 = vmatprep.subr.mxu0 0.0
  %1841 = vmatpush1.msra.mxu0 0.0
  %1842 = vmatprep.subr.mxu0 0.0
  %1843 = vmatpush1.msra.mxu0 0.0
  %1844 = vmatprep.subr.mxu0 0.0
  %1845 = vmatpush1.msra.mxu0 0.0
  %1846 = vmatprep.subr.mxu0 0.0
  %1847 = vmatpush1.msra.mxu0 0.0
  %1848 = vmatprep.subr.mxu0 0.0
  %1849 = vmatpush1.msra.mxu0 0.0
  %1850 = vmatprep.mubr.f32.mxu0 0.0
  %1851 = vmatmul.mubr.f32.gmra.mrb[0].mxu0 %v1784
  %v1852 = vpop.f32.mrb[0].mxu0
  %v1853 = vadd.f32 %v1778, %v1852
  %v1854 = vpop.f32.mrb[0].mxu0
  %1855 = vdwg.mxu0
  %v1856 = vld [vmem:[%s9] sm:$0x1]
  %v1858 = vlaneseq
  %v1859 = vshrl.u32 %v1858, 7
  %v1860 = vsub.s32 0, %v1859
  %v1861 = vrot.slane %v1856, %v1860
  %v1863 = vadd.f32 %v1853, %v1861
  %v1864 = vxor.u32 %v1863, 2147483648
  %v1865 = vmul.f32 %v1864, 1.442695
  %v1866 = vpow.pop %v1865
  %v1867 = vadd.f32 %v1866, 1.0
  %v1868 = vrcp.pop %v1867
  %v1869 = vmul.f32 1.0, %v1868
  %v1870 = vtanh.pop %v1863
  %v1871 = vmul.f32 %v1869, %v1320
  %1873 = vrot.lane.b32.xlu0 %v1870, 64
  %v1874 = vpop.permute.xlu0 %1873
  %v1876 = vmul.f32 %v1869, %v1874
  %1878 = vrot.lane.b32.xlu0 %v1876, 32
  %v1879 = vpop.permute.xlu0 %1878
  %v1881 = vadd.f32 %v1871, %v1879
  %v1882 = vtanh.pop %v1881
  %1884 = vrot.lane.b32.xlu0 %v1882, 64
  %v1885 = vpop.permute.xlu0 %1884
  %v1887 = vmul.f32 %v1869, %v1885
  %1889 = vrot.lane.b32.xlu0 %v1887, 96
  %v1890 = vpop.permute.xlu0 %1889
  %vm1892 = vcmask 785920
  %1893 = vst.msk [vmem:[#allocation2] sm:$0xff] %vm1892, %v1890
  %v1894 = vld [vmem:[%s4] sm:$0xff]
  %v1895 = vld [vmem:[%s4 + $0x8] sm:$0xff]
  %v1896 = vld [vmem:[%s4 + $0x10] sm:$0xff]
  %v1897 = vld [vmem:[%s4 + $0x18] sm:$0xff]
  %v1898 = vld [vmem:[%s5] sm:$0xff]
  %v1899 = vld [vmem:[%s5 + $0x8] sm:$0xff]
  %v1900 = vld [vmem:[%s5 + $0x10] sm:$0xff]
  %v1901 = vld [vmem:[%s5 + $0x18] sm:$0xff]
  %1902 = vmatprep.subr.mxu0 0.0
  %1903 = vmatpush1.msra.mxu0 %v1898
  %1904 = vmatprep.subr.mxu0 0.0
  %1905 = vmatpush1.msra.mxu0 %v1899
  %1906 = vmatprep.subr.mxu0 0.0
  %1907 = vmatpush1.msra.mxu0 %v1900
  %1908 = vmatprep.subr.mxu0 0.0
  %1909 = vmatpush1.msra.mxu0 %v1901
  %1910 = vmatprep.subr.mxu0 0.0
  %1911 = vmatpush1.msra.mxu0 0.0
  %1912 = vmatprep.subr.mxu0 0.0
  %1913 = vmatpush1.msra.mxu0 0.0
  %1914 = vmatprep.subr.mxu0 0.0
  %1915 = vmatpush1.msra.mxu0 0.0
  %1916 = vmatprep.subr.mxu0 0.0
  %1917 = vmatpush1.msra.mxu0 0.0
  %1918 = vmatprep.subr.mxu0 0.0
  %1919 = vmatpush1.msra.mxu0 0.0
  %1920 = vmatprep.subr.mxu0 0.0
  %1921 = vmatpush1.msra.mxu0 0.0
  %1922 = vmatprep.subr.mxu0 0.0
  %1923 = vmatpush1.msra.mxu0 0.0
  %1924 = vmatprep.subr.mxu0 0.0
  %1925 = vmatpush1.msra.mxu0 0.0
  %1926 = vmatprep.subr.mxu0 0.0
  %1927 = vmatpush1.msra.mxu0 0.0
  %1928 = vmatprep.subr.mxu0 0.0
  %1929 = vmatpush1.msra.mxu0 0.0
  %1930 = vmatprep.subr.mxu0 0.0
  %1931 = vmatpush1.msra.mxu0 0.0
  %1932 = vmatprep.subr.mxu0 0.0
  %1933 = vmatpush1.msra.mxu0 0.0
  %1934 = vmatprep.subr.mxu0 0.0
  %1935 = vmatpush1.msra.mxu0 0.0
  %1936 = vmatprep.subr.mxu0 0.0
  %1937 = vmatpush1.msra.mxu0 0.0
  %1938 = vmatprep.subr.mxu0 0.0
  %1939 = vmatpush1.msra.mxu0 0.0
  %1940 = vmatprep.subr.mxu0 0.0
  %1941 = vmatpush1.msra.mxu0 0.0
  %1942 = vmatprep.subr.mxu0 0.0
  %1943 = vmatpush1.msra.mxu0 0.0
  %1944 = vmatprep.subr.mxu0 0.0
  %1945 = vmatpush1.msra.mxu0 0.0
  %1946 = vmatprep.subr.mxu0 0.0
  %1947 = vmatpush1.msra.mxu0 0.0
  %1948 = vmatprep.subr.mxu0 0.0
  %1949 = vmatpush1.msra.mxu0 0.0
  %1950 = vmatprep.subr.mxu0 0.0
  %1951 = vmatpush1.msra.mxu0 0.0
  %1952 = vmatprep.subr.mxu0 0.0
  %1953 = vmatpush1.msra.mxu0 0.0
  %1954 = vmatprep.subr.mxu0 0.0
  %1955 = vmatpush1.msra.mxu0 0.0
  %1956 = vmatprep.subr.mxu0 0.0
  %1957 = vmatpush1.msra.mxu0 0.0
  %1958 = vmatprep.subr.mxu0 0.0
  %1959 = vmatpush1.msra.mxu0 0.0
  %1960 = vmatprep.subr.mxu0 0.0
  %1961 = vmatpush1.msra.mxu0 0.0
  %1962 = vmatprep.subr.mxu0 0.0
  %1963 = vmatpush1.msra.mxu0 0.0
  %1964 = vmatprep.subr.mxu0 0.0
  %1965 = vmatpush1.msra.mxu0 0.0
  %1966 = vmatprep.mubr.f32.mxu0 0.0
  %1967 = vmatmul.mubr.f32.gmra.mrb[0].mxu0 %v1784
  %v1968 = vpop.f32.mrb[0].mxu0
  %v1969 = vadd.f32 0.0, %v1968
  %v1970 = vpop.f32.mrb[0].mxu0
  %1971 = vdwg.mxu0
  %1973 = vrot.lane.b32.xlu0 %v1698, 32
  %v1974 = vpop.permute.xlu0 %1973
  %v1975 = vsel %vm50, %v1974, 0
  %1977 = vmatprep.subr.mxu0 0.0
  %1978 = vmatpush1.msra.mxu0 %v1894
  %1979 = vmatprep.subr.mxu0 0.0
  %1980 = vmatpush1.msra.mxu0 %v1895
  %1981 = vmatprep.subr.mxu0 0.0
  %1982 = vmatpush1.msra.mxu0 %v1896
  %1983 = vmatprep.subr.mxu0 0.0
  %1984 = vmatpush1.msra.mxu0 %v1897
  %1985 = vmatprep.subr.mxu0 0.0
  %1986 = vmatpush1.msra.mxu0 0.0
  %1987 = vmatprep.subr.mxu0 0.0
  %1988 = vmatpush1.msra.mxu0 0.0
  %1989 = vmatprep.subr.mxu0 0.0
  %1990 = vmatpush1.msra.mxu0 0.0
  %1991 = vmatprep.subr.mxu0 0.0
  %1992 = vmatpush1.msra.mxu0 0.0
  %1993 = vmatprep.subr.mxu0 0.0
  %1994 = vmatpush1.msra.mxu0 0.0
  %1995 = vmatprep.subr.mxu0 0.0
  %1996 = vmatpush1.msra.mxu0 0.0
  %1997 = vmatprep.subr.mxu0 0.0
  %1998 = vmatpush1.msra.mxu0 0.0
  %1999 = vmatprep.subr.mxu0 0.0
  %2000 = vmatpush1.msra.mxu0 0.0
  %2001 = vmatprep.subr.mxu0 0.0
  %2002 = vmatpush1.msra.mxu0 0.0
  %2003 = vmatprep.subr.mxu0 0.0
  %2004 = vmatpush1.msra.mxu0 0.0
  %2005 = vmatprep.subr.mxu0 0.0
  %2006 = vmatpush1.msra.mxu0 0.0
  %2007 = vmatprep.subr.mxu0 0.0
  %2008 = vmatpush1.msra.mxu0 0.0
  %2009 = vmatprep.subr.mxu0 0.0
  %2010 = vmatpush1.msra.mxu0 0.0
  %2011 = vmatprep.subr.mxu0 0.0
  %2012 = vmatpush1.msra.mxu0 0.0
  %2013 = vmatprep.subr.mxu0 0.0
  %2014 = vmatpush1.msra.mxu0 0.0
  %2015 = vmatprep.subr.mxu0 0.0
  %2016 = vmatpush1.msra.mxu0 0.0
  %2017 = vmatprep.subr.mxu0 0.0
  %2018 = vmatpush1.msra.mxu0 0.0
  %2019 = vmatprep.subr.mxu0 0.0
  %2020 = vmatpush1.msra.mxu0 0.0
  %2021 = vmatprep.subr.mxu0 0.0
  %2022 = vmatpush1.msra.mxu0 0.0
  %2023 = vmatprep.subr.mxu0 0.0
  %2024 = vmatpush1.msra.mxu0 0.0
  %2025 = vmatprep.subr.mxu0 0.0
  %2026 = vmatpush1.msra.mxu0 0.0
  %2027 = vmatprep.subr.mxu0 0.0
  %2028 = vmatpush1.msra.mxu0 0.0
  %2029 = vmatprep.subr.mxu0 0.0
  %2030 = vmatpush1.msra.mxu0 0.0
  %2031 = vmatprep.subr.mxu0 0.0
  %2032 = vmatpush1.msra.mxu0 0.0
  %2033 = vmatprep.subr.mxu0 0.0
  %2034 = vmatpush1.msra.mxu0 0.0
  %2035 = vmatprep.subr.mxu0 0.0
  %2036 = vmatpush1.msra.mxu0 0.0
  %2037 = vmatprep.subr.mxu0 0.0
  %2038 = vmatpush1.msra.mxu0 0.0
  %2039 = vmatprep.subr.mxu0 0.0
  %2040 = vmatpush1.msra.mxu0 0.0
  %2041 = vmatprep.mubr.f32.mxu0 0.0
  %2042 = vmatmul.mubr.f32.gmra.mrb[0].mxu0 %v1975
  %v2043 = vpop.f32.mrb[0].mxu0
  %v2044 = vadd.f32 %v1969, %v2043
  %v2045 = vpop.f32.mrb[0].mxu0
  %2046 = vdwg.mxu0
  %v2047 = vld [vmem:[%s6] sm:$0x1]
  %v2049 = vlaneseq
  %v2050 = vshrl.u32 %v2049, 7
  %v2051 = vsub.s32 0, %v2050
  %v2052 = vrot.slane %v2047, %v2051
  %v2054 = vadd.f32 %v2044, %v2052
  %v2055 = vxor.u32 %v2054, 2147483648
  %v2056 = vmul.f32 %v2055, 1.442695
  %v2057 = vpow.pop %v2056
  %v2058 = vadd.f32 %v2057, 1.0
  %v2059 = vrcp.pop %v2058
  %v2060 = vmul.f32 1.0, %v2059
  %v2061 = vtanh.pop %v2054
  %v2062 = vmul.f32 %v2060, %v1511
  %2064 = vrot.lane.b32.xlu0 %v2061, 64
  %v2065 = vpop.permute.xlu0 %2064
  %v2067 = vmul.f32 %v2060, %v2065
  %2069 = vrot.lane.b32.xlu0 %v2067, 32
  %v2070 = vpop.permute.xlu0 %2069
  %v2072 = vadd.f32 %v2062, %v2070
  %v2073 = vtanh.pop %v2072
  %2075 = vrot.lane.b32.xlu0 %v2073, 64
  %v2076 = vpop.permute.xlu0 %2075
  %v2078 = vmul.f32 %v2060, %v2076
  %v2079 = vld [vmem:[%s0 + $0x20] sm:$0xff]
  %v2080 = vld [vmem:[%s1] sm:$0xff]
  %v2081 = vld [vmem:[%s2] sm:$0xff]
  %v2082 = vld [vmem:[%s2 + $0x8] sm:$0xff]
  %v2083 = vld [vmem:[%s2 + $0x10] sm:$0xff]
  %v2084 = vld [vmem:[%s2 + $0x18] sm:$0xff]
  %2085 = vmatprep.subr.mxu0 0.0
  %2086 = vmatpush1.msra.mxu0 %v2081
  %2087 = vmatprep.subr.mxu0 0.0
  %2088 = vmatpush1.msra.mxu0 %v2082
  %2089 = vmatprep.subr.mxu0 0.0
  %2090 = vmatpush1.msra.mxu0 %v2083
  %2091 = vmatprep.subr.mxu0 0.0
  %2092 = vmatpush1.msra.mxu0 %v2084
  %2093 = vmatprep.subr.mxu0 0.0
  %2094 = vmatpush1.msra.mxu0 0.0
  %2095 = vmatprep.subr.mxu0 0.0
  %2096 = vmatpush1.msra.mxu0 0.0
  %2097 = vmatprep.subr.mxu0 0.0
  %2098 = vmatpush1.msra.mxu0 0.0
  %2099 = vmatprep.subr.mxu0 0.0
  %2100 = vmatpush1.msra.mxu0 0.0
  %2101 = vmatprep.subr.mxu0 0.0
  %2102 = vmatpush1.msra.mxu0 0.0
  %2103 = vmatprep.subr.mxu0 0.0
  %2104 = vmatpush1.msra.mxu0 0.0
  %2105 = vmatprep.subr.mxu0 0.0
  %2106 = vmatpush1.msra.mxu0 0.0
  %2107 = vmatprep.subr.mxu0 0.0
  %2108 = vmatpush1.msra.mxu0 0.0
  %2109 = vmatprep.subr.mxu0 0.0
  %2110 = vmatpush1.msra.mxu0 0.0
  %2111 = vmatprep.subr.mxu0 0.0
  %2112 = vmatpush1.msra.mxu0 0.0
  %2113 = vmatprep.subr.mxu0 0.0
  %2114 = vmatpush1.msra.mxu0 0.0
  %2115 = vmatprep.subr.mxu0 0.0
  %2116 = vmatpush1.msra.mxu0 0.0
  %2117 = vmatprep.subr.mxu0 0.0
  %2118 = vmatpush1.msra.mxu0 0.0
  %2119 = vmatprep.subr.mxu0 0.0
  %2120 = vmatpush1.msra.mxu0 0.0
  %2121 = vmatprep.subr.mxu0 0.0
  %2122 = vmatpush1.msra.mxu0 0.0
  %2123 = vmatprep.subr.mxu0 0.0
  %2124 = vmatpush1.msra.mxu0 0.0
  %2125 = vmatprep.subr.mxu0 0.0
  %2126 = vmatpush1.msra.mxu0 0.0
  %2127 = vmatprep.subr.mxu0 0.0
  %2128 = vmatpush1.msra.mxu0 0.0
  %2129 = vmatprep.subr.mxu0 0.0
  %2130 = vmatpush1.msra.mxu0 0.0
  %2131 = vmatprep.subr.mxu0 0.0
  %2132 = vmatpush1.msra.mxu0 0.0
  %2133 = vmatprep.subr.mxu0 0.0
  %2134 = vmatpush1.msra.mxu0 0.0
  %2135 = vmatprep.subr.mxu0 0.0
  %2136 = vmatpush1.msra.mxu0 0.0
  %2137 = vmatprep.subr.mxu0 0.0
  %2138 = vmatpush1.msra.mxu0 0.0
  %2139 = vmatprep.subr.mxu0 0.0
  %2140 = vmatpush1.msra.mxu0 0.0
  %2141 = vmatprep.subr.mxu0 0.0
  %2142 = vmatpush1.msra.mxu0 0.0
  %2143 = vmatprep.subr.mxu0 0.0
  %2144 = vmatpush1.msra.mxu0 0.0
  %2145 = vmatprep.subr.mxu0 0.0
  %2146 = vmatpush1.msra.mxu0 0.0
  %2147 = vmatprep.subr.mxu0 0.0
  %2148 = vmatpush1.msra.mxu0 0.0
  %2149 = vmatprep.mubr.f32.mxu0 0.0
  %2150 = vmatmul.mubr.f32.gmra.mrb[0].mxu0 %v1975
  %v2151 = vpop.f32.mrb[0].mxu0
  %v2152 = vadd.f32 0.0, %v2151
  %v2153 = vpop.f32.mrb[0].mxu0
  %2154 = vdwg.mxu0
  %v2156 = vsel %vm124, %v2079, 0
  %2158 = vmatprep.subr.mxu0 0.0
  %2159 = vmatpush1.msra.mxu0 %v2080
  %2160 = vmatprep.subr.mxu0 0.0
  %2161 = vmatpush1.msra.mxu0 0.0
  %2162 = vmatprep.subr.mxu0 0.0
  %2163 = vmatpush1.msra.mxu0 0.0
  %2164 = vmatprep.subr.mxu0 0.0
  %2165 = vmatpush1.msra.mxu0 0.0
  %2166 = vmatprep.subr.mxu0 0.0
  %2167 = vmatpush1.msra.mxu0 0.0
  %2168 = vmatprep.subr.mxu0 0.0
  %2169 = vmatpush1.msra.mxu0 0.0
  %2170 = vmatprep.subr.mxu0 0.0
  %2171 = vmatpush1.msra.mxu0 0.0
  %2172 = vmatprep.subr.mxu0 0.0
  %2173 = vmatpush1.msra.mxu0 0.0
  %2174 = vmatprep.subr.mxu0 0.0
  %2175 = vmatpush1.msra.mxu0 0.0
  %2176 = vmatprep.subr.mxu0 0.0
  %2177 = vmatpush1.msra.mxu0 0.0
  %2178 = vmatprep.subr.mxu0 0.0
  %2179 = vmatpush1.msra.mxu0 0.0
  %2180 = vmatprep.subr.mxu0 0.0
  %2181 = vmatpush1.msra.mxu0 0.0
  %2182 = vmatprep.subr.mxu0 0.0
  %2183 = vmatpush1.msra.mxu0 0.0
  %2184 = vmatprep.subr.mxu0 0.0
  %2185 = vmatpush1.msra.mxu0 0.0
  %2186 = vmatprep.subr.mxu0 0.0
  %2187 = vmatpush1.msra.mxu0 0.0
  %2188 = vmatprep.subr.mxu0 0.0
  %2189 = vmatpush1.msra.mxu0 0.0
  %2190 = vmatprep.subr.mxu0 0.0
  %2191 = vmatpush1.msra.mxu0 0.0
  %2192 = vmatprep.subr.mxu0 0.0
  %2193 = vmatpush1.msra.mxu0 0.0
  %2194 = vmatprep.subr.mxu0 0.0
  %2195 = vmatpush1.msra.mxu0 0.0
  %2196 = vmatprep.subr.mxu0 0.0
  %2197 = vmatpush1.msra.mxu0 0.0
  %2198 = vmatprep.subr.mxu0 0.0
  %2199 = vmatpush1.msra.mxu0 0.0
  %2200 = vmatprep.subr.mxu0 0.0
  %2201 = vmatpush1.msra.mxu0 0.0
  %2202 = vmatprep.subr.mxu0 0.0
  %2203 = vmatpush1.msra.mxu0 0.0
  %2204 = vmatprep.subr.mxu0 0.0
  %2205 = vmatpush1.msra.mxu0 0.0
  %2206 = vmatprep.subr.mxu0 0.0
  %2207 = vmatpush1.msra.mxu0 0.0
  %2208 = vmatprep.subr.mxu0 0.0
  %2209 = vmatpush1.msra.mxu0 0.0
  %2210 = vmatprep.subr.mxu0 0.0
  %2211 = vmatpush1.msra.mxu0 0.0
  %2212 = vmatprep.subr.mxu0 0.0
  %2213 = vmatpush1.msra.mxu0 0.0
  %2214 = vmatprep.subr.mxu0 0.0
  %2215 = vmatpush1.msra.mxu0 0.0
  %2216 = vmatprep.subr.mxu0 0.0
  %2217 = vmatpush1.msra.mxu0 0.0
  %2218 = vmatprep.subr.mxu0 0.0
  %2219 = vmatpush1.msra.mxu0 0.0
  %2220 = vmatprep.subr.mxu0 0.0
  %2221 = vmatpush1.msra.mxu0 0.0
  %2222 = vmatprep.mubr.f32.mxu0 0.0
  %2223 = vmatmul.mubr.f32.gmra.mrb[0].mxu0 %v2156
  %v2224 = vpop.f32.mrb[0].mxu0
  %v2225 = vadd.f32 %v2152, %v2224
  %v2226 = vpop.f32.mrb[0].mxu0
  %2227 = vdwg.mxu0
  %v2228 = vld [vmem:[%s3] sm:$0x1]
  %v2230 = vlaneseq
  %v2231 = vshrl.u32 %v2230, 7
  %v2232 = vsub.s32 0, %v2231
  %v2233 = vrot.slane %v2228, %v2232
  %v2235 = vadd.f32 %v2225, %v2233
  %v2236 = vxor.u32 %v2235, 2147483648
  %v2237 = vmul.f32 %v2236, 1.442695
  %v2238 = vpow.pop %v2237
  %v2239 = vadd.f32 %v2238, 1.0
  %v2240 = vrcp.pop %v2239
  %v2241 = vmul.f32 1.0, %v2240
  %v2242 = vtanh.pop %v2235
  %v2243 = vmul.f32 %v2241, %v1692
  %2245 = vrot.lane.b32.xlu0 %v2242, 64
  %v2246 = vpop.permute.xlu0 %2245
  %v2248 = vmul.f32 %v2241, %v2246
  %2250 = vrot.lane.b32.xlu0 %v2248, 32
  %v2251 = vpop.permute.xlu0 %2250
  %v2253 = vadd.f32 %v2243, %v2251
  %v2254 = vtanh.pop %v2253
  %2256 = vrot.lane.b32.xlu0 %v2254, 64
  %v2257 = vpop.permute.xlu0 %2256
  %v2259 = vmul.f32 %v2241, %v2257
  %v2260 = vld [vmem:[%s7] sm:$0xff]
  %v2261 = vld [vmem:[%s7 + $0x8] sm:$0xff]
  %v2262 = vld [vmem:[%s7 + $0x10] sm:$0xff]
  %v2263 = vld [vmem:[%s7 + $0x18] sm:$0xff]
  %v2264 = vld [vmem:[%s8] sm:$0xff]
  %v2265 = vld [vmem:[%s8 + $0x8] sm:$0xff]
  %v2266 = vld [vmem:[%s8 + $0x10] sm:$0xff]
  %v2267 = vld [vmem:[%s8 + $0x18] sm:$0xff]
  %2268 = vrot.lane.b32.xlu0 %v1887, 32
  %v2269 = vpop.permute.xlu0 %2268
  %v2270 = vsel %vm50, %v2269, 0
  %2272 = vmatprep.subr.mxu0 0.0
  %2273 = vmatpush1.msra.mxu0 %v2264
  %2274 = vmatprep.subr.mxu0 0.0
  %2275 = vmatpush1.msra.mxu0 %v2265
  %2276 = vmatprep.subr.mxu0 0.0
  %2277 = vmatpush1.msra.mxu0 %v2266
  %2278 = vmatprep.subr.mxu0 0.0
  %2279 = vmatpush1.msra.mxu0 %v2267
  %2280 = vmatprep.subr.mxu0 0.0
  %2281 = vmatpush1.msra.mxu0 0.0
  %2282 = vmatprep.subr.mxu0 0.0
  %2283 = vmatpush1.msra.mxu0 0.0
  %2284 = vmatprep.subr.mxu0 0.0
  %2285 = vmatpush1.msra.mxu0 0.0
  %2286 = vmatprep.subr.mxu0 0.0
  %2287 = vmatpush1.msra.mxu0 0.0
  %2288 = vmatprep.subr.mxu0 0.0
  %2289 = vmatpush1.msra.mxu0 0.0
  %2290 = vmatprep.subr.mxu0 0.0
  %2291 = vmatpush1.msra.mxu0 0.0
  %2292 = vmatprep.subr.mxu0 0.0
  %2293 = vmatpush1.msra.mxu0 0.0
  %2294 = vmatprep.subr.mxu0 0.0
  %2295 = vmatpush1.msra.mxu0 0.0
  %2296 = vmatprep.subr.mxu0 0.0
  %2297 = vmatpush1.msra.mxu0 0.0
  %2298 = vmatprep.subr.mxu0 0.0
  %2299 = vmatpush1.msra.mxu0 0.0
  %2300 = vmatprep.subr.mxu0 0.0
  %2301 = vmatpush1.msra.mxu0 0.0
  %2302 = vmatprep.subr.mxu0 0.0
  %2303 = vmatpush1.msra.mxu0 0.0
  %2304 = vmatprep.subr.mxu0 0.0
  %2305 = vmatpush1.msra.mxu0 0.0
  %2306 = vmatprep.subr.mxu0 0.0
  %2307 = vmatpush1.msra.mxu0 0.0
  %2308 = vmatprep.subr.mxu0 0.0
  %2309 = vmatpush1.msra.mxu0 0.0
  %2310 = vmatprep.subr.mxu0 0.0
  %2311 = vmatpush1.msra.mxu0 0.0
  %2312 = vmatprep.subr.mxu0 0.0
  %2313 = vmatpush1.msra.mxu0 0.0
  %2314 = vmatprep.subr.mxu0 0.0
  %2315 = vmatpush1.msra.mxu0 0.0
  %2316 = vmatprep.subr.mxu0 0.0
  %2317 = vmatpush1.msra.mxu0 0.0
  %2318 = vmatprep.subr.mxu0 0.0
  %2319 = vmatpush1.msra.mxu0 0.0
  %2320 = vmatprep.subr.mxu0 0.0
  %2321 = vmatpush1.msra.mxu0 0.0
  %2322 = vmatprep.subr.mxu0 0.0
  %2323 = vmatpush1.msra.mxu0 0.0
  %2324 = vmatprep.subr.mxu0 0.0
  %2325 = vmatpush1.msra.mxu0 0.0
  %2326 = vmatprep.subr.mxu0 0.0
  %2327 = vmatpush1.msra.mxu0 0.0
  %2328 = vmatprep.subr.mxu0 0.0
  %2329 = vmatpush1.msra.mxu0 0.0
  %2330 = vmatprep.subr.mxu0 0.0
  %2331 = vmatpush1.msra.mxu0 0.0
  %2332 = vmatprep.subr.mxu0 0.0
  %2333 = vmatpush1.msra.mxu0 0.0
  %2334 = vmatprep.subr.mxu0 0.0
  %2335 = vmatpush1.msra.mxu0 0.0
  %2336 = vmatprep.mubr.f32.mxu0 0.0
  %2337 = vmatmul.mubr.f32.gmra.mrb[0].mxu0 %v2270
  %v2338 = vpop.f32.mrb[0].mxu0
  %v2339 = vadd.f32 0.0, %v2338
  %v2340 = vpop.f32.mrb[0].mxu0
  %2341 = vdwg.mxu0
  %2343 = vrot.lane.b32.xlu0 %v2078, 32
  %v2344 = vpop.permute.xlu0 %2343
  %v2345 = vsel %vm50, %v2344, 0
  %2347 = vmatprep.subr.mxu0 0.0
  %2348 = vmatpush1.msra.mxu0 %v2260
  %2349 = vmatprep.subr.mxu0 0.0
  %2350 = vmatpush1.msra.mxu0 %v2261
  %2351 = vmatprep.subr.mxu0 0.0
  %2352 = vmatpush1.msra.mxu0 %v2262
  %2353 = vmatprep.subr.mxu0 0.0
  %2354 = vmatpush1.msra.mxu0 %v2263
  %2355 = vmatprep.subr.mxu0 0.0
  %2356 = vmatpush1.msra.mxu0 0.0
  %2357 = vmatprep.subr.mxu0 0.0
  %2358 = vmatpush1.msra.mxu0 0.0
  %2359 = vmatprep.subr.mxu0 0.0
  %2360 = vmatpush1.msra.mxu0 0.0
  %2361 = vmatprep.subr.mxu0 0.0
  %2362 = vmatpush1.msra.mxu0 0.0
  %2363 = vmatprep.subr.mxu0 0.0
  %2364 = vmatpush1.msra.mxu0 0.0
  %2365 = vmatprep.subr.mxu0 0.0
  %2366 = vmatpush1.msra.mxu0 0.0
  %2367 = vmatprep.subr.mxu0 0.0
  %2368 = vmatpush1.msra.mxu0 0.0
  %2369 = vmatprep.subr.mxu0 0.0
  %2370 = vmatpush1.msra.mxu0 0.0
  %2371 = vmatprep.subr.mxu0 0.0
  %2372 = vmatpush1.msra.mxu0 0.0
  %2373 = vmatprep.subr.mxu0 0.0
  %2374 = vmatpush1.msra.mxu0 0.0
  %2375 = vmatprep.subr.mxu0 0.0
  %2376 = vmatpush1.msra.mxu0 0.0
  %2377 = vmatprep.subr.mxu0 0.0
  %2378 = vmatpush1.msra.mxu0 0.0
  %2379 = vmatprep.subr.mxu0 0.0
  %2380 = vmatpush1.msra.mxu0 0.0
  %2381 = vmatprep.subr.mxu0 0.0
  %2382 = vmatpush1.msra.mxu0 0.0
  %2383 = vmatprep.subr.mxu0 0.0
  %2384 = vmatpush1.msra.mxu0 0.0
  %2385 = vmatprep.subr.mxu0 0.0
  %2386 = vmatpush1.msra.mxu0 0.0
  %2387 = vmatprep.subr.mxu0 0.0
  %2388 = vmatpush1.msra.mxu0 0.0
  %2389 = vmatprep.subr.mxu0 0.0
  %2390 = vmatpush1.msra.mxu0 0.0
  %2391 = vmatprep.subr.mxu0 0.0
  %2392 = vmatpush1.msra.mxu0 0.0
  %2393 = vmatprep.subr.mxu0 0.0
  %2394 = vmatpush1.msra.mxu0 0.0
  %2395 = vmatprep.subr.mxu0 0.0
  %2396 = vmatpush1.msra.mxu0 0.0
  %2397 = vmatprep.subr.mxu0 0.0
  %2398 = vmatpush1.msra.mxu0 0.0
  %2399 = vmatprep.subr.mxu0 0.0
  %2400 = vmatpush1.msra.mxu0 0.0
  %2401 = vmatprep.subr.mxu0 0.0
  %2402 = vmatpush1.msra.mxu0 0.0
  %2403 = vmatprep.subr.mxu0 0.0
  %2404 = vmatpush1.msra.mxu0 0.0
  %2405 = vmatprep.subr.mxu0 0.0
  %2406 = vmatpush1.msra.mxu0 0.0
  %2407 = vmatprep.subr.mxu0 0.0
  %2408 = vmatpush1.msra.mxu0 0.0
  %2409 = vmatprep.subr.mxu0 0.0
  %2410 = vmatpush1.msra.mxu0 0.0
  %2411 = vmatprep.mubr.f32.mxu0 0.0
  %2412 = vmatmul.mubr.f32.gmra.mrb[0].mxu0 %v2345
  %v2413 = vpop.f32.mrb[0].mxu0
  %v2414 = vadd.f32 %v2339, %v2413
  %v2415 = vpop.f32.mrb[0].mxu0
  %2416 = vdwg.mxu0
  %v2417 = vld [vmem:[%s9] sm:$0x1]
  %v2419 = vlaneseq
  %v2420 = vshrl.u32 %v2419, 7
  %v2421 = vsub.s32 0, %v2420
  %v2422 = vrot.slane %v2417, %v2421
  %v2424 = vadd.f32 %v2414, %v2422
  %v2425 = vxor.u32 %v2424, 2147483648
  %v2426 = vmul.f32 %v2425, 1.442695
  %v2427 = vpow.pop %v2426
  %v2428 = vadd.f32 %v2427, 1.0
  %v2429 = vrcp.pop %v2428
  %v2430 = vmul.f32 1.0, %v2429
  %v2431 = vtanh.pop %v2424
  %v2432 = vmul.f32 %v2430, %v1881
  %2434 = vrot.lane.b32.xlu0 %v2431, 64
  %v2435 = vpop.permute.xlu0 %2434
  %v2437 = vmul.f32 %v2430, %v2435
  %2439 = vrot.lane.b32.xlu0 %v2437, 32
  %v2440 = vpop.permute.xlu0 %2439
  %v2442 = vadd.f32 %v2432, %v2440
  %v2443 = vtanh.pop %v2442
  %2445 = vrot.lane.b32.xlu0 %v2443, 64
  %v2446 = vpop.permute.xlu0 %2445
  %v2448 = vmul.f32 %v2430, %v2446
  %vm2449 = vcmask 1048320
  %2450 = vst.msk [vmem:[#allocation2] sm:$0xff] %vm2449, %v2448
  %v2451 = vld [vmem:[%s4] sm:$0xff]
  %v2452 = vld [vmem:[%s4 + $0x8] sm:$0xff]
  %v2453 = vld [vmem:[%s4 + $0x10] sm:$0xff]
  %v2454 = vld [vmem:[%s4 + $0x18] sm:$0xff]
  %v2455 = vld [vmem:[%s5] sm:$0xff]
  %v2456 = vld [vmem:[%s5 + $0x8] sm:$0xff]
  %v2457 = vld [vmem:[%s5 + $0x10] sm:$0xff]
  %v2458 = vld [vmem:[%s5 + $0x18] sm:$0xff]
  %2459 = vmatprep.subr.mxu0 0.0
  %2460 = vmatpush1.msra.mxu0 %v2455
  %2461 = vmatprep.subr.mxu0 0.0
  %2462 = vmatpush1.msra.mxu0 %v2456
  %2463 = vmatprep.subr.mxu0 0.0
  %2464 = vmatpush1.msra.mxu0 %v2457
  %2465 = vmatprep.subr.mxu0 0.0
  %2466 = vmatpush1.msra.mxu0 %v2458
  %2467 = vmatprep.subr.mxu0 0.0
  %2468 = vmatpush1.msra.mxu0 0.0
  %2469 = vmatprep.subr.mxu0 0.0
  %2470 = vmatpush1.msra.mxu0 0.0
  %2471 = vmatprep.subr.mxu0 0.0
  %2472 = vmatpush1.msra.mxu0 0.0
  %2473 = vmatprep.subr.mxu0 0.0
  %2474 = vmatpush1.msra.mxu0 0.0
  %2475 = vmatprep.subr.mxu0 0.0
  %2476 = vmatpush1.msra.mxu0 0.0
  %2477 = vmatprep.subr.mxu0 0.0
  %2478 = vmatpush1.msra.mxu0 0.0
  %2479 = vmatprep.subr.mxu0 0.0
  %2480 = vmatpush1.msra.mxu0 0.0
  %2481 = vmatprep.subr.mxu0 0.0
  %2482 = vmatpush1.msra.mxu0 0.0
  %2483 = vmatprep.subr.mxu0 0.0
  %2484 = vmatpush1.msra.mxu0 0.0
  %2485 = vmatprep.subr.mxu0 0.0
  %2486 = vmatpush1.msra.mxu0 0.0
  %2487 = vmatprep.subr.mxu0 0.0
  %2488 = vmatpush1.msra.mxu0 0.0
  %2489 = vmatprep.subr.mxu0 0.0
  %2490 = vmatpush1.msra.mxu0 0.0
  %2491 = vmatprep.subr.mxu0 0.0
  %2492 = vmatpush1.msra.mxu0 0.0
  %2493 = vmatprep.subr.mxu0 0.0
  %2494 = vmatpush1.msra.mxu0 0.0
  %2495 = vmatprep.subr.mxu0 0.0
  %2496 = vmatpush1.msra.mxu0 0.0
  %2497 = vmatprep.subr.mxu0 0.0
  %2498 = vmatpush1.msra.mxu0 0.0
  %2499 = vmatprep.subr.mxu0 0.0
  %2500 = vmatpush1.msra.mxu0 0.0
  %2501 = vmatprep.subr.mxu0 0.0
  %2502 = vmatpush1.msra.mxu0 0.0
  %2503 = vmatprep.subr.mxu0 0.0
  %2504 = vmatpush1.msra.mxu0 0.0
  %2505 = vmatprep.subr.mxu0 0.0
  %2506 = vmatpush1.msra.mxu0 0.0
  %2507 = vmatprep.subr.mxu0 0.0
  %2508 = vmatpush1.msra.mxu0 0.0
  %2509 = vmatprep.subr.mxu0 0.0
  %2510 = vmatpush1.msra.mxu0 0.0
  %2511 = vmatprep.subr.mxu0 0.0
  %2512 = vmatpush1.msra.mxu0 0.0
  %2513 = vmatprep.subr.mxu0 0.0
  %2514 = vmatpush1.msra.mxu0 0.0
  %2515 = vmatprep.subr.mxu0 0.0
  %2516 = vmatpush1.msra.mxu0 0.0
  %2517 = vmatprep.subr.mxu0 0.0
  %2518 = vmatpush1.msra.mxu0 0.0
  %2519 = vmatprep.subr.mxu0 0.0
  %2520 = vmatpush1.msra.mxu0 0.0
  %2521 = vmatprep.subr.mxu0 0.0
  %2522 = vmatpush1.msra.mxu0 0.0
  %2523 = vmatprep.mubr.f32.mxu0 0.0
  %2524 = vmatmul.mubr.f32.gmra.mrb[0].mxu0 %v2345
  %v2525 = vpop.f32.mrb[0].mxu0
  %v2526 = vadd.f32 0.0, %v2525
  %v2527 = vpop.f32.mrb[0].mxu0
  %2528 = vdwg.mxu0
  %2530 = vrot.lane.b32.xlu0 %v2259, 32
  %v2531 = vpop.permute.xlu0 %2530
  %v2532 = vsel %vm50, %v2531, 0
  %2534 = vmatprep.subr.mxu0 0.0
  %2535 = vmatpush1.msra.mxu0 %v2451
  %2536 = vmatprep.subr.mxu0 0.0
  %2537 = vmatpush1.msra.mxu0 %v2452
  %2538 = vmatprep.subr.mxu0 0.0
  %2539 = vmatpush1.msra.mxu0 %v2453
  %2540 = vmatprep.subr.mxu0 0.0
  %2541 = vmatpush1.msra.mxu0 %v2454
  %2542 = vmatprep.subr.mxu0 0.0
  %2543 = vmatpush1.msra.mxu0 0.0
  %2544 = vmatprep.subr.mxu0 0.0
  %2545 = vmatpush1.msra.mxu0 0.0
  %2546 = vmatprep.subr.mxu0 0.0
  %2547 = vmatpush1.msra.mxu0 0.0
  %2548 = vmatprep.subr.mxu0 0.0
  %2549 = vmatpush1.msra.mxu0 0.0
  %2550 = vmatprep.subr.mxu0 0.0
  %2551 = vmatpush1.msra.mxu0 0.0
  %2552 = vmatprep.subr.mxu0 0.0
  %2553 = vmatpush1.msra.mxu0 0.0
  %2554 = vmatprep.subr.mxu0 0.0
  %2555 = vmatpush1.msra.mxu0 0.0
  %2556 = vmatprep.subr.mxu0 0.0
  %2557 = vmatpush1.msra.mxu0 0.0
  %2558 = vmatprep.subr.mxu0 0.0
  %2559 = vmatpush1.msra.mxu0 0.0
  %2560 = vmatprep.subr.mxu0 0.0
  %2561 = vmatpush1.msra.mxu0 0.0
  %2562 = vmatprep.subr.mxu0 0.0
  %2563 = vmatpush1.msra.mxu0 0.0
  %2564 = vmatprep.subr.mxu0 0.0
  %2565 = vmatpush1.msra.mxu0 0.0
  %2566 = vmatprep.subr.mxu0 0.0
  %2567 = vmatpush1.msra.mxu0 0.0
  %2568 = vmatprep.subr.mxu0 0.0
  %2569 = vmatpush1.msra.mxu0 0.0
  %2570 = vmatprep.subr.mxu0 0.0
  %2571 = vmatpush1.msra.mxu0 0.0
  %2572 = vmatprep.subr.mxu0 0.0
  %2573 = vmatpush1.msra.mxu0 0.0
  %2574 = vmatprep.subr.mxu0 0.0
  %2575 = vmatpush1.msra.mxu0 0.0
  %2576 = vmatprep.subr.mxu0 0.0
  %2577 = vmatpush1.msra.mxu0 0.0
  %2578 = vmatprep.subr.mxu0 0.0
  %2579 = vmatpush1.msra.mxu0 0.0
  %2580 = vmatprep.subr.mxu0 0.0
  %2581 = vmatpush1.msra.mxu0 0.0
  %2582 = vmatprep.subr.mxu0 0.0
  %2583 = vmatpush1.msra.mxu0 0.0
  %2584 = vmatprep.subr.mxu0 0.0
  %2585 = vmatpush1.msra.mxu0 0.0
  %2586 = vmatprep.subr.mxu0 0.0
  %2587 = vmatpush1.msra.mxu0 0.0
  %2588 = vmatprep.subr.mxu0 0.0
  %2589 = vmatpush1.msra.mxu0 0.0
  %2590 = vmatprep.subr.mxu0 0.0
  %2591 = vmatpush1.msra.mxu0 0.0
  %2592 = vmatprep.subr.mxu0 0.0
  %2593 = vmatpush1.msra.mxu0 0.0
  %2594 = vmatprep.subr.mxu0 0.0
  %2595 = vmatpush1.msra.mxu0 0.0
  %2596 = vmatprep.subr.mxu0 0.0
  %2597 = vmatpush1.msra.mxu0 0.0
  %2598 = vmatprep.mubr.f32.mxu0 0.0
  %2599 = vmatmul.mubr.f32.gmra.mrb[0].mxu0 %v2532
  %v2600 = vpop.f32.mrb[0].mxu0
  %v2601 = vadd.f32 %v2526, %v2600
  %v2602 = vpop.f32.mrb[0].mxu0
  %2603 = vdwg.mxu0
  %v2604 = vld [vmem:[%s6] sm:$0x1]
  %v2606 = vlaneseq
  %v2607 = vshrl.u32 %v2606, 7
  %v2608 = vsub.s32 0, %v2607
  %v2609 = vrot.slane %v2604, %v2608
  %v2611 = vadd.f32 %v2601, %v2609
  %v2612 = vxor.u32 %v2611, 2147483648
  %v2613 = vmul.f32 %v2612, 1.442695
  %v2614 = vpow.pop %v2613
  %v2615 = vadd.f32 %v2614, 1.0
  %v2616 = vrcp.pop %v2615
  %v2617 = vmul.f32 1.0, %v2616
  %v2618 = vtanh.pop %v2611
  %v2619 = vmul.f32 %v2617, %v2072
  %2621 = vrot.lane.b32.xlu0 %v2618, 64
  %v2622 = vpop.permute.xlu0 %2621
  %v2624 = vmul.f32 %v2617, %v2622
  %2626 = vrot.lane.b32.xlu0 %v2624, 32
  %v2627 = vpop.permute.xlu0 %2626
  %v2629 = vadd.f32 %v2619, %v2627
  %v2630 = vtanh.pop %v2629
  %2632 = vrot.lane.b32.xlu0 %v2630, 64
  %v2633 = vpop.permute.xlu0 %2632
  %v2635 = vmul.f32 %v2617, %v2633
  %v2636 = vld [vmem:[%s0 + $0x28] sm:$0xff]
  %v2637 = vld [vmem:[%s1] sm:$0xff]
  %v2638 = vld [vmem:[%s2] sm:$0xff]
  %v2639 = vld [vmem:[%s2 + $0x8] sm:$0xff]
  %v2640 = vld [vmem:[%s2 + $0x10] sm:$0xff]
  %v2641 = vld [vmem:[%s2 + $0x18] sm:$0xff]
  %2642 = vmatprep.subr.mxu0 0.0
  %2643 = vmatpush1.msra.mxu0 %v2638
  %2644 = vmatprep.subr.mxu0 0.0
  %2645 = vmatpush1.msra.mxu0 %v2639
  %2646 = vmatprep.subr.mxu0 0.0
  %2647 = vmatpush1.msra.mxu0 %v2640
  %2648 = vmatprep.subr.mxu0 0.0
  %2649 = vmatpush1.msra.mxu0 %v2641
  %2650 = vmatprep.subr.mxu0 0.0
  %2651 = vmatpush1.msra.mxu0 0.0
  %2652 = vmatprep.subr.mxu0 0.0
  %2653 = vmatpush1.msra.mxu0 0.0
  %2654 = vmatprep.subr.mxu0 0.0
  %2655 = vmatpush1.msra.mxu0 0.0
  %2656 = vmatprep.subr.mxu0 0.0
  %2657 = vmatpush1.msra.mxu0 0.0
  %2658 = vmatprep.subr.mxu0 0.0
  %2659 = vmatpush1.msra.mxu0 0.0
  %2660 = vmatprep.subr.mxu0 0.0
  %2661 = vmatpush1.msra.mxu0 0.0
  %2662 = vmatprep.subr.mxu0 0.0
  %2663 = vmatpush1.msra.mxu0 0.0
  %2664 = vmatprep.subr.mxu0 0.0
  %2665 = vmatpush1.msra.mxu0 0.0
  %2666 = vmatprep.subr.mxu0 0.0
  %2667 = vmatpush1.msra.mxu0 0.0
  %2668 = vmatprep.subr.mxu0 0.0
  %2669 = vmatpush1.msra.mxu0 0.0
  %2670 = vmatprep.subr.mxu0 0.0
  %2671 = vmatpush1.msra.mxu0 0.0
  %2672 = vmatprep.subr.mxu0 0.0
  %2673 = vmatpush1.msra.mxu0 0.0
  %2674 = vmatprep.subr.mxu0 0.0
  %2675 = vmatpush1.msra.mxu0 0.0
  %2676 = vmatprep.subr.mxu0 0.0
  %2677 = vmatpush1.msra.mxu0 0.0
  %2678 = vmatprep.subr.mxu0 0.0
  %2679 = vmatpush1.msra.mxu0 0.0
  %2680 = vmatprep.subr.mxu0 0.0
  %2681 = vmatpush1.msra.mxu0 0.0
  %2682 = vmatprep.subr.mxu0 0.0
  %2683 = vmatpush1.msra.mxu0 0.0
  %2684 = vmatprep.subr.mxu0 0.0
  %2685 = vmatpush1.msra.mxu0 0.0
  %2686 = vmatprep.subr.mxu0 0.0
  %2687 = vmatpush1.msra.mxu0 0.0
  %2688 = vmatprep.subr.mxu0 0.0
  %2689 = vmatpush1.msra.mxu0 0.0
  %2690 = vmatprep.subr.mxu0 0.0
  %2691 = vmatpush1.msra.mxu0 0.0
  %2692 = vmatprep.subr.mxu0 0.0
  %2693 = vmatpush1.msra.mxu0 0.0
  %2694 = vmatprep.subr.mxu0 0.0
  %2695 = vmatpush1.msra.mxu0 0.0
  %2696 = vmatprep.subr.mxu0 0.0
  %2697 = vmatpush1.msra.mxu0 0.0
  %2698 = vmatprep.subr.mxu0 0.0
  %2699 = vmatpush1.msra.mxu0 0.0
  %2700 = vmatprep.subr.mxu0 0.0
  %2701 = vmatpush1.msra.mxu0 0.0
  %2702 = vmatprep.subr.mxu0 0.0
  %2703 = vmatpush1.msra.mxu0 0.0
  %2704 = vmatprep.subr.mxu0 0.0
  %2705 = vmatpush1.msra.mxu0 0.0
  %2706 = vmatprep.mubr.f32.mxu0 0.0
  %2707 = vmatmul.mubr.f32.gmra.mrb[0].mxu0 %v2532
  %v2708 = vpop.f32.mrb[0].mxu0
  %v2709 = vadd.f32 0.0, %v2708
  %v2710 = vpop.f32.mrb[0].mxu0
  %2711 = vdwg.mxu0
  %v2713 = vsel %vm124, %v2636, 0
  %2715 = vmatprep.subr.mxu0 0.0
  %2716 = vmatpush1.msra.mxu0 %v2637
  %2717 = vmatprep.subr.mxu0 0.0
  %2718 = vmatpush1.msra.mxu0 0.0
  %2719 = vmatprep.subr.mxu0 0.0
  %2720 = vmatpush1.msra.mxu0 0.0
  %2721 = vmatprep.subr.mxu0 0.0
  %2722 = vmatpush1.msra.mxu0 0.0
  %2723 = vmatprep.subr.mxu0 0.0
  %2724 = vmatpush1.msra.mxu0 0.0
  %2725 = vmatprep.subr.mxu0 0.0
  %2726 = vmatpush1.msra.mxu0 0.0
  %2727 = vmatprep.subr.mxu0 0.0
  %2728 = vmatpush1.msra.mxu0 0.0
  %2729 = vmatprep.subr.mxu0 0.0
  %2730 = vmatpush1.msra.mxu0 0.0
  %2731 = vmatprep.subr.mxu0 0.0
  %2732 = vmatpush1.msra.mxu0 0.0
  %2733 = vmatprep.subr.mxu0 0.0
  %2734 = vmatpush1.msra.mxu0 0.0
  %2735 = vmatprep.subr.mxu0 0.0
  %2736 = vmatpush1.msra.mxu0 0.0
  %2737 = vmatprep.subr.mxu0 0.0
  %2738 = vmatpush1.msra.mxu0 0.0
  %2739 = vmatprep.subr.mxu0 0.0
  %2740 = vmatpush1.msra.mxu0 0.0
  %2741 = vmatprep.subr.mxu0 0.0
  %2742 = vmatpush1.msra.mxu0 0.0
  %2743 = vmatprep.subr.mxu0 0.0
  %2744 = vmatpush1.msra.mxu0 0.0
  %2745 = vmatprep.subr.mxu0 0.0
  %2746 = vmatpush1.msra.mxu0 0.0
  %2747 = vmatprep.subr.mxu0 0.0
  %2748 = vmatpush1.msra.mxu0 0.0
  %2749 = vmatprep.subr.mxu0 0.0
  %2750 = vmatpush1.msra.mxu0 0.0
  %2751 = vmatprep.subr.mxu0 0.0
  %2752 = vmatpush1.msra.mxu0 0.0
  %2753 = vmatprep.subr.mxu0 0.0
  %2754 = vmatpush1.msra.mxu0 0.0
  %2755 = vmatprep.subr.mxu0 0.0
  %2756 = vmatpush1.msra.mxu0 0.0
  %2757 = vmatprep.subr.mxu0 0.0
  %2758 = vmatpush1.msra.mxu0 0.0
  %2759 = vmatprep.subr.mxu0 0.0
  %2760 = vmatpush1.msra.mxu0 0.0
  %2761 = vmatprep.subr.mxu0 0.0
  %2762 = vmatpush1.msra.mxu0 0.0
  %2763 = vmatprep.subr.mxu0 0.0
  %2764 = vmatpush1.msra.mxu0 0.0
  %2765 = vmatprep.subr.mxu0 0.0
  %2766 = vmatpush1.msra.mxu0 0.0
  %2767 = vmatprep.subr.mxu0 0.0
  %2768 = vmatpush1.msra.mxu0 0.0
  %2769 = vmatprep.subr.mxu0 0.0
  %2770 = vmatpush1.msra.mxu0 0.0
  %2771 = vmatprep.subr.mxu0 0.0
  %2772 = vmatpush1.msra.mxu0 0.0
  %2773 = vmatprep.subr.mxu0 0.0
  %2774 = vmatpush1.msra.mxu0 0.0
  %2775 = vmatprep.subr.mxu0 0.0
  %2776 = vmatpush1.msra.mxu0 0.0
  %2777 = vmatprep.subr.mxu0 0.0
  %2778 = vmatpush1.msra.mxu0 0.0
  %2779 = vmatprep.mubr.f32.mxu0 0.0
  %2780 = vmatmul.mubr.f32.gmra.mrb[0].mxu0 %v2713
  %v2781 = vpop.f32.mrb[0].mxu0
  %v2782 = vadd.f32 %v2709, %v2781
  %v2783 = vpop.f32.mrb[0].mxu0
  %2784 = vdwg.mxu0
  %v2785 = vld [vmem:[%s3] sm:$0x1]
  %v2787 = vlaneseq
  %v2788 = vshrl.u32 %v2787, 7
  %v2789 = vsub.s32 0, %v2788
  %v2790 = vrot.slane %v2785, %v2789
  %v2792 = vadd.f32 %v2782, %v2790
  %v2793 = vxor.u32 %v2792, 2147483648
  %v2794 = vmul.f32 %v2793, 1.442695
  %v2795 = vpow.pop %v2794
  %v2796 = vadd.f32 %v2795, 1.0
  %v2797 = vrcp.pop %v2796
  %v2798 = vmul.f32 1.0, %v2797
  %v2799 = vtanh.pop %v2792
  %v2800 = vmul.f32 %v2798, %v2253
  %2802 = vrot.lane.b32.xlu0 %v2799, 64
  %v2803 = vpop.permute.xlu0 %2802
  %v2805 = vmul.f32 %v2798, %v2803
  %2807 = vrot.lane.b32.xlu0 %v2805, 32
  %v2808 = vpop.permute.xlu0 %2807
  %v2810 = vadd.f32 %v2800, %v2808
  %v2811 = vtanh.pop %v2810
  %2813 = vrot.lane.b32.xlu0 %v2811, 64
  %v2814 = vpop.permute.xlu0 %2813
  %v2816 = vmul.f32 %v2798, %v2814
  %v2817 = vld [vmem:[%s7] sm:$0xff]
  %v2818 = vld [vmem:[%s7 + $0x8] sm:$0xff]
  %v2819 = vld [vmem:[%s7 + $0x10] sm:$0xff]
  %v2820 = vld [vmem:[%s7 + $0x18] sm:$0xff]
  %v2821 = vld [vmem:[%s8] sm:$0xff]
  %v2822 = vld [vmem:[%s8 + $0x8] sm:$0xff]
  %v2823 = vld [vmem:[%s8 + $0x10] sm:$0xff]
  %v2824 = vld [vmem:[%s8 + $0x18] sm:$0xff]
  %2826 = vrot.lane.b32.xlu0 %v2448, 32
  %v2827 = vpop.permute.xlu0 %2826
  %v2828 = vsel %vm50, %v2827, 0
  %2830 = vmatprep.subr.mxu0 0.0
  %2831 = vmatpush1.msra.mxu0 %v2821
  %2832 = vmatprep.subr.mxu0 0.0
  %2833 = vmatpush1.msra.mxu0 %v2822
  %2834 = vmatprep.subr.mxu0 0.0
  %2835 = vmatpush1.msra.mxu0 %v2823
  %2836 = vmatprep.subr.mxu0 0.0
  %2837 = vmatpush1.msra.mxu0 %v2824
  %2838 = vmatprep.subr.mxu0 0.0
  %2839 = vmatpush1.msra.mxu0 0.0
  %2840 = vmatprep.subr.mxu0 0.0
  %2841 = vmatpush1.msra.mxu0 0.0
  %2842 = vmatprep.subr.mxu0 0.0
  %2843 = vmatpush1.msra.mxu0 0.0
  %2844 = vmatprep.subr.mxu0 0.0
  %2845 = vmatpush1.msra.mxu0 0.0
  %2846 = vmatprep.subr.mxu0 0.0
  %2847 = vmatpush1.msra.mxu0 0.0
  %2848 = vmatprep.subr.mxu0 0.0
  %2849 = vmatpush1.msra.mxu0 0.0
  %2850 = vmatprep.subr.mxu0 0.0
  %2851 = vmatpush1.msra.mxu0 0.0
  %2852 = vmatprep.subr.mxu0 0.0
  %2853 = vmatpush1.msra.mxu0 0.0
  %2854 = vmatprep.subr.mxu0 0.0
  %2855 = vmatpush1.msra.mxu0 0.0
  %2856 = vmatprep.subr.mxu0 0.0
  %2857 = vmatpush1.msra.mxu0 0.0
  %2858 = vmatprep.subr.mxu0 0.0
  %2859 = vmatpush1.msra.mxu0 0.0
  %2860 = vmatprep.subr.mxu0 0.0
  %2861 = vmatpush1.msra.mxu0 0.0
  %2862 = vmatprep.subr.mxu0 0.0
  %2863 = vmatpush1.msra.mxu0 0.0
  %2864 = vmatprep.subr.mxu0 0.0
  %2865 = vmatpush1.msra.mxu0 0.0
  %2866 = vmatprep.subr.mxu0 0.0
  %2867 = vmatpush1.msra.mxu0 0.0
  %2868 = vmatprep.subr.mxu0 0.0
  %2869 = vmatpush1.msra.mxu0 0.0
  %2870 = vmatprep.subr.mxu0 0.0
  %2871 = vmatpush1.msra.mxu0 0.0
  %2872 = vmatprep.subr.mxu0 0.0
  %2873 = vmatpush1.msra.mxu0 0.0
  %2874 = vmatprep.subr.mxu0 0.0
  %2875 = vmatpush1.msra.mxu0 0.0
  %2876 = vmatprep.subr.mxu0 0.0
  %2877 = vmatpush1.msra.mxu0 0.0
  %2878 = vmatprep.subr.mxu0 0.0
  %2879 = vmatpush1.msra.mxu0 0.0
  %2880 = vmatprep.subr.mxu0 0.0
  %2881 = vmatpush1.msra.mxu0 0.0
  %2882 = vmatprep.subr.mxu0 0.0
  %2883 = vmatpush1.msra.mxu0 0.0
  %2884 = vmatprep.subr.mxu0 0.0
  %2885 = vmatpush1.msra.mxu0 0.0
  %2886 = vmatprep.subr.mxu0 0.0
  %2887 = vmatpush1.msra.mxu0 0.0
  %2888 = vmatprep.subr.mxu0 0.0
  %2889 = vmatpush1.msra.mxu0 0.0
  %2890 = vmatprep.subr.mxu0 0.0
  %2891 = vmatpush1.msra.mxu0 0.0
  %2892 = vmatprep.subr.mxu0 0.0
  %2893 = vmatpush1.msra.mxu0 0.0
  %2894 = vmatprep.mubr.f32.mxu0 0.0
  %2895 = vmatmul.mubr.f32.gmra.mrb[0].mxu0 %v2828
  %v2896 = vpop.f32.mrb[0].mxu0
  %v2897 = vadd.f32 0.0, %v2896
  %v2898 = vpop.f32.mrb[0].mxu0
  %2899 = vdwg.mxu0
  %2901 = vrot.lane.b32.xlu0 %v2635, 32
  %v2902 = vpop.permute.xlu0 %2901
  %v2903 = vsel %vm50, %v2902, 0
  %2905 = vmatprep.subr.mxu0 0.0
  %2906 = vmatpush1.msra.mxu0 %v2817
  %2907 = vmatprep.subr.mxu0 0.0
  %2908 = vmatpush1.msra.mxu0 %v2818
  %2909 = vmatprep.subr.mxu0 0.0
  %2910 = vmatpush1.msra.mxu0 %v2819
  %2911 = vmatprep.subr.mxu0 0.0
  %2912 = vmatpush1.msra.mxu0 %v2820
  %2913 = vmatprep.subr.mxu0 0.0
  %2914 = vmatpush1.msra.mxu0 0.0
  %2915 = vmatprep.subr.mxu0 0.0
  %2916 = vmatpush1.msra.mxu0 0.0
  %2917 = vmatprep.subr.mxu0 0.0
  %2918 = vmatpush1.msra.mxu0 0.0
  %2919 = vmatprep.subr.mxu0 0.0
  %2920 = vmatpush1.msra.mxu0 0.0
  %2921 = vmatprep.subr.mxu0 0.0
  %2922 = vmatpush1.msra.mxu0 0.0
  %2923 = vmatprep.subr.mxu0 0.0
  %2924 = vmatpush1.msra.mxu0 0.0
  %2925 = vmatprep.subr.mxu0 0.0
  %2926 = vmatpush1.msra.mxu0 0.0
  %2927 = vmatprep.subr.mxu0 0.0
  %2928 = vmatpush1.msra.mxu0 0.0
  %2929 = vmatprep.subr.mxu0 0.0
  %2930 = vmatpush1.msra.mxu0 0.0
  %2931 = vmatprep.subr.mxu0 0.0
  %2932 = vmatpush1.msra.mxu0 0.0
  %2933 = vmatprep.subr.mxu0 0.0
  %2934 = vmatpush1.msra.mxu0 0.0
  %2935 = vmatprep.subr.mxu0 0.0
  %2936 = vmatpush1.msra.mxu0 0.0
  %2937 = vmatprep.subr.mxu0 0.0
  %2938 = vmatpush1.msra.mxu0 0.0
  %2939 = vmatprep.subr.mxu0 0.0
  %2940 = vmatpush1.msra.mxu0 0.0
  %2941 = vmatprep.subr.mxu0 0.0
  %2942 = vmatpush1.msra.mxu0 0.0
  %2943 = vmatprep.subr.mxu0 0.0
  %2944 = vmatpush1.msra.mxu0 0.0
  %2945 = vmatprep.subr.mxu0 0.0
  %2946 = vmatpush1.msra.mxu0 0.0
  %2947 = vmatprep.subr.mxu0 0.0
  %2948 = vmatpush1.msra.mxu0 0.0
  %2949 = vmatprep.subr.mxu0 0.0
  %2950 = vmatpush1.msra.mxu0 0.0
  %2951 = vmatprep.subr.mxu0 0.0
  %2952 = vmatpush1.msra.mxu0 0.0
  %2953 = vmatprep.subr.mxu0 0.0
  %2954 = vmatpush1.msra.mxu0 0.0
  %2955 = vmatprep.subr.mxu0 0.0
  %2956 = vmatpush1.msra.mxu0 0.0
  %2957 = vmatprep.subr.mxu0 0.0
  %2958 = vmatpush1.msra.mxu0 0.0
  %2959 = vmatprep.subr.mxu0 0.0
  %2960 = vmatpush1.msra.mxu0 0.0
  %2961 = vmatprep.subr.mxu0 0.0
  %2962 = vmatpush1.msra.mxu0 0.0
  %2963 = vmatprep.subr.mxu0 0.0
  %2964 = vmatpush1.msra.mxu0 0.0
  %2965 = vmatprep.subr.mxu0 0.0
  %2966 = vmatpush1.msra.mxu0 0.0
  %2967 = vmatprep.subr.mxu0 0.0
  %2968 = vmatpush1.msra.mxu0 0.0
  %2969 = vmatprep.mubr.f32.mxu0 0.0
  %2970 = vmatmul.mubr.f32.gmra.mrb[0].mxu0 %v2903
  %v2971 = vpop.f32.mrb[0].mxu0
  %v2972 = vadd.f32 %v2897, %v2971
  %v2973 = vpop.f32.mrb[0].mxu0
  %2974 = vdwg.mxu0
  %v2975 = vld [vmem:[%s9] sm:$0x1]
  %v2977 = vlaneseq
  %v2978 = vshrl.u32 %v2977, 7
  %v2979 = vsub.s32 0, %v2978
  %v2980 = vrot.slane %v2975, %v2979
  %v2982 = vadd.f32 %v2972, %v2980
  %v2983 = vxor.u32 %v2982, 2147483648
  %v2984 = vmul.f32 %v2983, 1.442695
  %v2985 = vpow.pop %v2984
  %v2986 = vadd.f32 %v2985, 1.0
  %v2987 = vrcp.pop %v2986
  %v2988 = vmul.f32 1.0, %v2987
  %v2989 = vtanh.pop %v2982
  %v2990 = vmul.f32 %v2988, %v2442
  %2992 = vrot.lane.b32.xlu0 %v2989, 64
  %v2993 = vpop.permute.xlu0 %2992
  %v2995 = vmul.f32 %v2988, %v2993
  %2997 = vrot.lane.b32.xlu0 %v2995, 32
  %v2998 = vpop.permute.xlu0 %2997
  %v3000 = vadd.f32 %v2990, %v2998
  %v3001 = vtanh.pop %v3000
  %3003 = vrot.lane.b32.xlu0 %v3001, 64
  %v3004 = vpop.permute.xlu0 %3003
  %v3006 = vmul.f32 %v2988, %v3004
  %3008 = vrot.lane.b32.xlu0 %v3006, 32
  %v3009 = vpop.permute.xlu0 %3008
  %3011 = vst.msk [vmem:[#allocation2 + $0x8] sm:$0xff] %vm50, %v3009
  %v3012 = vld [vmem:[%s4] sm:$0xff]
  %v3013 = vld [vmem:[%s4 + $0x8] sm:$0xff]
  %v3014 = vld [vmem:[%s4 + $0x10] sm:$0xff]
  %v3015 = vld [vmem:[%s4 + $0x18] sm:$0xff]
  %v3016 = vld [vmem:[%s5] sm:$0xff]
  %v3017 = vld [vmem:[%s5 + $0x8] sm:$0xff]
  %v3018 = vld [vmem:[%s5 + $0x10] sm:$0xff]
  %v3019 = vld [vmem:[%s5 + $0x18] sm:$0xff]
  %3020 = vmatprep.subr.mxu0 0.0
  %3021 = vmatpush1.msra.mxu0 %v3016
  %3022 = vmatprep.subr.mxu0 0.0
  %3023 = vmatpush1.msra.mxu0 %v3017
  %3024 = vmatprep.subr.mxu0 0.0
  %3025 = vmatpush1.msra.mxu0 %v3018
  %3026 = vmatprep.subr.mxu0 0.0
  %3027 = vmatpush1.msra.mxu0 %v3019
  %3028 = vmatprep.subr.mxu0 0.0
  %3029 = vmatpush1.msra.mxu0 0.0
  %3030 = vmatprep.subr.mxu0 0.0
  %3031 = vmatpush1.msra.mxu0 0.0
  %3032 = vmatprep.subr.mxu0 0.0
  %3033 = vmatpush1.msra.mxu0 0.0
  %3034 = vmatprep.subr.mxu0 0.0
  %3035 = vmatpush1.msra.mxu0 0.0
  %3036 = vmatprep.subr.mxu0 0.0
  %3037 = vmatpush1.msra.mxu0 0.0
  %3038 = vmatprep.subr.mxu0 0.0
  %3039 = vmatpush1.msra.mxu0 0.0
  %3040 = vmatprep.subr.mxu0 0.0
  %3041 = vmatpush1.msra.mxu0 0.0
  %3042 = vmatprep.subr.mxu0 0.0
  %3043 = vmatpush1.msra.mxu0 0.0
  %3044 = vmatprep.subr.mxu0 0.0
  %3045 = vmatpush1.msra.mxu0 0.0
  %3046 = vmatprep.subr.mxu0 0.0
  %3047 = vmatpush1.msra.mxu0 0.0
  %3048 = vmatprep.subr.mxu0 0.0
  %3049 = vmatpush1.msra.mxu0 0.0
  %3050 = vmatprep.subr.mxu0 0.0
  %3051 = vmatpush1.msra.mxu0 0.0
  %3052 = vmatprep.subr.mxu0 0.0
  %3053 = vmatpush1.msra.mxu0 0.0
  %3054 = vmatprep.subr.mxu0 0.0
  %3055 = vmatpush1.msra.mxu0 0.0
  %3056 = vmatprep.subr.mxu0 0.0
  %3057 = vmatpush1.msra.mxu0 0.0
  %3058 = vmatprep.subr.mxu0 0.0
  %3059 = vmatpush1.msra.mxu0 0.0
  %3060 = vmatprep.subr.mxu0 0.0
  %3061 = vmatpush1.msra.mxu0 0.0
  %3062 = vmatprep.subr.mxu0 0.0
  %3063 = vmatpush1.msra.mxu0 0.0
  %3064 = vmatprep.subr.mxu0 0.0
  %3065 = vmatpush1.msra.mxu0 0.0
  %3066 = vmatprep.subr.mxu0 0.0
  %3067 = vmatpush1.msra.mxu0 0.0
  %3068 = vmatprep.subr.mxu0 0.0
  %3069 = vmatpush1.msra.mxu0 0.0
  %3070 = vmatprep.subr.mxu0 0.0
  %3071 = vmatpush1.msra.mxu0 0.0
  %3072 = vmatprep.subr.mxu0 0.0
  %3073 = vmatpush1.msra.mxu0 0.0
  %3074 = vmatprep.subr.mxu0 0.0
  %3075 = vmatpush1.msra.mxu0 0.0
  %3076 = vmatprep.subr.mxu0 0.0
  %3077 = vmatpush1.msra.mxu0 0.0
  %3078 = vmatprep.subr.mxu0 0.0
  %3079 = vmatpush1.msra.mxu0 0.0
  %3080 = vmatprep.subr.mxu0 0.0
  %3081 = vmatpush1.msra.mxu0 0.0
  %3082 = vmatprep.subr.mxu0 0.0
  %3083 = vmatpush1.msra.mxu0 0.0
  %3084 = vmatprep.mubr.f32.mxu0 0.0
  %3085 = vmatmul.mubr.f32.gmra.mrb[0].mxu0 %v2903
  %v3086 = vpop.f32.mrb[0].mxu0
  %v3087 = vadd.f32 0.0, %v3086
  %v3088 = vpop.f32.mrb[0].mxu0
  %3089 = vdwg.mxu0
  %3091 = vrot.lane.b32.xlu0 %v2816, 32
  %v3092 = vpop.permute.xlu0 %3091
  %v3093 = vsel %vm50, %v3092, 0
  %3095 = vmatprep.subr.mxu0 0.0
  %3096 = vmatpush1.msra.mxu0 %v3012
  %3097 = vmatprep.subr.mxu0 0.0
  %3098 = vmatpush1.msra.mxu0 %v3013
  %3099 = vmatprep.subr.mxu0 0.0
  %3100 = vmatpush1.msra.mxu0 %v3014
  %3101 = vmatprep.subr.mxu0 0.0
  %3102 = vmatpush1.msra.mxu0 %v3015
  %3103 = vmatprep.subr.mxu0 0.0
  %3104 = vmatpush1.msra.mxu0 0.0
  %3105 = vmatprep.subr.mxu0 0.0
  %3106 = vmatpush1.msra.mxu0 0.0
  %3107 = vmatprep.subr.mxu0 0.0
  %3108 = vmatpush1.msra.mxu0 0.0
  %3109 = vmatprep.subr.mxu0 0.0
  %3110 = vmatpush1.msra.mxu0 0.0
  %3111 = vmatprep.subr.mxu0 0.0
  %3112 = vmatpush1.msra.mxu0 0.0
  %3113 = vmatprep.subr.mxu0 0.0
  %3114 = vmatpush1.msra.mxu0 0.0
  %3115 = vmatprep.subr.mxu0 0.0
  %3116 = vmatpush1.msra.mxu0 0.0
  %3117 = vmatprep.subr.mxu0 0.0
  %3118 = vmatpush1.msra.mxu0 0.0
  %3119 = vmatprep.subr.mxu0 0.0
  %3120 = vmatpush1.msra.mxu0 0.0
  %3121 = vmatprep.subr.mxu0 0.0
  %3122 = vmatpush1.msra.mxu0 0.0
  %3123 = vmatprep.subr.mxu0 0.0
  %3124 = vmatpush1.msra.mxu0 0.0
  %3125 = vmatprep.subr.mxu0 0.0
  %3126 = vmatpush1.msra.mxu0 0.0
  %3127 = vmatprep.subr.mxu0 0.0
  %3128 = vmatpush1.msra.mxu0 0.0
  %3129 = vmatprep.subr.mxu0 0.0
  %3130 = vmatpush1.msra.mxu0 0.0
  %3131 = vmatprep.subr.mxu0 0.0
  %3132 = vmatpush1.msra.mxu0 0.0
  %3133 = vmatprep.subr.mxu0 0.0
  %3134 = vmatpush1.msra.mxu0 0.0
  %3135 = vmatprep.subr.mxu0 0.0
  %3136 = vmatpush1.msra.mxu0 0.0
  %3137 = vmatprep.subr.mxu0 0.0
  %3138 = vmatpush1.msra.mxu0 0.0
  %3139 = vmatprep.subr.mxu0 0.0
  %3140 = vmatpush1.msra.mxu0 0.0
  %3141 = vmatprep.subr.mxu0 0.0
  %3142 = vmatpush1.msra.mxu0 0.0
  %3143 = vmatprep.subr.mxu0 0.0
  %3144 = vmatpush1.msra.mxu0 0.0
  %3145 = vmatprep.subr.mxu0 0.0
  %3146 = vmatpush1.msra.mxu0 0.0
  %3147 = vmatprep.subr.mxu0 0.0
  %3148 = vmatpush1.msra.mxu0 0.0
  %3149 = vmatprep.subr.mxu0 0.0
  %3150 = vmatpush1.msra.mxu0 0.0
  %3151 = vmatprep.subr.mxu0 0.0
  %3152 = vmatpush1.msra.mxu0 0.0
  %3153 = vmatprep.subr.mxu0 0.0
  %3154 = vmatpush1.msra.mxu0 0.0
  %3155 = vmatprep.subr.mxu0 0.0
  %3156 = vmatpush1.msra.mxu0 0.0
  %3157 = vmatprep.subr.mxu0 0.0
  %3158 = vmatpush1.msra.mxu0 0.0
  %3159 = vmatprep.mubr.f32.mxu0 0.0
  %3160 = vmatmul.mubr.f32.gmra.mrb[0].mxu0 %v3093
  %v3161 = vpop.f32.mrb[0].mxu0
  %v3162 = vadd.f32 %v3087, %v3161
  %v3163 = vpop.f32.mrb[0].mxu0
  %3164 = vdwg.mxu0
  %v3165 = vld [vmem:[%s6] sm:$0x1]
  %v3167 = vlaneseq
  %v3168 = vshrl.u32 %v3167, 7
  %v3169 = vsub.s32 0, %v3168
  %v3170 = vrot.slane %v3165, %v3169
  %v3172 = vadd.f32 %v3162, %v3170
  %v3173 = vxor.u32 %v3172, 2147483648
  %v3174 = vmul.f32 %v3173, 1.442695
  %v3175 = vpow.pop %v3174
  %v3176 = vadd.f32 %v3175, 1.0
  %v3177 = vrcp.pop %v3176
  %v3178 = vmul.f32 1.0, %v3177
  %v3179 = vtanh.pop %v3172
  %v3180 = vmul.f32 %v3178, %v2629
  %3182 = vrot.lane.b32.xlu0 %v3179, 64
  %v3183 = vpop.permute.xlu0 %3182
  %v3185 = vmul.f32 %v3178, %v3183
  %3187 = vrot.lane.b32.xlu0 %v3185, 32
  %v3188 = vpop.permute.xlu0 %3187
  %v3190 = vadd.f32 %v3180, %v3188
  %v3191 = vtanh.pop %v3190
  %3193 = vrot.lane.b32.xlu0 %v3191, 64
  %v3194 = vpop.permute.xlu0 %3193
  %v3196 = vmul.f32 %v3178, %v3194
  %v3197 = vld [vmem:[%s0 + $0x30] sm:$0xff]
  %v3198 = vld [vmem:[%s1] sm:$0xff]
  %v3199 = vld [vmem:[%s2] sm:$0xff]
  %v3200 = vld [vmem:[%s2 + $0x8] sm:$0xff]
  %v3201 = vld [vmem:[%s2 + $0x10] sm:$0xff]
  %v3202 = vld [vmem:[%s2 + $0x18] sm:$0xff]
  %3203 = vmatprep.subr.mxu0 0.0
  %3204 = vmatpush1.msra.mxu0 %v3199
  %3205 = vmatprep.subr.mxu0 0.0
  %3206 = vmatpush1.msra.mxu0 %v3200
  %3207 = vmatprep.subr.mxu0 0.0
  %3208 = vmatpush1.msra.mxu0 %v3201
  %3209 = vmatprep.subr.mxu0 0.0
  %3210 = vmatpush1.msra.mxu0 %v3202
  %3211 = vmatprep.subr.mxu0 0.0
  %3212 = vmatpush1.msra.mxu0 0.0
  %3213 = vmatprep.subr.mxu0 0.0
  %3214 = vmatpush1.msra.mxu0 0.0
  %3215 = vmatprep.subr.mxu0 0.0
  %3216 = vmatpush1.msra.mxu0 0.0
  %3217 = vmatprep.subr.mxu0 0.0
  %3218 = vmatpush1.msra.mxu0 0.0
  %3219 = vmatprep.subr.mxu0 0.0
  %3220 = vmatpush1.msra.mxu0 0.0
  %3221 = vmatprep.subr.mxu0 0.0
  %3222 = vmatpush1.msra.mxu0 0.0
  %3223 = vmatprep.subr.mxu0 0.0
  %3224 = vmatpush1.msra.mxu0 0.0
  %3225 = vmatprep.subr.mxu0 0.0
  %3226 = vmatpush1.msra.mxu0 0.0
  %3227 = vmatprep.subr.mxu0 0.0
  %3228 = vmatpush1.msra.mxu0 0.0
  %3229 = vmatprep.subr.mxu0 0.0
  %3230 = vmatpush1.msra.mxu0 0.0
  %3231 = vmatprep.subr.mxu0 0.0
  %3232 = vmatpush1.msra.mxu0 0.0
  %3233 = vmatprep.subr.mxu0 0.0
  %3234 = vmatpush1.msra.mxu0 0.0
  %3235 = vmatprep.subr.mxu0 0.0
  %3236 = vmatpush1.msra.mxu0 0.0
  %3237 = vmatprep.subr.mxu0 0.0
  %3238 = vmatpush1.msra.mxu0 0.0
  %3239 = vmatprep.subr.mxu0 0.0
  %3240 = vmatpush1.msra.mxu0 0.0
  %3241 = vmatprep.subr.mxu0 0.0
  %3242 = vmatpush1.msra.mxu0 0.0
  %3243 = vmatprep.subr.mxu0 0.0
  %3244 = vmatpush1.msra.mxu0 0.0
  %3245 = vmatprep.subr.mxu0 0.0
  %3246 = vmatpush1.msra.mxu0 0.0
  %3247 = vmatprep.subr.mxu0 0.0
  %3248 = vmatpush1.msra.mxu0 0.0
  %3249 = vmatprep.subr.mxu0 0.0
  %3250 = vmatpush1.msra.mxu0 0.0
  %3251 = vmatprep.subr.mxu0 0.0
  %3252 = vmatpush1.msra.mxu0 0.0
  %3253 = vmatprep.subr.mxu0 0.0
  %3254 = vmatpush1.msra.mxu0 0.0
  %3255 = vmatprep.subr.mxu0 0.0
  %3256 = vmatpush1.msra.mxu0 0.0
  %3257 = vmatprep.subr.mxu0 0.0
  %3258 = vmatpush1.msra.mxu0 0.0
  %3259 = vmatprep.subr.mxu0 0.0
  %3260 = vmatpush1.msra.mxu0 0.0
  %3261 = vmatprep.subr.mxu0 0.0
  %3262 = vmatpush1.msra.mxu0 0.0
  %3263 = vmatprep.subr.mxu0 0.0
  %3264 = vmatpush1.msra.mxu0 0.0
  %3265 = vmatprep.subr.mxu0 0.0
  %3266 = vmatpush1.msra.mxu0 0.0
  %3267 = vmatprep.mubr.f32.mxu0 0.0
  %3268 = vmatmul.mubr.f32.gmra.mrb[0].mxu0 %v3093
  %v3269 = vpop.f32.mrb[0].mxu0
  %v3270 = vadd.f32 0.0, %v3269
  %v3271 = vpop.f32.mrb[0].mxu0
  %3272 = vdwg.mxu0
  %v3274 = vsel %vm124, %v3197, 0
  %3276 = vmatprep.subr.mxu0 0.0
  %3277 = vmatpush1.msra.mxu0 %v3198
  %3278 = vmatprep.subr.mxu0 0.0
  %3279 = vmatpush1.msra.mxu0 0.0
  %3280 = vmatprep.subr.mxu0 0.0
  %3281 = vmatpush1.msra.mxu0 0.0
  %3282 = vmatprep.subr.mxu0 0.0
  %3283 = vmatpush1.msra.mxu0 0.0
  %3284 = vmatprep.subr.mxu0 0.0
  %3285 = vmatpush1.msra.mxu0 0.0
  %3286 = vmatprep.subr.mxu0 0.0
  %3287 = vmatpush1.msra.mxu0 0.0
  %3288 = vmatprep.subr.mxu0 0.0
  %3289 = vmatpush1.msra.mxu0 0.0
  %3290 = vmatprep.subr.mxu0 0.0
  %3291 = vmatpush1.msra.mxu0 0.0
  %3292 = vmatprep.subr.mxu0 0.0
  %3293 = vmatpush1.msra.mxu0 0.0
  %3294 = vmatprep.subr.mxu0 0.0
  %3295 = vmatpush1.msra.mxu0 0.0
  %3296 = vmatprep.subr.mxu0 0.0
  %3297 = vmatpush1.msra.mxu0 0.0
  %3298 = vmatprep.subr.mxu0 0.0
  %3299 = vmatpush1.msra.mxu0 0.0
  %3300 = vmatprep.subr.mxu0 0.0
  %3301 = vmatpush1.msra.mxu0 0.0
  %3302 = vmatprep.subr.mxu0 0.0
  %3303 = vmatpush1.msra.mxu0 0.0
  %3304 = vmatprep.subr.mxu0 0.0
  %3305 = vmatpush1.msra.mxu0 0.0
  %3306 = vmatprep.subr.mxu0 0.0
  %3307 = vmatpush1.msra.mxu0 0.0
  %3308 = vmatprep.subr.mxu0 0.0
  %3309 = vmatpush1.msra.mxu0 0.0
  %3310 = vmatprep.subr.mxu0 0.0
  %3311 = vmatpush1.msra.mxu0 0.0
  %3312 = vmatprep.subr.mxu0 0.0
  %3313 = vmatpush1.msra.mxu0 0.0
  %3314 = vmatprep.subr.mxu0 0.0
  %3315 = vmatpush1.msra.mxu0 0.0
  %3316 = vmatprep.subr.mxu0 0.0
  %3317 = vmatpush1.msra.mxu0 0.0
  %3318 = vmatprep.subr.mxu0 0.0
  %3319 = vmatpush1.msra.mxu0 0.0
  %3320 = vmatprep.subr.mxu0 0.0
  %3321 = vmatpush1.msra.mxu0 0.0
  %3322 = vmatprep.subr.mxu0 0.0
  %3323 = vmatpush1.msra.mxu0 0.0
  %3324 = vmatprep.subr.mxu0 0.0
  %3325 = vmatpush1.msra.mxu0 0.0
  %3326 = vmatprep.subr.mxu0 0.0
  %3327 = vmatpush1.msra.mxu0 0.0
  %3328 = vmatprep.subr.mxu0 0.0
  %3329 = vmatpush1.msra.mxu0 0.0
  %3330 = vmatprep.subr.mxu0 0.0
  %3331 = vmatpush1.msra.mxu0 0.0
  %3332 = vmatprep.subr.mxu0 0.0
  %3333 = vmatpush1.msra.mxu0 0.0
  %3334 = vmatprep.subr.mxu0 0.0
  %3335 = vmatpush1.msra.mxu0 0.0
  %3336 = vmatprep.subr.mxu0 0.0
  %3337 = vmatpush1.msra.mxu0 0.0
  %3338 = vmatprep.subr.mxu0 0.0
  %3339 = vmatpush1.msra.mxu0 0.0
  %3340 = vmatprep.mubr.f32.mxu0 0.0
  %3341 = vmatmul.mubr.f32.gmra.mrb[0].mxu0 %v3274
  %v3342 = vpop.f32.mrb[0].mxu0
  %v3343 = vadd.f32 %v3270, %v3342
  %v3344 = vpop.f32.mrb[0].mxu0
  %3345 = vdwg.mxu0
  %v3346 = vld [vmem:[%s3] sm:$0x1]
  %v3348 = vlaneseq
  %v3349 = vshrl.u32 %v3348, 7
  %v3350 = vsub.s32 0, %v3349
  %v3351 = vrot.slane %v3346, %v3350
  %v3353 = vadd.f32 %v3343, %v3351
  %v3354 = vxor.u32 %v3353, 2147483648
  %v3355 = vmul.f32 %v3354, 1.442695
  %v3356 = vpow.pop %v3355
  %v3357 = vadd.f32 %v3356, 1.0
  %v3358 = vrcp.pop %v3357
  %v3359 = vmul.f32 1.0, %v3358
  %v3360 = vtanh.pop %v3353
  %v3361 = vmul.f32 %v3359, %v2810
  %3363 = vrot.lane.b32.xlu0 %v3360, 64
  %v3364 = vpop.permute.xlu0 %3363
  %v3366 = vmul.f32 %v3359, %v3364
  %3368 = vrot.lane.b32.xlu0 %v3366, 32
  %v3369 = vpop.permute.xlu0 %3368
  %v3371 = vadd.f32 %v3361, %v3369
  %v3372 = vtanh.pop %v3371
  %3374 = vrot.lane.b32.xlu0 %v3372, 64
  %v3375 = vpop.permute.xlu0 %3374
  %v3377 = vmul.f32 %v3359, %v3375
  %v3378 = vld [vmem:[%s7] sm:$0xff]
  %v3379 = vld [vmem:[%s7 + $0x8] sm:$0xff]
  %v3380 = vld [vmem:[%s7 + $0x10] sm:$0xff]
  %v3381 = vld [vmem:[%s7 + $0x18] sm:$0xff]
  %v3382 = vld [vmem:[%s8] sm:$0xff]
  %v3383 = vld [vmem:[%s8 + $0x8] sm:$0xff]
  %v3384 = vld [vmem:[%s8 + $0x10] sm:$0xff]
  %v3385 = vld [vmem:[%s8 + $0x18] sm:$0xff]
  %v3386 = vsel %vm50, %v3009, 0
  %3388 = vmatprep.subr.mxu0 0.0
  %3389 = vmatpush1.msra.mxu0 %v3382
  %3390 = vmatprep.subr.mxu0 0.0
  %3391 = vmatpush1.msra.mxu0 %v3383
  %3392 = vmatprep.subr.mxu0 0.0
  %3393 = vmatpush1.msra.mxu0 %v3384
  %3394 = vmatprep.subr.mxu0 0.0
  %3395 = vmatpush1.msra.mxu0 %v3385
  %3396 = vmatprep.subr.mxu0 0.0
  %3397 = vmatpush1.msra.mxu0 0.0
  %3398 = vmatprep.subr.mxu0 0.0
  %3399 = vmatpush1.msra.mxu0 0.0
  %3400 = vmatprep.subr.mxu0 0.0
  %3401 = vmatpush1.msra.mxu0 0.0
  %3402 = vmatprep.subr.mxu0 0.0
  %3403 = vmatpush1.msra.mxu0 0.0
  %3404 = vmatprep.subr.mxu0 0.0
  %3405 = vmatpush1.msra.mxu0 0.0
  %3406 = vmatprep.subr.mxu0 0.0
  %3407 = vmatpush1.msra.mxu0 0.0
  %3408 = vmatprep.subr.mxu0 0.0
  %3409 = vmatpush1.msra.mxu0 0.0
  %3410 = vmatprep.subr.mxu0 0.0
  %3411 = vmatpush1.msra.mxu0 0.0
  %3412 = vmatprep.subr.mxu0 0.0
  %3413 = vmatpush1.msra.mxu0 0.0
  %3414 = vmatprep.subr.mxu0 0.0
  %3415 = vmatpush1.msra.mxu0 0.0
  %3416 = vmatprep.subr.mxu0 0.0
  %3417 = vmatpush1.msra.mxu0 0.0
  %3418 = vmatprep.subr.mxu0 0.0
  %3419 = vmatpush1.msra.mxu0 0.0
  %3420 = vmatprep.subr.mxu0 0.0
  %3421 = vmatpush1.msra.mxu0 0.0
  %3422 = vmatprep.subr.mxu0 0.0
  %3423 = vmatpush1.msra.mxu0 0.0
  %3424 = vmatprep.subr.mxu0 0.0
  %3425 = vmatpush1.msra.mxu0 0.0
  %3426 = vmatprep.subr.mxu0 0.0
  %3427 = vmatpush1.msra.mxu0 0.0
  %3428 = vmatprep.subr.mxu0 0.0
  %3429 = vmatpush1.msra.mxu0 0.0
  %3430 = vmatprep.subr.mxu0 0.0
  %3431 = vmatpush1.msra.mxu0 0.0
  %3432 = vmatprep.subr.mxu0 0.0
  %3433 = vmatpush1.msra.mxu0 0.0
  %3434 = vmatprep.subr.mxu0 0.0
  %3435 = vmatpush1.msra.mxu0 0.0
  %3436 = vmatprep.subr.mxu0 0.0
  %3437 = vmatpush1.msra.mxu0 0.0
  %3438 = vmatprep.subr.mxu0 0.0
  %3439 = vmatpush1.msra.mxu0 0.0
  %3440 = vmatprep.subr.mxu0 0.0
  %3441 = vmatpush1.msra.mxu0 0.0
  %3442 = vmatprep.subr.mxu0 0.0
  %3443 = vmatpush1.msra.mxu0 0.0
  %3444 = vmatprep.subr.mxu0 0.0
  %3445 = vmatpush1.msra.mxu0 0.0
  %3446 = vmatprep.subr.mxu0 0.0
  %3447 = vmatpush1.msra.mxu0 0.0
  %3448 = vmatprep.subr.mxu0 0.0
  %3449 = vmatpush1.msra.mxu0 0.0
  %3450 = vmatprep.subr.mxu0 0.0
  %3451 = vmatpush1.msra.mxu0 0.0
  %3452 = vmatprep.mubr.f32.mxu0 0.0
  %3453 = vmatmul.mubr.f32.gmra.mrb[0].mxu0 %v3386
  %v3454 = vpop.f32.mrb[0].mxu0
  %v3455 = vadd.f32 0.0, %v3454
  %v3456 = vpop.f32.mrb[0].mxu0
  %3457 = vdwg.mxu0
  %3459 = vrot.lane.b32.xlu0 %v3196, 32
  %v3460 = vpop.permute.xlu0 %3459
  %v3461 = vsel %vm50, %v3460, 0
  %3463 = vmatprep.subr.mxu0 0.0
  %3464 = vmatpush1.msra.mxu0 %v3378
  %3465 = vmatprep.subr.mxu0 0.0
  %3466 = vmatpush1.msra.mxu0 %v3379
  %3467 = vmatprep.subr.mxu0 0.0
  %3468 = vmatpush1.msra.mxu0 %v3380
  %3469 = vmatprep.subr.mxu0 0.0
  %3470 = vmatpush1.msra.mxu0 %v3381
  %3471 = vmatprep.subr.mxu0 0.0
  %3472 = vmatpush1.msra.mxu0 0.0
  %3473 = vmatprep.subr.mxu0 0.0
  %3474 = vmatpush1.msra.mxu0 0.0
  %3475 = vmatprep.subr.mxu0 0.0
  %3476 = vmatpush1.msra.mxu0 0.0
  %3477 = vmatprep.subr.mxu0 0.0
  %3478 = vmatpush1.msra.mxu0 0.0
  %3479 = vmatprep.subr.mxu0 0.0
  %3480 = vmatpush1.msra.mxu0 0.0
  %3481 = vmatprep.subr.mxu0 0.0
  %3482 = vmatpush1.msra.mxu0 0.0
  %3483 = vmatprep.subr.mxu0 0.0
  %3484 = vmatpush1.msra.mxu0 0.0
  %3485 = vmatprep.subr.mxu0 0.0
  %3486 = vmatpush1.msra.mxu0 0.0
  %3487 = vmatprep.subr.mxu0 0.0
  %3488 = vmatpush1.msra.mxu0 0.0
  %3489 = vmatprep.subr.mxu0 0.0
  %3490 = vmatpush1.msra.mxu0 0.0
  %3491 = vmatprep.subr.mxu0 0.0
  %3492 = vmatpush1.msra.mxu0 0.0
  %3493 = vmatprep.subr.mxu0 0.0
  %3494 = vmatpush1.msra.mxu0 0.0
  %3495 = vmatprep.subr.mxu0 0.0
  %3496 = vmatpush1.msra.mxu0 0.0
  %3497 = vmatprep.subr.mxu0 0.0
  %3498 = vmatpush1.msra.mxu0 0.0
  %3499 = vmatprep.subr.mxu0 0.0
  %3500 = vmatpush1.msra.mxu0 0.0
  %3501 = vmatprep.subr.mxu0 0.0
  %3502 = vmatpush1.msra.mxu0 0.0
  %3503 = vmatprep.subr.mxu0 0.0
  %3504 = vmatpush1.msra.mxu0 0.0
  %3505 = vmatprep.subr.mxu0 0.0
  %3506 = vmatpush1.msra.mxu0 0.0
  %3507 = vmatprep.subr.mxu0 0.0
  %3508 = vmatpush1.msra.mxu0 0.0
  %3509 = vmatprep.subr.mxu0 0.0
  %3510 = vmatpush1.msra.mxu0 0.0
  %3511 = vmatprep.subr.mxu0 0.0
  %3512 = vmatpush1.msra.mxu0 0.0
  %3513 = vmatprep.subr.mxu0 0.0
  %3514 = vmatpush1.msra.mxu0 0.0
  %3515 = vmatprep.subr.mxu0 0.0
  %3516 = vmatpush1.msra.mxu0 0.0
  %3517 = vmatprep.subr.mxu0 0.0
  %3518 = vmatpush1.msra.mxu0 0.0
  %3519 = vmatprep.subr.mxu0 0.0
  %3520 = vmatpush1.msra.mxu0 0.0
  %3521 = vmatprep.subr.mxu0 0.0
  %3522 = vmatpush1.msra.mxu0 0.0
  %3523 = vmatprep.subr.mxu0 0.0
  %3524 = vmatpush1.msra.mxu0 0.0
  %3525 = vmatprep.subr.mxu0 0.0
  %3526 = vmatpush1.msra.mxu0 0.0
  %3527 = vmatprep.mubr.f32.mxu0 0.0
  %3528 = vmatmul.mubr.f32.gmra.mrb[0].mxu0 %v3461
  %v3529 = vpop.f32.mrb[0].mxu0
  %v3530 = vadd.f32 %v3455, %v3529
  %v3531 = vpop.f32.mrb[0].mxu0
  %3532 = vdwg.mxu0
  %v3533 = vld [vmem:[%s9] sm:$0x1]
  %v3535 = vlaneseq
  %v3536 = vshrl.u32 %v3535, 7
  %v3537 = vsub.s32 0, %v3536
  %v3538 = vrot.slane %v3533, %v3537
  %v3540 = vadd.f32 %v3530, %v3538
  %v3541 = vxor.u32 %v3540, 2147483648
  %v3542 = vmul.f32 %v3541, 1.442695
  %v3543 = vpow.pop %v3542
  %v3544 = vadd.f32 %v3543, 1.0
  %v3545 = vrcp.pop %v3544
  %v3546 = vmul.f32 1.0, %v3545
  %v3547 = vtanh.pop %v3540
  %v3548 = vmul.f32 %v3546, %v3000
  %3550 = vrot.lane.b32.xlu0 %v3547, 64
  %v3551 = vpop.permute.xlu0 %3550
  %v3553 = vmul.f32 %v3546, %v3551
  %3555 = vrot.lane.b32.xlu0 %v3553, 32
  %v3556 = vpop.permute.xlu0 %3555
  %v3558 = vadd.f32 %v3548, %v3556
  %v3559 = vtanh.pop %v3558
  %3561 = vrot.lane.b32.xlu0 %v3559, 64
  %v3562 = vpop.permute.xlu0 %3561
  %v3564 = vmul.f32 %v3546, %v3562
  %3566 = vrot.lane.b32.xlu0 %v3564, 64
  %v3567 = vpop.permute.xlu0 %3566
  %3569 = vst.msk [vmem:[#allocation2 + $0x8] sm:$0xff] %vm1331, %v3567
  %v3570 = vld [vmem:[%s4] sm:$0xff]
  %v3571 = vld [vmem:[%s4 + $0x8] sm:$0xff]
  %v3572 = vld [vmem:[%s4 + $0x10] sm:$0xff]
  %v3573 = vld [vmem:[%s4 + $0x18] sm:$0xff]
  %v3574 = vld [vmem:[%s5] sm:$0xff]
  %v3575 = vld [vmem:[%s5 + $0x8] sm:$0xff]
  %v3576 = vld [vmem:[%s5 + $0x10] sm:$0xff]
  %v3577 = vld [vmem:[%s5 + $0x18] sm:$0xff]
  %3578 = vmatprep.subr.mxu0 0.0
  %3579 = vmatpush1.msra.mxu0 %v3574
  %3580 = vmatprep.subr.mxu0 0.0
  %3581 = vmatpush1.msra.mxu0 %v3575
  %3582 = vmatprep.subr.mxu0 0.0
  %3583 = vmatpush1.msra.mxu0 %v3576
  %3584 = vmatprep.subr.mxu0 0.0
  %3585 = vmatpush1.msra.mxu0 %v3577
  %3586 = vmatprep.subr.mxu0 0.0
  %3587 = vmatpush1.msra.mxu0 0.0
  %3588 = vmatprep.subr.mxu0 0.0
  %3589 = vmatpush1.msra.mxu0 0.0
  %3590 = vmatprep.subr.mxu0 0.0
  %3591 = vmatpush1.msra.mxu0 0.0
  %3592 = vmatprep.subr.mxu0 0.0
  %3593 = vmatpush1.msra.mxu0 0.0
  %3594 = vmatprep.subr.mxu0 0.0
  %3595 = vmatpush1.msra.mxu0 0.0
  %3596 = vmatprep.subr.mxu0 0.0
  %3597 = vmatpush1.msra.mxu0 0.0
  %3598 = vmatprep.subr.mxu0 0.0
  %3599 = vmatpush1.msra.mxu0 0.0
  %3600 = vmatprep.subr.mxu0 0.0
  %3601 = vmatpush1.msra.mxu0 0.0
  %3602 = vmatprep.subr.mxu0 0.0
  %3603 = vmatpush1.msra.mxu0 0.0
  %3604 = vmatprep.subr.mxu0 0.0
  %3605 = vmatpush1.msra.mxu0 0.0
  %3606 = vmatprep.subr.mxu0 0.0
  %3607 = vmatpush1.msra.mxu0 0.0
  %3608 = vmatprep.subr.mxu0 0.0
  %3609 = vmatpush1.msra.mxu0 0.0
  %3610 = vmatprep.subr.mxu0 0.0
  %3611 = vmatpush1.msra.mxu0 0.0
  %3612 = vmatprep.subr.mxu0 0.0
  %3613 = vmatpush1.msra.mxu0 0.0
  %3614 = vmatprep.subr.mxu0 0.0
  %3615 = vmatpush1.msra.mxu0 0.0
  %3616 = vmatprep.subr.mxu0 0.0
  %3617 = vmatpush1.msra.mxu0 0.0
  %3618 = vmatprep.subr.mxu0 0.0
  %3619 = vmatpush1.msra.mxu0 0.0
  %3620 = vmatprep.subr.mxu0 0.0
  %3621 = vmatpush1.msra.mxu0 0.0
  %3622 = vmatprep.subr.mxu0 0.0
  %3623 = vmatpush1.msra.mxu0 0.0
  %3624 = vmatprep.subr.mxu0 0.0
  %3625 = vmatpush1.msra.mxu0 0.0
  %3626 = vmatprep.subr.mxu0 0.0
  %3627 = vmatpush1.msra.mxu0 0.0
  %3628 = vmatprep.subr.mxu0 0.0
  %3629 = vmatpush1.msra.mxu0 0.0
  %3630 = vmatprep.subr.mxu0 0.0
  %3631 = vmatpush1.msra.mxu0 0.0
  %3632 = vmatprep.subr.mxu0 0.0
  %3633 = vmatpush1.msra.mxu0 0.0
  %3634 = vmatprep.subr.mxu0 0.0
  %3635 = vmatpush1.msra.mxu0 0.0
  %3636 = vmatprep.subr.mxu0 0.0
  %3637 = vmatpush1.msra.mxu0 0.0
  %3638 = vmatprep.subr.mxu0 0.0
  %3639 = vmatpush1.msra.mxu0 0.0
  %3640 = vmatprep.subr.mxu0 0.0
  %3641 = vmatpush1.msra.mxu0 0.0
  %3642 = vmatprep.mubr.f32.mxu0 0.0
  %3643 = vmatmul.mubr.f32.gmra.mrb[0].mxu0 %v3461
  %v3644 = vpop.f32.mrb[0].mxu0
  %v3645 = vadd.f32 0.0, %v3644
  %v3646 = vpop.f32.mrb[0].mxu0
  %3647 = vdwg.mxu0
  %3649 = vrot.lane.b32.xlu0 %v3377, 32
  %v3650 = vpop.permute.xlu0 %3649
  %v3651 = vsel %vm50, %v3650, 0
  %3653 = vmatprep.subr.mxu0 0.0
  %3654 = vmatpush1.msra.mxu0 %v3570
  %3655 = vmatprep.subr.mxu0 0.0
  %3656 = vmatpush1.msra.mxu0 %v3571
  %3657 = vmatprep.subr.mxu0 0.0
  %3658 = vmatpush1.msra.mxu0 %v3572
  %3659 = vmatprep.subr.mxu0 0.0
  %3660 = vmatpush1.msra.mxu0 %v3573
  %3661 = vmatprep.subr.mxu0 0.0
  %3662 = vmatpush1.msra.mxu0 0.0
  %3663 = vmatprep.subr.mxu0 0.0
  %3664 = vmatpush1.msra.mxu0 0.0
  %3665 = vmatprep.subr.mxu0 0.0
  %3666 = vmatpush1.msra.mxu0 0.0
  %3667 = vmatprep.subr.mxu0 0.0
  %3668 = vmatpush1.msra.mxu0 0.0
  %3669 = vmatprep.subr.mxu0 0.0
  %3670 = vmatpush1.msra.mxu0 0.0
  %3671 = vmatprep.subr.mxu0 0.0
  %3672 = vmatpush1.msra.mxu0 0.0
  %3673 = vmatprep.subr.mxu0 0.0
  %3674 = vmatpush1.msra.mxu0 0.0
  %3675 = vmatprep.subr.mxu0 0.0
  %3676 = vmatpush1.msra.mxu0 0.0
  %3677 = vmatprep.subr.mxu0 0.0
  %3678 = vmatpush1.msra.mxu0 0.0
  %3679 = vmatprep.subr.mxu0 0.0
  %3680 = vmatpush1.msra.mxu0 0.0
  %3681 = vmatprep.subr.mxu0 0.0
  %3682 = vmatpush1.msra.mxu0 0.0
  %3683 = vmatprep.subr.mxu0 0.0
  %3684 = vmatpush1.msra.mxu0 0.0
  %3685 = vmatprep.subr.mxu0 0.0
  %3686 = vmatpush1.msra.mxu0 0.0
  %3687 = vmatprep.subr.mxu0 0.0
  %3688 = vmatpush1.msra.mxu0 0.0
  %3689 = vmatprep.subr.mxu0 0.0
  %3690 = vmatpush1.msra.mxu0 0.0
  %3691 = vmatprep.subr.mxu0 0.0
  %3692 = vmatpush1.msra.mxu0 0.0
  %3693 = vmatprep.subr.mxu0 0.0
  %3694 = vmatpush1.msra.mxu0 0.0
  %3695 = vmatprep.subr.mxu0 0.0
  %3696 = vmatpush1.msra.mxu0 0.0
  %3697 = vmatprep.subr.mxu0 0.0
  %3698 = vmatpush1.msra.mxu0 0.0
  %3699 = vmatprep.subr.mxu0 0.0
  %3700 = vmatpush1.msra.mxu0 0.0
  %3701 = vmatprep.subr.mxu0 0.0
  %3702 = vmatpush1.msra.mxu0 0.0
  %3703 = vmatprep.subr.mxu0 0.0
  %3704 = vmatpush1.msra.mxu0 0.0
  %3705 = vmatprep.subr.mxu0 0.0
  %3706 = vmatpush1.msra.mxu0 0.0
  %3707 = vmatprep.subr.mxu0 0.0
  %3708 = vmatpush1.msra.mxu0 0.0
  %3709 = vmatprep.subr.mxu0 0.0
  %3710 = vmatpush1.msra.mxu0 0.0
  %3711 = vmatprep.subr.mxu0 0.0
  %3712 = vmatpush1.msra.mxu0 0.0
  %3713 = vmatprep.subr.mxu0 0.0
  %3714 = vmatpush1.msra.mxu0 0.0
  %3715 = vmatprep.subr.mxu0 0.0
  %3716 = vmatpush1.msra.mxu0 0.0
  %3717 = vmatprep.mubr.f32.mxu0 0.0
  %3718 = vmatmul.mubr.f32.gmra.mrb[0].mxu0 %v3651
  %v3719 = vpop.f32.mrb[0].mxu0
  %v3720 = vadd.f32 %v3645, %v3719
  %v3721 = vpop.f32.mrb[0].mxu0
  %3722 = vdwg.mxu0
  %v3723 = vld [vmem:[%s6] sm:$0x1]
  %v3725 = vlaneseq
  %v3726 = vshrl.u32 %v3725, 7
  %v3727 = vsub.s32 0, %v3726
  %v3728 = vrot.slane %v3723, %v3727
  %v3730 = vadd.f32 %v3720, %v3728
  %v3731 = vxor.u32 %v3730, 2147483648
  %v3732 = vmul.f32 %v3731, 1.442695
  %v3733 = vpow.pop %v3732
  %v3734 = vadd.f32 %v3733, 1.0
  %v3735 = vrcp.pop %v3734
  %v3736 = vmul.f32 1.0, %v3735
  %v3737 = vtanh.pop %v3730
  %v3738 = vmul.f32 %v3736, %v3190
  %3740 = vrot.lane.b32.xlu0 %v3737, 64
  %v3741 = vpop.permute.xlu0 %3740
  %v3743 = vmul.f32 %v3736, %v3741
  %3745 = vrot.lane.b32.xlu0 %v3743, 32
  %v3746 = vpop.permute.xlu0 %3745
  %v3748 = vadd.f32 %v3738, %v3746
  %v3749 = vtanh.pop %v3748
  %3751 = vrot.lane.b32.xlu0 %v3749, 64
  %v3752 = vpop.permute.xlu0 %3751
  %v3754 = vmul.f32 %v3736, %v3752
  %v3755 = vld [vmem:[%s0 + $0x38] sm:$0xff]
  %v3756 = vld [vmem:[%s1] sm:$0xff]
  %v3757 = vld [vmem:[%s2] sm:$0xff]
  %v3758 = vld [vmem:[%s2 + $0x8] sm:$0xff]
  %v3759 = vld [vmem:[%s2 + $0x10] sm:$0xff]
  %v3760 = vld [vmem:[%s2 + $0x18] sm:$0xff]
  %3761 = vmatprep.subr.mxu0 0.0
  %3762 = vmatpush1.msra.mxu0 %v3757
  %3763 = vmatprep.subr.mxu0 0.0
  %3764 = vmatpush1.msra.mxu0 %v3758
  %3765 = vmatprep.subr.mxu0 0.0
  %3766 = vmatpush1.msra.mxu0 %v3759
  %3767 = vmatprep.subr.mxu0 0.0
  %3768 = vmatpush1.msra.mxu0 %v3760
  %3769 = vmatprep.subr.mxu0 0.0
  %3770 = vmatpush1.msra.mxu0 0.0
  %3771 = vmatprep.subr.mxu0 0.0
  %3772 = vmatpush1.msra.mxu0 0.0
  %3773 = vmatprep.subr.mxu0 0.0
  %3774 = vmatpush1.msra.mxu0 0.0
  %3775 = vmatprep.subr.mxu0 0.0
  %3776 = vmatpush1.msra.mxu0 0.0
  %3777 = vmatprep.subr.mxu0 0.0
  %3778 = vmatpush1.msra.mxu0 0.0
  %3779 = vmatprep.subr.mxu0 0.0
  %3780 = vmatpush1.msra.mxu0 0.0
  %3781 = vmatprep.subr.mxu0 0.0
  %3782 = vmatpush1.msra.mxu0 0.0
  %3783 = vmatprep.subr.mxu0 0.0
  %3784 = vmatpush1.msra.mxu0 0.0
  %3785 = vmatprep.subr.mxu0 0.0
  %3786 = vmatpush1.msra.mxu0 0.0
  %3787 = vmatprep.subr.mxu0 0.0
  %3788 = vmatpush1.msra.mxu0 0.0
  %3789 = vmatprep.subr.mxu0 0.0
  %3790 = vmatpush1.msra.mxu0 0.0
  %3791 = vmatprep.subr.mxu0 0.0
  %3792 = vmatpush1.msra.mxu0 0.0
  %3793 = vmatprep.subr.mxu0 0.0
  %3794 = vmatpush1.msra.mxu0 0.0
  %3795 = vmatprep.subr.mxu0 0.0
  %3796 = vmatpush1.msra.mxu0 0.0
  %3797 = vmatprep.subr.mxu0 0.0
  %3798 = vmatpush1.msra.mxu0 0.0
  %3799 = vmatprep.subr.mxu0 0.0
  %3800 = vmatpush1.msra.mxu0 0.0
  %3801 = vmatprep.subr.mxu0 0.0
  %3802 = vmatpush1.msra.mxu0 0.0
  %3803 = vmatprep.subr.mxu0 0.0
  %3804 = vmatpush1.msra.mxu0 0.0
  %3805 = vmatprep.subr.mxu0 0.0
  %3806 = vmatpush1.msra.mxu0 0.0
  %3807 = vmatprep.subr.mxu0 0.0
  %3808 = vmatpush1.msra.mxu0 0.0
  %3809 = vmatprep.subr.mxu0 0.0
  %3810 = vmatpush1.msra.mxu0 0.0
  %3811 = vmatprep.subr.mxu0 0.0
  %3812 = vmatpush1.msra.mxu0 0.0
  %3813 = vmatprep.subr.mxu0 0.0
  %3814 = vmatpush1.msra.mxu0 0.0
  %3815 = vmatprep.subr.mxu0 0.0
  %3816 = vmatpush1.msra.mxu0 0.0
  %3817 = vmatprep.subr.mxu0 0.0
  %3818 = vmatpush1.msra.mxu0 0.0
  %3819 = vmatprep.subr.mxu0 0.0
  %3820 = vmatpush1.msra.mxu0 0.0
  %3821 = vmatprep.subr.mxu0 0.0
  %3822 = vmatpush1.msra.mxu0 0.0
  %3823 = vmatprep.subr.mxu0 0.0
  %3824 = vmatpush1.msra.mxu0 0.0
  %3825 = vmatprep.mubr.f32.mxu0 0.0
  %3826 = vmatmul.mubr.f32.gmra.mrb[0].mxu0 %v3651
  %v3827 = vpop.f32.mrb[0].mxu0
  %v3828 = vadd.f32 0.0, %v3827
  %v3829 = vpop.f32.mrb[0].mxu0
  %3830 = vdwg.mxu0
  %v3832 = vsel %vm124, %v3755, 0
  %3834 = vmatprep.subr.mxu0 0.0
  %3835 = vmatpush1.msra.mxu0 %v3756
  %3836 = vmatprep.subr.mxu0 0.0
  %3837 = vmatpush1.msra.mxu0 0.0
  %3838 = vmatprep.subr.mxu0 0.0
  %3839 = vmatpush1.msra.mxu0 0.0
  %3840 = vmatprep.subr.mxu0 0.0
  %3841 = vmatpush1.msra.mxu0 0.0
  %3842 = vmatprep.subr.mxu0 0.0
  %3843 = vmatpush1.msra.mxu0 0.0
  %3844 = vmatprep.subr.mxu0 0.0
  %3845 = vmatpush1.msra.mxu0 0.0
  %3846 = vmatprep.subr.mxu0 0.0
  %3847 = vmatpush1.msra.mxu0 0.0
  %3848 = vmatprep.subr.mxu0 0.0
  %3849 = vmatpush1.msra.mxu0 0.0
  %3850 = vmatprep.subr.mxu0 0.0
  %3851 = vmatpush1.msra.mxu0 0.0
  %3852 = vmatprep.subr.mxu0 0.0
  %3853 = vmatpush1.msra.mxu0 0.0
  %3854 = vmatprep.subr.mxu0 0.0
  %3855 = vmatpush1.msra.mxu0 0.0
  %3856 = vmatprep.subr.mxu0 0.0
  %3857 = vmatpush1.msra.mxu0 0.0
  %3858 = vmatprep.subr.mxu0 0.0
  %3859 = vmatpush1.msra.mxu0 0.0
  %3860 = vmatprep.subr.mxu0 0.0
  %3861 = vmatpush1.msra.mxu0 0.0
  %3862 = vmatprep.subr.mxu0 0.0
  %3863 = vmatpush1.msra.mxu0 0.0
  %3864 = vmatprep.subr.mxu0 0.0
  %3865 = vmatpush1.msra.mxu0 0.0
  %3866 = vmatprep.subr.mxu0 0.0
  %3867 = vmatpush1.msra.mxu0 0.0
  %3868 = vmatprep.subr.mxu0 0.0
  %3869 = vmatpush1.msra.mxu0 0.0
  %3870 = vmatprep.subr.mxu0 0.0
  %3871 = vmatpush1.msra.mxu0 0.0
  %3872 = vmatprep.subr.mxu0 0.0
  %3873 = vmatpush1.msra.mxu0 0.0
  %3874 = vmatprep.subr.mxu0 0.0
  %3875 = vmatpush1.msra.mxu0 0.0
  %3876 = vmatprep.subr.mxu0 0.0
  %3877 = vmatpush1.msra.mxu0 0.0
  %3878 = vmatprep.subr.mxu0 0.0
  %3879 = vmatpush1.msra.mxu0 0.0
  %3880 = vmatprep.subr.mxu0 0.0
  %3881 = vmatpush1.msra.mxu0 0.0
  %3882 = vmatprep.subr.mxu0 0.0
  %3883 = vmatpush1.msra.mxu0 0.0
  %3884 = vmatprep.subr.mxu0 0.0
  %3885 = vmatpush1.msra.mxu0 0.0
  %3886 = vmatprep.subr.mxu0 0.0
  %3887 = vmatpush1.msra.mxu0 0.0
  %3888 = vmatprep.subr.mxu0 0.0
  %3889 = vmatpush1.msra.mxu0 0.0
  %3890 = vmatprep.subr.mxu0 0.0
  %3891 = vmatpush1.msra.mxu0 0.0
  %3892 = vmatprep.subr.mxu0 0.0
  %3893 = vmatpush1.msra.mxu0 0.0
  %3894 = vmatprep.subr.mxu0 0.0
  %3895 = vmatpush1.msra.mxu0 0.0
  %3896 = vmatprep.subr.mxu0 0.0
  %3897 = vmatpush1.msra.mxu0 0.0
  %3898 = vmatprep.mubr.f32.mxu0 0.0
  %3899 = vmatmul.mubr.f32.gmra.mrb[0].mxu0 %v3832
  %v3900 = vpop.f32.mrb[0].mxu0
  %v3901 = vadd.f32 %v3828, %v3900
  %v3902 = vpop.f32.mrb[0].mxu0
  %3903 = vdwg.mxu0
  %v3904 = vld [vmem:[%s3] sm:$0x1]
  %v3906 = vlaneseq
  %v3907 = vshrl.u32 %v3906, 7
  %v3908 = vsub.s32 0, %v3907
  %v3909 = vrot.slane %v3904, %v3908
  %v3911 = vadd.f32 %v3901, %v3909
  %v3912 = vxor.u32 %v3911, 2147483648
  %v3913 = vmul.f32 %v3912, 1.442695
  %v3914 = vpow.pop %v3913
  %v3915 = vadd.f32 %v3914, 1.0
  %v3916 = vrcp.pop %v3915
  %v3917 = vmul.f32 1.0, %v3916
  %v3918 = vtanh.pop %v3911
  %v3919 = vmul.f32 %v3917, %v3371
  %3921 = vrot.lane.b32.xlu0 %v3918, 64
  %v3922 = vpop.permute.xlu0 %3921
  %v3924 = vmul.f32 %v3917, %v3922
  %3926 = vrot.lane.b32.xlu0 %v3924, 32
  %v3927 = vpop.permute.xlu0 %3926
  %v3929 = vadd.f32 %v3919, %v3927
  %v3930 = vtanh.pop %v3929
  %3932 = vrot.lane.b32.xlu0 %v3930, 64
  %v3933 = vpop.permute.xlu0 %3932
  %v3935 = vmul.f32 %v3917, %v3933
  %v3936 = vld [vmem:[%s7] sm:$0xff]
  %v3937 = vld [vmem:[%s7 + $0x8] sm:$0xff]
  %v3938 = vld [vmem:[%s7 + $0x10] sm:$0xff]
  %v3939 = vld [vmem:[%s7 + $0x18] sm:$0xff]
  %v3940 = vld [vmem:[%s8] sm:$0xff]
  %v3941 = vld [vmem:[%s8 + $0x8] sm:$0xff]
  %v3942 = vld [vmem:[%s8 + $0x10] sm:$0xff]
  %v3943 = vld [vmem:[%s8 + $0x18] sm:$0xff]
  %3944 = vrot.lane.b32.xlu0 %v3564, 32
  %v3945 = vpop.permute.xlu0 %3944
  %v3946 = vsel %vm50, %v3945, 0
  %3948 = vmatprep.subr.mxu0 0.0
  %3949 = vmatpush1.msra.mxu0 %v3940
  %3950 = vmatprep.subr.mxu0 0.0
  %3951 = vmatpush1.msra.mxu0 %v3941
  %3952 = vmatprep.subr.mxu0 0.0
  %3953 = vmatpush1.msra.mxu0 %v3942
  %3954 = vmatprep.subr.mxu0 0.0
  %3955 = vmatpush1.msra.mxu0 %v3943
  %3956 = vmatprep.subr.mxu0 0.0
  %3957 = vmatpush1.msra.mxu0 0.0
  %3958 = vmatprep.subr.mxu0 0.0
  %3959 = vmatpush1.msra.mxu0 0.0
  %3960 = vmatprep.subr.mxu0 0.0
  %3961 = vmatpush1.msra.mxu0 0.0
  %3962 = vmatprep.subr.mxu0 0.0
  %3963 = vmatpush1.msra.mxu0 0.0
  %3964 = vmatprep.subr.mxu0 0.0
  %3965 = vmatpush1.msra.mxu0 0.0
  %3966 = vmatprep.subr.mxu0 0.0
  %3967 = vmatpush1.msra.mxu0 0.0
  %3968 = vmatprep.subr.mxu0 0.0
  %3969 = vmatpush1.msra.mxu0 0.0
  %3970 = vmatprep.subr.mxu0 0.0
  %3971 = vmatpush1.msra.mxu0 0.0
  %3972 = vmatprep.subr.mxu0 0.0
  %3973 = vmatpush1.msra.mxu0 0.0
  %3974 = vmatprep.subr.mxu0 0.0
  %3975 = vmatpush1.msra.mxu0 0.0
  %3976 = vmatprep.subr.mxu0 0.0
  %3977 = vmatpush1.msra.mxu0 0.0
  %3978 = vmatprep.subr.mxu0 0.0
  %3979 = vmatpush1.msra.mxu0 0.0
  %3980 = vmatprep.subr.mxu0 0.0
  %3981 = vmatpush1.msra.mxu0 0.0
  %3982 = vmatprep.subr.mxu0 0.0
  %3983 = vmatpush1.msra.mxu0 0.0
  %3984 = vmatprep.subr.mxu0 0.0
  %3985 = vmatpush1.msra.mxu0 0.0
  %3986 = vmatprep.subr.mxu0 0.0
  %3987 = vmatpush1.msra.mxu0 0.0
  %3988 = vmatprep.subr.mxu0 0.0
  %3989 = vmatpush1.msra.mxu0 0.0
  %3990 = vmatprep.subr.mxu0 0.0
  %3991 = vmatpush1.msra.mxu0 0.0
  %3992 = vmatprep.subr.mxu0 0.0
  %3993 = vmatpush1.msra.mxu0 0.0
  %3994 = vmatprep.subr.mxu0 0.0
  %3995 = vmatpush1.msra.mxu0 0.0
  %3996 = vmatprep.subr.mxu0 0.0
  %3997 = vmatpush1.msra.mxu0 0.0
  %3998 = vmatprep.subr.mxu0 0.0
  %3999 = vmatpush1.msra.mxu0 0.0
  %4000 = vmatprep.subr.mxu0 0.0
  %4001 = vmatpush1.msra.mxu0 0.0
  %4002 = vmatprep.subr.mxu0 0.0
  %4003 = vmatpush1.msra.mxu0 0.0
  %4004 = vmatprep.subr.mxu0 0.0
  %4005 = vmatpush1.msra.mxu0 0.0
  %4006 = vmatprep.subr.mxu0 0.0
  %4007 = vmatpush1.msra.mxu0 0.0
  %4008 = vmatprep.subr.mxu0 0.0
  %4009 = vmatpush1.msra.mxu0 0.0
  %4010 = vmatprep.subr.mxu0 0.0
  %4011 = vmatpush1.msra.mxu0 0.0
  %4012 = vmatprep.mubr.f32.mxu0 0.0
  %4013 = vmatmul.mubr.f32.gmra.mrb[0].mxu0 %v3946
  %v4014 = vpop.f32.mrb[0].mxu0
  %v4015 = vadd.f32 0.0, %v4014
  %v4016 = vpop.f32.mrb[0].mxu0
  %4017 = vdwg.mxu0
  %4019 = vrot.lane.b32.xlu0 %v3754, 32
  %v4020 = vpop.permute.xlu0 %4019
  %v4021 = vsel %vm50, %v4020, 0
  %4023 = vmatprep.subr.mxu0 0.0
  %4024 = vmatpush1.msra.mxu0 %v3936
  %4025 = vmatprep.subr.mxu0 0.0
  %4026 = vmatpush1.msra.mxu0 %v3937
  %4027 = vmatprep.subr.mxu0 0.0
  %4028 = vmatpush1.msra.mxu0 %v3938
  %4029 = vmatprep.subr.mxu0 0.0
  %4030 = vmatpush1.msra.mxu0 %v3939
  %4031 = vmatprep.subr.mxu0 0.0
  %4032 = vmatpush1.msra.mxu0 0.0
  %4033 = vmatprep.subr.mxu0 0.0
  %4034 = vmatpush1.msra.mxu0 0.0
  %4035 = vmatprep.subr.mxu0 0.0
  %4036 = vmatpush1.msra.mxu0 0.0
  %4037 = vmatprep.subr.mxu0 0.0
  %4038 = vmatpush1.msra.mxu0 0.0
  %4039 = vmatprep.subr.mxu0 0.0
  %4040 = vmatpush1.msra.mxu0 0.0
  %4041 = vmatprep.subr.mxu0 0.0
  %4042 = vmatpush1.msra.mxu0 0.0
  %4043 = vmatprep.subr.mxu0 0.0
  %4044 = vmatpush1.msra.mxu0 0.0
  %4045 = vmatprep.subr.mxu0 0.0
  %4046 = vmatpush1.msra.mxu0 0.0
  %4047 = vmatprep.subr.mxu0 0.0
  %4048 = vmatpush1.msra.mxu0 0.0
  %4049 = vmatprep.subr.mxu0 0.0
  %4050 = vmatpush1.msra.mxu0 0.0
  %4051 = vmatprep.subr.mxu0 0.0
  %4052 = vmatpush1.msra.mxu0 0.0
  %4053 = vmatprep.subr.mxu0 0.0
  %4054 = vmatpush1.msra.mxu0 0.0
  %4055 = vmatprep.subr.mxu0 0.0
  %4056 = vmatpush1.msra.mxu0 0.0
  %4057 = vmatprep.subr.mxu0 0.0
  %4058 = vmatpush1.msra.mxu0 0.0
  %4059 = vmatprep.subr.mxu0 0.0
  %4060 = vmatpush1.msra.mxu0 0.0
  %4061 = vmatprep.subr.mxu0 0.0
  %4062 = vmatpush1.msra.mxu0 0.0
  %4063 = vmatprep.subr.mxu0 0.0
  %4064 = vmatpush1.msra.mxu0 0.0
  %4065 = vmatprep.subr.mxu0 0.0
  %4066 = vmatpush1.msra.mxu0 0.0
  %4067 = vmatprep.subr.mxu0 0.0
  %4068 = vmatpush1.msra.mxu0 0.0
  %4069 = vmatprep.subr.mxu0 0.0
  %4070 = vmatpush1.msra.mxu0 0.0
  %4071 = vmatprep.subr.mxu0 0.0
  %4072 = vmatpush1.msra.mxu0 0.0
  %4073 = vmatprep.subr.mxu0 0.0
  %4074 = vmatpush1.msra.mxu0 0.0
  %4075 = vmatprep.subr.mxu0 0.0
  %4076 = vmatpush1.msra.mxu0 0.0
  %4077 = vmatprep.subr.mxu0 0.0
  %4078 = vmatpush1.msra.mxu0 0.0
  %4079 = vmatprep.subr.mxu0 0.0
  %4080 = vmatpush1.msra.mxu0 0.0
  %4081 = vmatprep.subr.mxu0 0.0
  %4082 = vmatpush1.msra.mxu0 0.0
  %4083 = vmatprep.subr.mxu0 0.0
  %4084 = vmatpush1.msra.mxu0 0.0
  %4085 = vmatprep.subr.mxu0 0.0
  %4086 = vmatpush1.msra.mxu0 0.0
  %4087 = vmatprep.mubr.f32.mxu0 0.0
  %4088 = vmatmul.mubr.f32.gmra.mrb[0].mxu0 %v4021
  %v4089 = vpop.f32.mrb[0].mxu0
  %v4090 = vadd.f32 %v4015, %v4089
  %v4091 = vpop.f32.mrb[0].mxu0
  %4092 = vdwg.mxu0
  %v4093 = vld [vmem:[%s9] sm:$0x1]
  %v4095 = vlaneseq
  %v4096 = vshrl.u32 %v4095, 7
  %v4097 = vsub.s32 0, %v4096
  %v4098 = vrot.slane %v4093, %v4097
  %v4100 = vadd.f32 %v4090, %v4098
  %v4101 = vxor.u32 %v4100, 2147483648
  %v4102 = vmul.f32 %v4101, 1.442695
  %v4103 = vpow.pop %v4102
  %v4104 = vadd.f32 %v4103, 1.0
  %v4105 = vrcp.pop %v4104
  %v4106 = vmul.f32 1.0, %v4105
  %v4107 = vtanh.pop %v4100
  %v4108 = vmul.f32 %v4106, %v3558
  %4110 = vrot.lane.b32.xlu0 %v4107, 64
  %v4111 = vpop.permute.xlu0 %4110
  %v4113 = vmul.f32 %v4106, %v4111
  %4115 = vrot.lane.b32.xlu0 %v4113, 32
  %v4116 = vpop.permute.xlu0 %4115
  %v4118 = vadd.f32 %v4108, %v4116
  %v4119 = vtanh.pop %v4118
  %4121 = vrot.lane.b32.xlu0 %v4119, 64
  %v4122 = vpop.permute.xlu0 %4121
  %v4124 = vmul.f32 %v4106, %v4122
  %4126 = vrot.lane.b32.xlu0 %v4124, 96
  %v4127 = vpop.permute.xlu0 %4126
  %4129 = vst.msk [vmem:[#allocation2 + $0x8] sm:$0xff] %vm1892, %v4127
  %v4130 = vld [vmem:[%s4] sm:$0xff]
  %v4131 = vld [vmem:[%s4 + $0x8] sm:$0xff]
  %v4132 = vld [vmem:[%s4 + $0x10] sm:$0xff]
  %v4133 = vld [vmem:[%s4 + $0x18] sm:$0xff]
  %v4134 = vld [vmem:[%s5] sm:$0xff]
  %v4135 = vld [vmem:[%s5 + $0x8] sm:$0xff]
  %v4136 = vld [vmem:[%s5 + $0x10] sm:$0xff]
  %v4137 = vld [vmem:[%s5 + $0x18] sm:$0xff]
  %4138 = vmatprep.subr.mxu0 0.0
  %4139 = vmatpush1.msra.mxu0 %v4134
  %4140 = vmatprep.subr.mxu0 0.0
  %4141 = vmatpush1.msra.mxu0 %v4135
  %4142 = vmatprep.subr.mxu0 0.0
  %4143 = vmatpush1.msra.mxu0 %v4136
  %4144 = vmatprep.subr.mxu0 0.0
  %4145 = vmatpush1.msra.mxu0 %v4137
  %4146 = vmatprep.subr.mxu0 0.0
  %4147 = vmatpush1.msra.mxu0 0.0
  %4148 = vmatprep.subr.mxu0 0.0
  %4149 = vmatpush1.msra.mxu0 0.0
  %4150 = vmatprep.subr.mxu0 0.0
  %4151 = vmatpush1.msra.mxu0 0.0
  %4152 = vmatprep.subr.mxu0 0.0
  %4153 = vmatpush1.msra.mxu0 0.0
  %4154 = vmatprep.subr.mxu0 0.0
  %4155 = vmatpush1.msra.mxu0 0.0
  %4156 = vmatprep.subr.mxu0 0.0
  %4157 = vmatpush1.msra.mxu0 0.0
  %4158 = vmatprep.subr.mxu0 0.0
  %4159 = vmatpush1.msra.mxu0 0.0
  %4160 = vmatprep.subr.mxu0 0.0
  %4161 = vmatpush1.msra.mxu0 0.0
  %4162 = vmatprep.subr.mxu0 0.0
  %4163 = vmatpush1.msra.mxu0 0.0
  %4164 = vmatprep.subr.mxu0 0.0
  %4165 = vmatpush1.msra.mxu0 0.0
  %4166 = vmatprep.subr.mxu0 0.0
  %4167 = vmatpush1.msra.mxu0 0.0
  %4168 = vmatprep.subr.mxu0 0.0
  %4169 = vmatpush1.msra.mxu0 0.0
  %4170 = vmatprep.subr.mxu0 0.0
  %4171 = vmatpush1.msra.mxu0 0.0
  %4172 = vmatprep.subr.mxu0 0.0
  %4173 = vmatpush1.msra.mxu0 0.0
  %4174 = vmatprep.subr.mxu0 0.0
  %4175 = vmatpush1.msra.mxu0 0.0
  %4176 = vmatprep.subr.mxu0 0.0
  %4177 = vmatpush1.msra.mxu0 0.0
  %4178 = vmatprep.subr.mxu0 0.0
  %4179 = vmatpush1.msra.mxu0 0.0
  %4180 = vmatprep.subr.mxu0 0.0
  %4181 = vmatpush1.msra.mxu0 0.0
  %4182 = vmatprep.subr.mxu0 0.0
  %4183 = vmatpush1.msra.mxu0 0.0
  %4184 = vmatprep.subr.mxu0 0.0
  %4185 = vmatpush1.msra.mxu0 0.0
  %4186 = vmatprep.subr.mxu0 0.0
  %4187 = vmatpush1.msra.mxu0 0.0
  %4188 = vmatprep.subr.mxu0 0.0
  %4189 = vmatpush1.msra.mxu0 0.0
  %4190 = vmatprep.subr.mxu0 0.0
  %4191 = vmatpush1.msra.mxu0 0.0
  %4192 = vmatprep.subr.mxu0 0.0
  %4193 = vmatpush1.msra.mxu0 0.0
  %4194 = vmatprep.subr.mxu0 0.0
  %4195 = vmatpush1.msra.mxu0 0.0
  %4196 = vmatprep.subr.mxu0 0.0
  %4197 = vmatpush1.msra.mxu0 0.0
  %4198 = vmatprep.subr.mxu0 0.0
  %4199 = vmatpush1.msra.mxu0 0.0
  %4200 = vmatprep.subr.mxu0 0.0
  %4201 = vmatpush1.msra.mxu0 0.0
  %4202 = vmatprep.mubr.f32.mxu0 0.0
  %4203 = vmatmul.mubr.f32.gmra.mrb[0].mxu0 %v4021
  %v4204 = vpop.f32.mrb[0].mxu0
  %v4205 = vadd.f32 0.0, %v4204
  %v4206 = vpop.f32.mrb[0].mxu0
  %4207 = vdwg.mxu0
  %4209 = vrot.lane.b32.xlu0 %v3935, 32
  %v4210 = vpop.permute.xlu0 %4209
  %v4211 = vsel %vm50, %v4210, 0
  %4213 = vmatprep.subr.mxu0 0.0
  %4214 = vmatpush1.msra.mxu0 %v4130
  %4215 = vmatprep.subr.mxu0 0.0
  %4216 = vmatpush1.msra.mxu0 %v4131
  %4217 = vmatprep.subr.mxu0 0.0
  %4218 = vmatpush1.msra.mxu0 %v4132
  %4219 = vmatprep.subr.mxu0 0.0
  %4220 = vmatpush1.msra.mxu0 %v4133
  %4221 = vmatprep.subr.mxu0 0.0
  %4222 = vmatpush1.msra.mxu0 0.0
  %4223 = vmatprep.subr.mxu0 0.0
  %4224 = vmatpush1.msra.mxu0 0.0
  %4225 = vmatprep.subr.mxu0 0.0
  %4226 = vmatpush1.msra.mxu0 0.0
  %4227 = vmatprep.subr.mxu0 0.0
  %4228 = vmatpush1.msra.mxu0 0.0
  %4229 = vmatprep.subr.mxu0 0.0
  %4230 = vmatpush1.msra.mxu0 0.0
  %4231 = vmatprep.subr.mxu0 0.0
  %4232 = vmatpush1.msra.mxu0 0.0
  %4233 = vmatprep.subr.mxu0 0.0
  %4234 = vmatpush1.msra.mxu0 0.0
  %4235 = vmatprep.subr.mxu0 0.0
  %4236 = vmatpush1.msra.mxu0 0.0
  %4237 = vmatprep.subr.mxu0 0.0
  %4238 = vmatpush1.msra.mxu0 0.0
  %4239 = vmatprep.subr.mxu0 0.0
  %4240 = vmatpush1.msra.mxu0 0.0
  %4241 = vmatprep.subr.mxu0 0.0
  %4242 = vmatpush1.msra.mxu0 0.0
  %4243 = vmatprep.subr.mxu0 0.0
  %4244 = vmatpush1.msra.mxu0 0.0
  %4245 = vmatprep.subr.mxu0 0.0
  %4246 = vmatpush1.msra.mxu0 0.0
  %4247 = vmatprep.subr.mxu0 0.0
  %4248 = vmatpush1.msra.mxu0 0.0
  %4249 = vmatprep.subr.mxu0 0.0
  %4250 = vmatpush1.msra.mxu0 0.0
  %4251 = vmatprep.subr.mxu0 0.0
  %4252 = vmatpush1.msra.mxu0 0.0
  %4253 = vmatprep.subr.mxu0 0.0
  %4254 = vmatpush1.msra.mxu0 0.0
  %4255 = vmatprep.subr.mxu0 0.0
  %4256 = vmatpush1.msra.mxu0 0.0
  %4257 = vmatprep.subr.mxu0 0.0
  %4258 = vmatpush1.msra.mxu0 0.0
  %4259 = vmatprep.subr.mxu0 0.0
  %4260 = vmatpush1.msra.mxu0 0.0
  %4261 = vmatprep.subr.mxu0 0.0
  %4262 = vmatpush1.msra.mxu0 0.0
  %4263 = vmatprep.subr.mxu0 0.0
  %4264 = vmatpush1.msra.mxu0 0.0
  %4265 = vmatprep.subr.mxu0 0.0
  %4266 = vmatpush1.msra.mxu0 0.0
  %4267 = vmatprep.subr.mxu0 0.0
  %4268 = vmatpush1.msra.mxu0 0.0
  %4269 = vmatprep.subr.mxu0 0.0
  %4270 = vmatpush1.msra.mxu0 0.0
  %4271 = vmatprep.subr.mxu0 0.0
  %4272 = vmatpush1.msra.mxu0 0.0
  %4273 = vmatprep.subr.mxu0 0.0
  %4274 = vmatpush1.msra.mxu0 0.0
  %4275 = vmatprep.subr.mxu0 0.0
  %4276 = vmatpush1.msra.mxu0 0.0
  %4277 = vmatprep.mubr.f32.mxu0 0.0
  %4278 = vmatmul.mubr.f32.gmra.mrb[0].mxu0 %v4211
  %v4279 = vpop.f32.mrb[0].mxu0
  %v4280 = vadd.f32 %v4205, %v4279
  %v4281 = vpop.f32.mrb[0].mxu0
  %4282 = vdwg.mxu0
  %v4283 = vld [vmem:[%s6] sm:$0x1]
  %v4285 = vlaneseq
  %v4286 = vshrl.u32 %v4285, 7
  %v4287 = vsub.s32 0, %v4286
  %v4288 = vrot.slane %v4283, %v4287
  %v4290 = vadd.f32 %v4280, %v4288
  %v4291 = vxor.u32 %v4290, 2147483648
  %v4292 = vmul.f32 %v4291, 1.442695
  %v4293 = vpow.pop %v4292
  %v4294 = vadd.f32 %v4293, 1.0
  %v4295 = vrcp.pop %v4294
  %v4296 = vmul.f32 1.0, %v4295
  %v4297 = vtanh.pop %v4290
  %v4298 = vmul.f32 %v4296, %v3748
  %4300 = vrot.lane.b32.xlu0 %v4297, 64
  %v4301 = vpop.permute.xlu0 %4300
  %v4303 = vmul.f32 %v4296, %v4301
  %4305 = vrot.lane.b32.xlu0 %v4303, 32
  %v4306 = vpop.permute.xlu0 %4305
  %v4308 = vadd.f32 %v4298, %v4306
  %v4309 = vtanh.pop %v4308
  %4311 = vrot.lane.b32.xlu0 %v4309, 64
  %v4312 = vpop.permute.xlu0 %4311
  %v4314 = vmul.f32 %v4296, %v4312
  %v4315 = vld [vmem:[%s7] sm:$0xff]
  %v4316 = vld [vmem:[%s7 + $0x8] sm:$0xff]
  %v4317 = vld [vmem:[%s7 + $0x10] sm:$0xff]
  %v4318 = vld [vmem:[%s7 + $0x18] sm:$0xff]
  %v4319 = vld [vmem:[%s8] sm:$0xff]
  %v4320 = vld [vmem:[%s8 + $0x8] sm:$0xff]
  %v4321 = vld [vmem:[%s8 + $0x10] sm:$0xff]
  %v4322 = vld [vmem:[%s8 + $0x18] sm:$0xff]
  %4323 = vrot.lane.b32.xlu0 %v4124, 32
  %v4324 = vpop.permute.xlu0 %4323
  %v4325 = vsel %vm50, %v4324, 0
  %4327 = vmatprep.subr.mxu0 0.0
  %4328 = vmatpush1.msra.mxu0 %v4319
  %4329 = vmatprep.subr.mxu0 0.0
  %4330 = vmatpush1.msra.mxu0 %v4320
  %4331 = vmatprep.subr.mxu0 0.0
  %4332 = vmatpush1.msra.mxu0 %v4321
  %4333 = vmatprep.subr.mxu0 0.0
  %4334 = vmatpush1.msra.mxu0 %v4322
  %4335 = vmatprep.subr.mxu0 0.0
  %4336 = vmatpush1.msra.mxu0 0.0
  %4337 = vmatprep.subr.mxu0 0.0
  %4338 = vmatpush1.msra.mxu0 0.0
  %4339 = vmatprep.subr.mxu0 0.0
  %4340 = vmatpush1.msra.mxu0 0.0
  %4341 = vmatprep.subr.mxu0 0.0
  %4342 = vmatpush1.msra.mxu0 0.0
  %4343 = vmatprep.subr.mxu0 0.0
  %4344 = vmatpush1.msra.mxu0 0.0
  %4345 = vmatprep.subr.mxu0 0.0
  %4346 = vmatpush1.msra.mxu0 0.0
  %4347 = vmatprep.subr.mxu0 0.0
  %4348 = vmatpush1.msra.mxu0 0.0
  %4349 = vmatprep.subr.mxu0 0.0
  %4350 = vmatpush1.msra.mxu0 0.0
  %4351 = vmatprep.subr.mxu0 0.0
  %4352 = vmatpush1.msra.mxu0 0.0
  %4353 = vmatprep.subr.mxu0 0.0
  %4354 = vmatpush1.msra.mxu0 0.0
  %4355 = vmatprep.subr.mxu0 0.0
  %4356 = vmatpush1.msra.mxu0 0.0
  %4357 = vmatprep.subr.mxu0 0.0
  %4358 = vmatpush1.msra.mxu0 0.0
  %4359 = vmatprep.subr.mxu0 0.0
  %4360 = vmatpush1.msra.mxu0 0.0
  %4361 = vmatprep.subr.mxu0 0.0
  %4362 = vmatpush1.msra.mxu0 0.0
  %4363 = vmatprep.subr.mxu0 0.0
  %4364 = vmatpush1.msra.mxu0 0.0
  %4365 = vmatprep.subr.mxu0 0.0
  %4366 = vmatpush1.msra.mxu0 0.0
  %4367 = vmatprep.subr.mxu0 0.0
  %4368 = vmatpush1.msra.mxu0 0.0
  %4369 = vmatprep.subr.mxu0 0.0
  %4370 = vmatpush1.msra.mxu0 0.0
  %4371 = vmatprep.subr.mxu0 0.0
  %4372 = vmatpush1.msra.mxu0 0.0
  %4373 = vmatprep.subr.mxu0 0.0
  %4374 = vmatpush1.msra.mxu0 0.0
  %4375 = vmatprep.subr.mxu0 0.0
  %4376 = vmatpush1.msra.mxu0 0.0
  %4377 = vmatprep.subr.mxu0 0.0
  %4378 = vmatpush1.msra.mxu0 0.0
  %4379 = vmatprep.subr.mxu0 0.0
  %4380 = vmatpush1.msra.mxu0 0.0
  %4381 = vmatprep.subr.mxu0 0.0
  %4382 = vmatpush1.msra.mxu0 0.0
  %4383 = vmatprep.subr.mxu0 0.0
  %4384 = vmatpush1.msra.mxu0 0.0
  %4385 = vmatprep.subr.mxu0 0.0
  %4386 = vmatpush1.msra.mxu0 0.0
  %4387 = vmatprep.subr.mxu0 0.0
  %4388 = vmatpush1.msra.mxu0 0.0
  %4389 = vmatprep.subr.mxu0 0.0
  %4390 = vmatpush1.msra.mxu0 0.0
  %4391 = vmatprep.mubr.f32.mxu0 0.0
  %4392 = vmatmul.mubr.f32.gmra.mrb[0].mxu0 %v4325
  %v4393 = vpop.f32.mrb[0].mxu0
  %v4394 = vadd.f32 0.0, %v4393
  %v4395 = vpop.f32.mrb[0].mxu0
  %4396 = vdwg.mxu0
  %4398 = vrot.lane.b32.xlu0 %v4314, 32
  %v4399 = vpop.permute.xlu0 %4398
  %v4400 = vsel %vm50, %v4399, 0
  %4402 = vmatprep.subr.mxu0 0.0
  %4403 = vmatpush1.msra.mxu0 %v4315
  %4404 = vmatprep.subr.mxu0 0.0
  %4405 = vmatpush1.msra.mxu0 %v4316
  %4406 = vmatprep.subr.mxu0 0.0
  %4407 = vmatpush1.msra.mxu0 %v4317
  %4408 = vmatprep.subr.mxu0 0.0
  %4409 = vmatpush1.msra.mxu0 %v4318
  %4410 = vmatprep.subr.mxu0 0.0
  %4411 = vmatpush1.msra.mxu0 0.0
  %4412 = vmatprep.subr.mxu0 0.0
  %4413 = vmatpush1.msra.mxu0 0.0
  %4414 = vmatprep.subr.mxu0 0.0
  %4415 = vmatpush1.msra.mxu0 0.0
  %4416 = vmatprep.subr.mxu0 0.0
  %4417 = vmatpush1.msra.mxu0 0.0
  %4418 = vmatprep.subr.mxu0 0.0
  %4419 = vmatpush1.msra.mxu0 0.0
  %4420 = vmatprep.subr.mxu0 0.0
  %4421 = vmatpush1.msra.mxu0 0.0
  %4422 = vmatprep.subr.mxu0 0.0
  %4423 = vmatpush1.msra.mxu0 0.0
  %4424 = vmatprep.subr.mxu0 0.0
  %4425 = vmatpush1.msra.mxu0 0.0
  %4426 = vmatprep.subr.mxu0 0.0
  %4427 = vmatpush1.msra.mxu0 0.0
  %4428 = vmatprep.subr.mxu0 0.0
  %4429 = vmatpush1.msra.mxu0 0.0
  %4430 = vmatprep.subr.mxu0 0.0
  %4431 = vmatpush1.msra.mxu0 0.0
  %4432 = vmatprep.subr.mxu0 0.0
  %4433 = vmatpush1.msra.mxu0 0.0
  %4434 = vmatprep.subr.mxu0 0.0
  %4435 = vmatpush1.msra.mxu0 0.0
  %4436 = vmatprep.subr.mxu0 0.0
  %4437 = vmatpush1.msra.mxu0 0.0
  %4438 = vmatprep.subr.mxu0 0.0
  %4439 = vmatpush1.msra.mxu0 0.0
  %4440 = vmatprep.subr.mxu0 0.0
  %4441 = vmatpush1.msra.mxu0 0.0
  %4442 = vmatprep.subr.mxu0 0.0
  %4443 = vmatpush1.msra.mxu0 0.0
  %4444 = vmatprep.subr.mxu0 0.0
  %4445 = vmatpush1.msra.mxu0 0.0
  %4446 = vmatprep.subr.mxu0 0.0
  %4447 = vmatpush1.msra.mxu0 0.0
  %4448 = vmatprep.subr.mxu0 0.0
  %4449 = vmatpush1.msra.mxu0 0.0
  %4450 = vmatprep.subr.mxu0 0.0
  %4451 = vmatpush1.msra.mxu0 0.0
  %4452 = vmatprep.subr.mxu0 0.0
  %4453 = vmatpush1.msra.mxu0 0.0
  %4454 = vmatprep.subr.mxu0 0.0
  %4455 = vmatpush1.msra.mxu0 0.0
  %4456 = vmatprep.subr.mxu0 0.0
  %4457 = vmatpush1.msra.mxu0 0.0
  %4458 = vmatprep.subr.mxu0 0.0
  %4459 = vmatpush1.msra.mxu0 0.0
  %4460 = vmatprep.subr.mxu0 0.0
  %4461 = vmatpush1.msra.mxu0 0.0
  %4462 = vmatprep.subr.mxu0 0.0
  %4463 = vmatpush1.msra.mxu0 0.0
  %4464 = vmatprep.subr.mxu0 0.0
  %4465 = vmatpush1.msra.mxu0 0.0
  %4466 = vmatprep.mubr.f32.mxu0 0.0
  %4467 = vmatmul.mubr.f32.gmra.mrb[0].mxu0 %v4400
  %v4468 = vpop.f32.mrb[0].mxu0
  %v4469 = vadd.f32 %v4394, %v4468
  %v4470 = vpop.f32.mrb[0].mxu0
  %4471 = vdwg.mxu0
  %v4472 = vld [vmem:[%s9] sm:$0x1]
  %v4474 = vlaneseq
  %v4475 = vshrl.u32 %v4474, 7
  %v4476 = vsub.s32 0, %v4475
  %v4477 = vrot.slane %v4472, %v4476
  %v4479 = vadd.f32 %v4469, %v4477
  %v4480 = vxor.u32 %v4479, 2147483648
  %v4481 = vmul.f32 %v4480, 1.442695
  %v4482 = vpow.pop %v4481
  %v4483 = vadd.f32 %v4482, 1.0
  %v4484 = vrcp.pop %v4483
  %v4485 = vmul.f32 1.0, %v4484
  %v4486 = vtanh.pop %v4479
  %v4487 = vmul.f32 %v4485, %v4118
  %4489 = vrot.lane.b32.xlu0 %v4486, 64
  %v4490 = vpop.permute.xlu0 %4489
  %v4492 = vmul.f32 %v4485, %v4490
  %4494 = vrot.lane.b32.xlu0 %v4492, 32
  %v4495 = vpop.permute.xlu0 %4494
  %v4497 = vadd.f32 %v4487, %v4495
  %v4498 = vtanh.pop %v4497
  %4500 = vrot.lane.b32.xlu0 %v4498, 64
  %v4501 = vpop.permute.xlu0 %4500
  %v4503 = vmul.f32 %v4485, %v4501
  %4504 = vst.msk [vmem:[#allocation2 + $0x8] sm:$0xff] %vm2449, %v4503
  %v4505 = vld [vmem:[#allocation2] sm:$0xff]
  %v4506 = vld [vmem:[#allocation2 + $0x8] sm:$0xff]
  %v4507 = vld [vmem:[%s10] sm:$0xff]
  %v4508 = vld [vmem:[%s10 + $0x8] sm:$0xff]
  %v4509 = vld [vmem:[%s10 + $0x10] sm:$0xff]
  %v4510 = vld [vmem:[%s10 + $0x18] sm:$0xff]
  %v4511 = vld [vmem:[%s10 + $0x20] sm:$0xff]
  %v4512 = vld [vmem:[%s10 + $0x28] sm:$0xff]
  %v4513 = vld [vmem:[%s10 + $0x30] sm:$0xff]
  %v4514 = vld [vmem:[%s10 + $0x38] sm:$0xff]
  %v4515 = vld [vmem:[%s10 + $0x40] sm:$0xff]
  %v4516 = vld [vmem:[%s10 + $0x48] sm:$0xff]
  %v4517 = vld [vmem:[%s10 + $0x50] sm:$0xff]
  %v4518 = vld [vmem:[%s10 + $0x58] sm:$0xff]
  %v4519 = vld [vmem:[%s10 + $0x60] sm:$0xff]
  %v4520 = vld [vmem:[%s10 + $0x68] sm:$0xff]
  %v4521 = vld [vmem:[%s10 + $0x70] sm:$0xff]
  %v4522 = vld [vmem:[%s10 + $0x78] sm:$0xff]
  %v4523 = vld [vmem:[%s10 + $0x80] sm:$0xff]
  %v4524 = vld [vmem:[%s10 + $0x88] sm:$0xff]
  %v4525 = vld [vmem:[%s10 + $0x90] sm:$0xff]
  %v4526 = vld [vmem:[%s10 + $0x98] sm:$0xff]
  %v4527 = vld [vmem:[%s10 + $0xa0] sm:$0xff]
  %v4528 = vld [vmem:[%s10 + $0xa8] sm:$0xff]
  %v4529 = vld [vmem:[%s10 + $0xb0] sm:$0xff]
  %v4530 = vld [vmem:[%s10 + $0xb8] sm:$0xff]
  %v4531 = vld [vmem:[%s10 + $0xc0] sm:$0xff]
  %v4532 = vld [vmem:[%s10 + $0xc8] sm:$0xff]
  %v4533 = vld [vmem:[%s10 + $0xd0] sm:$0xff]
  %v4534 = vld [vmem:[%s10 + $0xd8] sm:$0xff]
  %v4535 = vld [vmem:[%s10 + $0xe0] sm:$0xff]
  %v4536 = vld [vmem:[%s10 + $0xe8] sm:$0xff]
  %v4537 = vld [vmem:[%s10 + $0xf0] sm:$0xff]
  %v4538 = vld [vmem:[%s10 + $0xf8] sm:$0xff]
  %4539 = vmatprep.subr.mxu0 0.0
  %4540 = vmatpush1.msra.mxu0 %v4507
  %4541 = vmatprep.subr.mxu0 0.0
  %4542 = vmatpush1.msra.mxu0 %v4508
  %4543 = vmatprep.subr.mxu0 0.0
  %4544 = vmatpush1.msra.mxu0 %v4509
  %4545 = vmatprep.subr.mxu0 0.0
  %4546 = vmatpush1.msra.mxu0 %v4510
  %4547 = vmatprep.subr.mxu0 0.0
  %4548 = vmatpush1.msra.mxu0 %v4511
  %4549 = vmatprep.subr.mxu0 0.0
  %4550 = vmatpush1.msra.mxu0 %v4512
  %4551 = vmatprep.subr.mxu0 0.0
  %4552 = vmatpush1.msra.mxu0 %v4513
  %4553 = vmatprep.subr.mxu0 0.0
  %4554 = vmatpush1.msra.mxu0 %v4514
  %4555 = vmatprep.subr.mxu0 0.0
  %4556 = vmatpush1.msra.mxu0 %v4515
  %4557 = vmatprep.subr.mxu0 0.0
  %4558 = vmatpush1.msra.mxu0 %v4516
  %4559 = vmatprep.subr.mxu0 0.0
  %4560 = vmatpush1.msra.mxu0 %v4517
  %4561 = vmatprep.subr.mxu0 0.0
  %4562 = vmatpush1.msra.mxu0 %v4518
  %4563 = vmatprep.subr.mxu0 0.0
  %4564 = vmatpush1.msra.mxu0 %v4519
  %4565 = vmatprep.subr.mxu0 0.0
  %4566 = vmatpush1.msra.mxu0 %v4520
  %4567 = vmatprep.subr.mxu0 0.0
  %4568 = vmatpush1.msra.mxu0 %v4521
  %4569 = vmatprep.subr.mxu0 0.0
  %4570 = vmatpush1.msra.mxu0 %v4522
  %4571 = vmatprep.subr.mxu0 0.0
  %4572 = vmatpush1.msra.mxu0 %v4523
  %4573 = vmatprep.subr.mxu0 0.0
  %4574 = vmatpush1.msra.mxu0 %v4524
  %4575 = vmatprep.subr.mxu0 0.0
  %4576 = vmatpush1.msra.mxu0 %v4525
  %4577 = vmatprep.subr.mxu0 0.0
  %4578 = vmatpush1.msra.mxu0 %v4526
  %4579 = vmatprep.subr.mxu0 0.0
  %4580 = vmatpush1.msra.mxu0 %v4527
  %4581 = vmatprep.subr.mxu0 0.0
  %4582 = vmatpush1.msra.mxu0 %v4528
  %4583 = vmatprep.subr.mxu0 0.0
  %4584 = vmatpush1.msra.mxu0 %v4529
  %4585 = vmatprep.subr.mxu0 0.0
  %4586 = vmatpush1.msra.mxu0 %v4530
  %4587 = vmatprep.subr.mxu0 0.0
  %4588 = vmatpush1.msra.mxu0 %v4531
  %4589 = vmatprep.subr.mxu0 0.0
  %4590 = vmatpush1.msra.mxu0 %v4532
  %4591 = vmatprep.subr.mxu0 0.0
  %4592 = vmatpush1.msra.mxu0 %v4533
  %4593 = vmatprep.subr.mxu0 0.0
  %4594 = vmatpush1.msra.mxu0 %v4534
  %4595 = vmatprep.subr.mxu0 0.0
  %4596 = vmatpush1.msra.mxu0 %v4535
  %4597 = vmatprep.subr.mxu0 0.0
  %4598 = vmatpush1.msra.mxu0 %v4536
  %4599 = vmatprep.subr.mxu0 0.0
  %4600 = vmatpush1.msra.mxu0 %v4537
  %4601 = vmatprep.subr.mxu0 0.0
  %4602 = vmatpush1.msra.mxu0 %v4538
  %4603 = vmatprep.mubr.f32.mxu0 %v4506
  %4604 = vmatmul.mubr.f32.gmra.mrb[0].mxu0 %v4505
  %v4605 = vpop.f32.mrb[0].mxu0
  %v4606 = vadd.f32 0.0, %v4605
  %v4607 = vpop.f32.mrb[0].mxu0
  %4608 = vdwg.mxu0
  %v4609 = vsel %vm124, %v4606, -inf
  %4610 = vmax.xlane.f32.xlu0 %v4609
  %v4611 = vpop.xlane.xlu0 %4610
  %v4612 = vsub.f32 %v4606, %v4611
  %v4613 = vmul.f32 %v4612, 1.442695
  %v4614 = vpow.pop %v4613
  %v4615 = vsel %vm124, %v4614, 0.0
  %4616 = vadd.xlane.f32.xlu0 %v4615
  %v4617 = vpop.xlane.xlu0 %4616
  %v4618 = vrcp.pop %v4617
  %v4619 = vmul.f32 %v4617, %v4618
  %v4620 = vsub.f32 2.0, %v4619
  %v4621 = vmul.f32 %v4618, %v4620
  %v4622 = vmul.f32 %v4614, %v4621
  %4624 = vset.pattern.permute.xlu0 0
  %4625 = vperm.xlu0 %4624, %v4622
  %v4626 = vpop.permute.xlu0 %4625
  %v4628 = vmul.f32 %v4626, %v4505
  %4629 = vset.pattern.permute.xlu0 1
  %4630 = vperm.xlu0 %4629, %v4622
  %v4631 = vpop.permute.xlu0 %4630
  %v4633 = vmul.f32 %v4631, %v4505
  %4635 = vrot.lane.b32.xlu0 %v4633, 96
  %v4636 = vpop.permute.xlu0 %4635
  %v4638 = vadd.f32 %v4628, %v4636
  %4639 = vset.pattern.permute.xlu0 2
  %4640 = vperm.xlu0 %4639, %v4622
  %v4641 = vpop.permute.xlu0 %4640
  %v4643 = vmul.f32 %v4641, %v4505
  %4645 = vrot.lane.b32.xlu0 %v4643, 64
  %v4646 = vpop.permute.xlu0 %4645
  %v4648 = vadd.f32 %v4638, %v4646
  %4649 = vset.pattern.permute.xlu0 3
  %4650 = vperm.xlu0 %4649, %v4622
  %v4651 = vpop.permute.xlu0 %4650
  %v4653 = vmul.f32 %v4651, %v4505
  %4655 = vrot.lane.b32.xlu0 %v4653, 32
  %v4656 = vpop.permute.xlu0 %4655
  %v4658 = vadd.f32 %v4648, %v4656
  %4659 = vset.pattern.permute.xlu0 4
  %4660 = vperm.xlu0 %4659, %v4622
  %v4661 = vpop.permute.xlu0 %4660
  %v4663 = vmul.f32 %v4661, %v4506
  %v4664 = vadd.f32 %v4658, %v4663
  %4665 = vset.pattern.permute.xlu0 5
  %4666 = vperm.xlu0 %4665, %v4622
  %v4667 = vpop.permute.xlu0 %4666
  %v4669 = vmul.f32 %v4667, %v4506
  %4671 = vrot.lane.b32.xlu0 %v4669, 96
  %v4672 = vpop.permute.xlu0 %4671
  %v4674 = vadd.f32 %v4664, %v4672
  %4675 = vset.pattern.permute.xlu0 6
  %4676 = vperm.xlu0 %4675, %v4622
  %v4677 = vpop.permute.xlu0 %4676
  %v4679 = vmul.f32 %v4677, %v4506
  %4681 = vrot.lane.b32.xlu0 %v4679, 64
  %v4682 = vpop.permute.xlu0 %4681
  %v4684 = vadd.f32 %v4674, %v4682
  %4685 = vset.pattern.permute.xlu0 7
  %4686 = vperm.xlu0 %4685, %v4622
  %v4687 = vpop.permute.xlu0 %4686
  %v4689 = vmul.f32 %v4687, %v4506
  %4691 = vrot.lane.b32.xlu0 %v4689, 32
  %v4692 = vpop.permute.xlu0 %4691
  %v4694 = vadd.f32 %v4684, %v4692
  %v4695 = vld [vmem:[%s11] sm:$0xff]
  %v4696 = vld [vmem:[%s11 + $0x8] sm:$0xff]
  %v4697 = vld [vmem:[%s11 + $0x10] sm:$0xff]
  %v4698 = vld [vmem:[%s11 + $0x18] sm:$0xff]
  %v4699 = vld [vmem:[%s12] sm:$0x1]
  %v4701 = vlaneseq
  %v4702 = vshrl.u32 %v4701, 7
  %v4703 = vsub.s32 0, %v4702
  %v4704 = vrot.slane %v4699, %v4703
  %v4707 = vsel %vm50, %v4694, 0
  %4709 = vmatprep.subr.mxu0 0.0
  %4710 = vmatpush1.msra.mxu0 %v4695
  %4711 = vmatprep.subr.mxu0 0.0
  %4712 = vmatpush1.msra.mxu0 %v4696
  %4713 = vmatprep.subr.mxu0 0.0
  %4714 = vmatpush1.msra.mxu0 %v4697
  %4715 = vmatprep.subr.mxu0 0.0
  %4716 = vmatpush1.msra.mxu0 %v4698
  %4717 = vmatprep.subr.mxu0 0.0
  %4718 = vmatpush1.msra.mxu0 0.0
  %4719 = vmatprep.subr.mxu0 0.0
  %4720 = vmatpush1.msra.mxu0 0.0
  %4721 = vmatprep.subr.mxu0 0.0
  %4722 = vmatpush1.msra.mxu0 0.0
  %4723 = vmatprep.subr.mxu0 0.0
  %4724 = vmatpush1.msra.mxu0 0.0
  %4725 = vmatprep.subr.mxu0 0.0
  %4726 = vmatpush1.msra.mxu0 0.0
  %4727 = vmatprep.subr.mxu0 0.0
  %4728 = vmatpush1.msra.mxu0 0.0
  %4729 = vmatprep.subr.mxu0 0.0
  %4730 = vmatpush1.msra.mxu0 0.0
  %4731 = vmatprep.subr.mxu0 0.0
  %4732 = vmatpush1.msra.mxu0 0.0
  %4733 = vmatprep.subr.mxu0 0.0
  %4734 = vmatpush1.msra.mxu0 0.0
  %4735 = vmatprep.subr.mxu0 0.0
  %4736 = vmatpush1.msra.mxu0 0.0
  %4737 = vmatprep.subr.mxu0 0.0
  %4738 = vmatpush1.msra.mxu0 0.0
  %4739 = vmatprep.subr.mxu0 0.0
  %4740 = vmatpush1.msra.mxu0 0.0
  %4741 = vmatprep.subr.mxu0 0.0
  %4742 = vmatpush1.msra.mxu0 0.0
  %4743 = vmatprep.subr.mxu0 0.0
  %4744 = vmatpush1.msra.mxu0 0.0
  %4745 = vmatprep.subr.mxu0 0.0
  %4746 = vmatpush1.msra.mxu0 0.0
  %4747 = vmatprep.subr.mxu0 0.0
  %4748 = vmatpush1.msra.mxu0 0.0
  %4749 = vmatprep.subr.mxu0 0.0
  %4750 = vmatpush1.msra.mxu0 0.0
  %4751 = vmatprep.subr.mxu0 0.0
  %4752 = vmatpush1.msra.mxu0 0.0
  %4753 = vmatprep.subr.mxu0 0.0
  %4754 = vmatpush1.msra.mxu0 0.0
  %4755 = vmatprep.subr.mxu0 0.0
  %4756 = vmatpush1.msra.mxu0 0.0
  %4757 = vmatprep.subr.mxu0 0.0
  %4758 = vmatpush1.msra.mxu0 0.0
  %4759 = vmatprep.subr.mxu0 0.0
  %4760 = vmatpush1.msra.mxu0 0.0
  %4761 = vmatprep.subr.mxu0 0.0
  %4762 = vmatpush1.msra.mxu0 0.0
  %4763 = vmatprep.subr.mxu0 0.0
  %4764 = vmatpush1.msra.mxu0 0.0
  %4765 = vmatprep.subr.mxu0 0.0
  %4766 = vmatpush1.msra.mxu0 0.0
  %4767 = vmatprep.subr.mxu0 0.0
  %4768 = vmatpush1.msra.mxu0 0.0
  %4769 = vmatprep.subr.mxu0 0.0
  %4770 = vmatpush1.msra.mxu0 0.0
  %4771 = vmatprep.subr.mxu0 0.0
  %4772 = vmatpush1.msra.mxu0 0.0
  %4773 = vmatprep.mubr.f32.mxu0 0.0
  %4774 = vmatmul.mubr.f32.gmra.mrb[0].mxu0 %v4707
  %v4775 = vpop.f32.mrb[0].mxu0
  %v4776 = vadd.f32 %v4704, %v4775
  %v4777 = vpop.f32.mrb[0].mxu0
  %4778 = vdwg.mxu0
  %4779 = vst [vmem:[%s13] sm:$0xff] %v4776
  // Predicated region
  $region54: #{weather_network_forward.1} parent=0 // pred_check
    _
  $region55: #{weather_network_forward.1} parent=0 // pred_check_branch
    %4781 = sbr.rel (0) target = $region57
  $region56: #{weather_network_forward.1} parent=0 // pred_region
    _
  $region57: #{weather_network_forward.1} parent=0 // pred_fallthru
    _
  // Predicated region
  $region58: #{weather_network_forward.1} parent=0 // pred_check
    _
  $region59: #{weather_network_forward.1} parent=0 // pred_check_branch
    %4783 = sbr.rel (0) target = $region61
  $region60: #{weather_network_forward.1} parent=0 // pred_region
    _
  $region61: #{weather_network_forward.1} parent=0 // pred_fallthru
    _

</llo_original>
